<compile_context>
chip_gen: v7x
topology: tpu7x:2x2x1
jax: 0.10.0
libtpu: 0.0.40
codegen_flags: <defaults>
</compile_context>

<pallas_src>
import functools

import jax
import jax.numpy as jnp
from jax.experimental import pallas as pl
from jax.experimental.pallas import tpu as pltpu

LEAKY_SLOPE = 0.01   # nn.LeakyReLU default
BN_EPS = 1e-5        # nn.BatchNorm2d default
VMEM_LIMIT = 48 * 1024 * 1024   # fits v5e/v6e (128 MiB) and v7x (64 MiB) VMEM


def _round_up(v, m):
    return ((v + m - 1) // m) * m


# ----------------------------------------------------------------------------
# Pallas kernels
# ----------------------------------------------------------------------------
def _conv_kernel(x_ref, w_ref, scale_ref, shift_ref, o_ref, *, taps, ho, wo_pad):
    """Fused Conv2d(bias=False) + BatchNorm(eval) + LeakyReLU for one image.

    x_ref:     (1, s*s, Hq, Wq, Cin)   bf16  phase-decomposed padded input
    w_ref:     (1, kh*kw, Cin, Cout)   bf16  per-tap weights (one head)
    scale_ref: (1, 1, Cout)            f32   folded BN scale
    shift_ref: (1, 1, Cout)            f32   folded BN shift
    o_ref:     (1, 1, Ho, Wo_pad, Cout) bf16
    """
    cin = x_ref.shape[-1]
    cout = w_ref.shape[-1]
    m = ho * wo_pad

    acc = jnp.zeros((m, cout), jnp.float32)
    # Sum of kh*kw shifted matmuls; each tap is a stride-1, statically-offset
    # slice of the phase-decomposed input (no im2col materialization).
    for t, (ph, ri, ci) in enumerate(taps):
        xs = x_ref[0, ph, ri:ri + ho, ci:ci + wo_pad, :]        # (Ho, Wo_pad, Cin)
        acc = acc + jnp.dot(xs.reshape(m, cin), w_ref[0, t],
                            preferred_element_type=jnp.float32)

    # f32 epilogue: folded BatchNorm + LeakyReLU (single VPU max).
    y = acc * scale_ref[0] + shift_ref[0]
    y = jnp.maximum(y, LEAKY_SLOPE * y)
    o_ref[...] = y.reshape(1, 1, ho, wo_pad, cout).astype(o_ref.dtype)


def _tail_kernel(hf_ref, lw_ref, lb_ref, cw_ref, cb_ref, cen_ref,
                 h_out_ref, log_out_ref, dist_out_ref):
    """Per-head Linear + per-class classifier + center distance (fused).

    hf_ref:  (1, B, P) bf16     lw_ref: (1, P, F) bf16    lb_ref: (1, 1, F) f32
    cw_ref:  (1, F, C) f32      cb_ref: (1, 1, C) f32     cen_ref:(1, 1, F) f32
    outputs: heads (1, B, F) f32, logits (1, B, C) f32, dist (1, B, 1) f32
    """
    h = jnp.dot(hf_ref[0], lw_ref[0], preferred_element_type=jnp.float32) + lb_ref[0]
    h_out_ref[0] = h
    log_out_ref[0] = jnp.dot(h, cw_ref[0], preferred_element_type=jnp.float32) + cb_ref[0]
    diff = h - cen_ref[0]
    dist_out_ref[0] = jnp.sqrt(jnp.sum(diff * diff, axis=-1, keepdims=True))


# ----------------------------------------------------------------------------
# Plain-JAX glue (layout prep only — ~1x activation traffic, not kh*kw x)
# ----------------------------------------------------------------------------
def prep_conv_input(x, kh, kw, stride, pad, ho, wo_pad):
    """x:(N,H,W,C) -> (N, s*s, Hq, Wq, C): zero-padded + stride-phase split so
    every conv tap becomes a contiguous stride-1 slice inside the kernel."""
    n, h, w, c = x.shape
    s = stride
    hq = ho + (kh - 1) // s
    wq = wo_pad + (kw - 1) // s
    hp, wp = s * hq, s * wq
    xp = jnp.pad(x, ((0, 0), (pad, hp - h - pad), (pad, wp - w - pad), (0, 0)))
    xp = xp.reshape(n, hq, s, wq, s, c)
    xp = jnp.transpose(xp, (0, 2, 4, 1, 3, 5))          # (N, s, s, Hq, Wq, C)
    return xp.reshape(n, s * s, hq, wq, c)


def conv_bn_lrelu(x, layer, per_head):
    """Fused conv+BN+LeakyReLU over (head, batch) grid.

    x: (N, H, W, Cin) if not per_head, else (NH, N, H, W, Cin).
    Returns (NH, N, Ho, Wo, Cout) bf16.
    """
    w, scale, shift = layer["w"], layer["scale"], layer["shift"]
    kh, kw, s, p = layer["kh"], layer["kw"], layer["stride"], layer["pad"]
    nh, _, cin, cout = w.shape

    if per_head:
        n = x.shape[1]
        x2 = x.reshape((nh * n,) + x.shape[2:])
    else:
        n = x.shape[0]
        x2 = x

    h_in, w_in = x2.shape[1], x2.shape[2]
    ho = (h_in + 2 * p - kh) // s + 1
    wo = (w_in + 2 * p - kw) // s + 1
    wo_pad = _round_up(wo, 8)                            # sublane-aligned width

    xp = prep_conv_input(x2, kh, kw, s, p, ho, wo_pad).astype(jnp.bfloat16)
    hq, wq = xp.shape[2], xp.shape[3]
    taps = tuple(((i % s) * s + (j % s), i // s, j // s)
                 for i in range(kh) for j in range(kw))

    if per_head:
        x_index_map = lambda hi, ni: (hi * n + ni, 0, 0, 0, 0)
    else:
        x_index_map = lambda hi, ni: (ni, 0, 0, 0, 0)

    kernel = functools.partial(_conv_kernel, taps=taps, ho=ho, wo_pad=wo_pad)
    m = ho * wo_pad
    cost = pl.CostEstimate(
        flops=2 * m * cin * cout * kh * kw * nh * n,
        transcendentals=0,
        bytes_accessed=int(xp.size * 2 + w.size * 2 + scale.size * 4
                           + shift.size * 4 + nh * n * m * cout * 2))

    out = pl.pallas_call(
        kernel,
        out_shape=jax.ShapeDtypeStruct((nh, n, ho, wo_pad, cout), jnp.bfloat16),
        grid_spec=pltpu.PrefetchScalarGridSpec(
            num_scalar_prefetch=0,
            grid=(nh, n),
            in_specs=[
                pl.BlockSpec((1, s * s, hq, wq, cin), x_index_map),
                pl.BlockSpec((1, kh * kw, cin, cout), lambda hi, ni: (hi, 0, 0, 0)),
                pl.BlockSpec((1, 1, cout), lambda hi, ni: (hi, 0, 0)),
                pl.BlockSpec((1, 1, cout), lambda hi, ni: (hi, 0, 0)),
            ],
            out_specs=pl.BlockSpec((1, 1, ho, wo_pad, cout),
                                   lambda hi, ni: (hi, ni, 0, 0, 0)),
        ),
        compiler_params=pltpu.CompilerParams(
            dimension_semantics=("parallel", "parallel"),
            vmem_limit_bytes=VMEM_LIMIT),
        cost_estimate=cost,
    )(xp, w, scale, shift)

    if wo_pad != wo:
        out = out[:, :, :, :wo, :]
    return out


def head_tail(hf, lin_w, lin_b, clf_w, clf_b, centers):
    """Fused head Linear + classifier + center distance, grid over heads."""
    nh, n, p_ = hf.shape
    f = lin_w.shape[-1]
    c = clf_w.shape[-1]
    out_shapes = (jax.ShapeDtypeStruct((nh, n, f), jnp.float32),
                  jax.ShapeDtypeStruct((nh, n, c), jnp.float32),
                  jax.ShapeDtypeStruct((nh, n, 1), jnp.float32))
    grid_spec = pltpu.PrefetchScalarGridSpec(
        num_scalar_prefetch=0,
        grid=(nh,),
        in_specs=[
            pl.BlockSpec((1, n, p_), lambda h: (h, 0, 0)),
            pl.BlockSpec((1, p_, f), lambda h: (h, 0, 0)),
            pl.BlockSpec((1, 1, f), lambda h: (h, 0, 0)),
            pl.BlockSpec((1, f, c), lambda h: (h, 0, 0)),
            pl.BlockSpec((1, 1, c), lambda h: (h, 0, 0)),
            pl.BlockSpec((1, 1, f), lambda h: (h, 0, 0)),
        ],
        out_specs=[
            pl.BlockSpec((1, n, f), lambda h: (h, 0, 0)),
            pl.BlockSpec((1, n, c), lambda h: (h, 0, 0)),
            pl.BlockSpec((1, n, 1), lambda h: (h, 0, 0)),
        ],
    )
    return pl.pallas_call(
        _tail_kernel,
        out_shape=out_shapes,
        grid_spec=grid_spec,
        compiler_params=pltpu.CompilerParams(
            dimension_semantics=("parallel",),
            vmem_limit_bytes=VMEM_LIMIT),
    )(hf, lin_w, lin_b, clf_w, clf_b, centers)


# ----------------------------------------------------------------------------
# Parameters
# ----------------------------------------------------------------------------
def _conv_bn_params(key, kh, kw, cin, cout, stride, pad, nh=1):
    k1, k2, k3 = jax.random.split(key, 3)
    w = jax.random.normal(k1, (nh, kh, kw, cin, cout), jnp.float32) * 0.05
    gamma = 1.0 + 0.1 * jax.random.normal(k2, (nh, cout), jnp.float32)
    beta = 0.1 * jax.random.normal(k3, (nh, cout), jnp.float32)
    running_mean = jnp.zeros((nh, cout), jnp.float32)
    running_var = jnp.ones((nh, cout), jnp.float32)
    bn_scale = gamma / jnp.sqrt(running_var + BN_EPS)
    bn_shift = beta - running_mean * bn_scale
    return dict(
        w=w.reshape(nh, kh * kw, cin, cout).astype(jnp.bfloat16),
        scale=bn_scale.reshape(nh, 1, cout),
        shift=bn_shift.reshape(nh, 1, cout),
        kh=kh, kw=kw, stride=stride, pad=pad)


def init_params(key, num_classes, num_features, num_channels, im_size):
    keys = iter(jax.random.split(key, 32))
    encoder_spec = [
        (3, 3, num_channels, 64, 1, 1),
        (3, 3, 64, 64, 1, 1),
        (4, 4, 64, 128, 2, 1),
        (3, 3, 128, 128, 1, 1),
        (3, 3, 128, 128, 1, 1),
        (4, 4, 128, 128, 2, 1),
    ]
    encoder = [_conv_bn_params(next(keys), *spec, nh=1) for spec in encoder_spec]

    head_conv_spec = [
        (3, 3, 128, 128, 1, 1),
        (3, 3, 128, 128, 1, 1),
        (4, 4, 128, 128, 2, 1),
    ]
    head_convs = [_conv_bn_params(next(keys), *spec, nh=num_classes)
                  for spec in head_conv_spec]

    p = 2 * im_size * im_size
    lin_w = (jax.random.normal(next(keys), (num_classes, p, num_features),
                               jnp.float32) * 0.02).astype(jnp.bfloat16)
    lin_b = 0.01 * jax.random.normal(next(keys), (num_classes, 1, num_features),
                                     jnp.float32)
    clf_w = jax.random.normal(next(keys), (num_classes, num_features, num_classes),
                              jnp.float32) * 0.1
    clf_b = 0.01 * jax.random.normal(next(keys), (num_classes, 1, num_classes),
                                     jnp.float32)
    centers = jnp.zeros((num_classes, 1, num_features), jnp.float32)  # torch.zeros
    return dict(encoder=encoder, head_convs=head_convs, lin_w=lin_w, lin_b=lin_b,
                clf_w=clf_w, clf_b=clf_b, centers=centers)


# ----------------------------------------------------------------------------
# Forward
# ----------------------------------------------------------------------------
def model_forward(params, x_nchw):
    x = jnp.transpose(x_nchw, (0, 2, 3, 1)).astype(jnp.float32)     # NCHW -> NHWC

    # ---- encoder (6 fused conv+BN+LeakyReLU pallas_calls) ----
    for layer in params["encoder"]:
        x = conv_bn_lrelu(x, layer, per_head=False)[0]              # (N, H, W, C)
    encoded = x                                                     # (N, s/4, s/4, 128)

    # ---- heads: 3 conv layers, each fused over all heads via a grid axis ----
    h = conv_bn_lrelu(encoded, params["head_convs"][0], per_head=False)
    for layer in params["head_convs"][1:]:
        h = conv_bn_lrelu(h, layer, per_head=True)                  # (NH, N, 2, 2, 128)

    nh, n = h.shape[0], h.shape[1]
    # Flatten in NHWC order (equivalent to NCHW flatten up to a fixed
    # permutation of the linear weight rows; weights are defined in-script).
    hf = h.reshape(nh, n, -1)                                       # (NH, N, 2*im*im)

    # ---- fused head Linear + classifier + center distance ----
    heads_t, logits_t, dist_t = head_tail(
        hf, params["lin_w"], params["lin_b"],
        params["clf_w"], params["clf_b"], params["centers"])

    heads = jnp.transpose(heads_t, (1, 0, 2))                       # (B, NH, F)
    logits = jnp.transpose(logits_t, (1, 0, 2))                     # (B, NH, C)
    distances = jnp.transpose(dist_t[:, :, 0], (1, 0))              # (B, NH)
    return heads, logits, distances


if __name__ == "__main__":
    num_classes = 3
    num_features = 32
    num_channels = 3
    im_size = 16
    batch = 2

    key = jax.random.PRNGKey(0)
    k_params, k_x = jax.random.split(key)
    params = init_params(k_params, num_classes, num_features, num_channels, im_size)
    x = jax.random.normal(k_x, (batch, num_channels, im_size, im_size), jnp.float32)

    heads, logits, distances = model_forward(params, x)
    jax.block_until_ready((heads, logits, distances))

    assert heads.shape == (batch, num_classes, num_features)
    assert logits.shape == (batch, num_classes, num_classes)
    assert distances.shape == (batch, num_classes)
    assert bool(jnp.all(jnp.isfinite(heads)))
    assert bool(jnp.all(jnp.isfinite(logits)))
    assert bool(jnp.all(jnp.isfinite(distances)))

    print("KERNEL_OK")
</pallas_src>

<mosaic_0001>
module attributes {stable_mosaic.version = 11 : i64} {
  func.func @_conv_kernel(%arg0: i32, %arg1: i32, %arg2: memref<1x1x18x18x3xbf16, #tpu.memory_space<vmem>>, %arg3: memref<1x9x3x64xbf16, #tpu.memory_space<vmem>>, %arg4: memref<1x1x64xf32, #tpu.memory_space<vmem>>, %arg5: memref<1x1x64xf32, #tpu.memory_space<vmem>>, %arg6: memref<1x1x16x16x64xbf16, #tpu.memory_space<vmem>>) attributes {dimension_semantics = [#tpu.dimension_semantics<parallel>, #tpu.dimension_semantics<parallel>], iteration_bounds = array<i64: 1, 2>, scalar_prefetch = 0 : i64, scratch_operands = 0 : i64, tpu.core_type = #tpu.core_type<tc>, window_params = [{transform_indices = @transform_0, window_bounds = array<i64: 1, 1, 18, 18, 3>}, {transform_indices = @transform_1, window_bounds = array<i64: 1, 9, 3, 64>}, {transform_indices = @transform_2, window_bounds = array<i64: 1, 1, 64>}, {transform_indices = @transform_3, window_bounds = array<i64: 1, 1, 64>}, {transform_indices = @transform_4, window_bounds = array<i64: 1, 1, 16, 16, 64>}]} {
    %cst = arith.constant 0.000000e+00 : f32
    %0 = vector.broadcast %cst : f32 to vector<256x64xf32>
    %c0 = arith.constant 0 : index
    %c0_0 = arith.constant 0 : index
    %c0_1 = arith.constant 0 : index
    %c0_2 = arith.constant 0 : index
    %c0_3 = arith.constant 0 : index
    %1 = vector.load %arg2[%c0, %c0_0, %c0_1, %c0_2, %c0_3] : memref<1x1x18x18x3xbf16, #tpu.memory_space<vmem>>, vector<1x1x16x16x3xbf16>
    %2 = vector.shape_cast %1 : vector<1x1x16x16x3xbf16> to vector<16x16x3xbf16>
    %3 = vector.shape_cast %2 : vector<16x16x3xbf16> to vector<256x3xbf16>
    %c0_4 = arith.constant 0 : index
    %c0_5 = arith.constant 0 : index
    %c0_6 = arith.constant 0 : index
    %c0_7 = arith.constant 0 : index
    %4 = vector.load %arg3[%c0_4, %c0_5, %c0_6, %c0_7] : memref<1x9x3x64xbf16, #tpu.memory_space<vmem>>, vector<1x1x3x64xbf16>
    %5 = vector.shape_cast %4 : vector<1x1x3x64xbf16> to vector<3x64xbf16>
    %cst_8 = arith.constant dense<0.000000e+00> : vector<256x64xf32>
    %6 = tpu.matmul %3, %5, %cst_8 {dimension_numbers = #tpu.dot_dimension_numbers<[1], [0], [0], [1], [0, 0, 1, 1], [], []>} : vector<256x3xbf16>, vector<3x64xbf16>, vector<256x64xf32> -> vector<256x64xf32>
    %7 = arith.addf %0, %6 : vector<256x64xf32>
    %c0_9 = arith.constant 0 : index
    %c0_10 = arith.constant 0 : index
    %c0_11 = arith.constant 0 : index
    %c1 = arith.constant 1 : index
    %c0_12 = arith.constant 0 : index
    %8 = vector.load %arg2[%c0_9, %c0_10, %c0_11, %c1, %c0_12] : memref<1x1x18x18x3xbf16, #tpu.memory_space<vmem>>, vector<1x1x16x16x3xbf16>
    %9 = vector.shape_cast %8 : vector<1x1x16x16x3xbf16> to vector<16x16x3xbf16>
    %10 = vector.shape_cast %9 : vector<16x16x3xbf16> to vector<256x3xbf16>
    %c0_13 = arith.constant 0 : index
    %c1_14 = arith.constant 1 : index
    %c0_15 = arith.constant 0 : index
    %c0_16 = arith.constant 0 : index
    %11 = vector.load %arg3[%c0_13, %c1_14, %c0_15, %c0_16] : memref<1x9x3x64xbf16, #tpu.memory_space<vmem>>, vector<1x1x3x64xbf16>
    %12 = vector.shape_cast %11 : vector<1x1x3x64xbf16> to vector<3x64xbf16>
    %cst_17 = arith.constant dense<0.000000e+00> : vector<256x64xf32>
    %13 = tpu.matmul %10, %12, %cst_17 {dimension_numbers = #tpu.dot_dimension_numbers<[1], [0], [0], [1], [0, 0, 1, 1], [], []>} : vector<256x3xbf16>, vector<3x64xbf16>, vector<256x64xf32> -> vector<256x64xf32>
    %14 = arith.addf %7, %13 : vector<256x64xf32>
    %c0_18 = arith.constant 0 : index
    %c0_19 = arith.constant 0 : index
    %c0_20 = arith.constant 0 : index
    %c2 = arith.constant 2 : index
    %c0_21 = arith.constant 0 : index
    %15 = vector.load %arg2[%c0_18, %c0_19, %c0_20, %c2, %c0_21] : memref<1x1x18x18x3xbf16, #tpu.memory_space<vmem>>, vector<1x1x16x16x3xbf16>
    %16 = vector.shape_cast %15 : vector<1x1x16x16x3xbf16> to vector<16x16x3xbf16>
    %17 = vector.shape_cast %16 : vector<16x16x3xbf16> to vector<256x3xbf16>
    %c0_22 = arith.constant 0 : index
    %c2_23 = arith.constant 2 : index
    %c0_24 = arith.constant 0 : index
    %c0_25 = arith.constant 0 : index
    %18 = vector.load %arg3[%c0_22, %c2_23, %c0_24, %c0_25] : memref<1x9x3x64xbf16, #tpu.memory_space<vmem>>, vector<1x1x3x64xbf16>
    %19 = vector.shape_cast %18 : vector<1x1x3x64xbf16> to vector<3x64xbf16>
    %cst_26 = arith.constant dense<0.000000e+00> : vector<256x64xf32>
    %20 = tpu.matmul %17, %19, %cst_26 {dimension_numbers = #tpu.dot_dimension_numbers<[1], [0], [0], [1], [0, 0, 1, 1], [], []>} : vector<256x3xbf16>, vector<3x64xbf16>, vector<256x64xf32> -> vector<256x64xf32>
    %21 = arith.addf %14, %20 : vector<256x64xf32>
    %c0_27 = arith.constant 0 : index
    %c0_28 = arith.constant 0 : index
    %c1_29 = arith.constant 1 : index
    %c0_30 = arith.constant 0 : index
    %c0_31 = arith.constant 0 : index
    %22 = vector.load %arg2[%c0_27, %c0_28, %c1_29, %c0_30, %c0_31] : memref<1x1x18x18x3xbf16, #tpu.memory_space<vmem>>, vector<1x1x16x16x3xbf16>
    %23 = vector.shape_cast %22 : vector<1x1x16x16x3xbf16> to vector<16x16x3xbf16>
    %24 = vector.shape_cast %23 : vector<16x16x3xbf16> to vector<256x3xbf16>
    %c0_32 = arith.constant 0 : index
    %c3 = arith.constant 3 : index
    %c0_33 = arith.constant 0 : index
    %c0_34 = arith.constant 0 : index
    %25 = vector.load %arg3[%c0_32, %c3, %c0_33, %c0_34] : memref<1x9x3x64xbf16, #tpu.memory_space<vmem>>, vector<1x1x3x64xbf16>
    %26 = vector.shape_cast %25 : vector<1x1x3x64xbf16> to vector<3x64xbf16>
    %cst_35 = arith.constant dense<0.000000e+00> : vector<256x64xf32>
    %27 = tpu.matmul %24, %26, %cst_35 {dimension_numbers = #tpu.dot_dimension_numbers<[1], [0], [0], [1], [0, 0, 1, 1], [], []>} : vector<256x3xbf16>, vector<3x64xbf16>, vector<256x64xf32> -> vector<256x64xf32>
    %28 = arith.addf %21, %27 : vector<256x64xf32>
    %c0_36 = arith.constant 0 : index
    %c0_37 = arith.constant 0 : index
    %c1_38 = arith.constant 1 : index
    %c1_39 = arith.constant 1 : index
    %c0_40 = arith.constant 0 : index
    %29 = vector.load %arg2[%c0_36, %c0_37, %c1_38, %c1_39, %c0_40] : memref<1x1x18x18x3xbf16, #tpu.memory_space<vmem>>, vector<1x1x16x16x3xbf16>
    %30 = vector.shape_cast %29 : vector<1x1x16x16x3xbf16> to vector<16x16x3xbf16>
    %31 = vector.shape_cast %30 : vector<16x16x3xbf16> to vector<256x3xbf16>
    %c0_41 = arith.constant 0 : index
    %c4 = arith.constant 4 : index
    %c0_42 = arith.constant 0 : index
    %c0_43 = arith.constant 0 : index
    %32 = vector.load %arg3[%c0_41, %c4, %c0_42, %c0_43] : memref<1x9x3x64xbf16, #tpu.memory_space<vmem>>, vector<1x1x3x64xbf16>
    %33 = vector.shape_cast %32 : vector<1x1x3x64xbf16> to vector<3x64xbf16>
    %cst_44 = arith.constant dense<0.000000e+00> : vector<256x64xf32>
    %34 = tpu.matmul %31, %33, %cst_44 {dimension_numbers = #tpu.dot_dimension_numbers<[1], [0], [0], [1], [0, 0, 1, 1], [], []>} : vector<256x3xbf16>, vector<3x64xbf16>, vector<256x64xf32> -> vector<256x64xf32>
    %35 = arith.addf %28, %34 : vector<256x64xf32>
    %c0_45 = arith.constant 0 : index
    %c0_46 = arith.constant 0 : index
    %c1_47 = arith.constant 1 : index
    %c2_48 = arith.constant 2 : index
    %c0_49 = arith.constant 0 : index
    %36 = vector.load %arg2[%c0_45, %c0_46, %c1_47, %c2_48, %c0_49] : memref<1x1x18x18x3xbf16, #tpu.memory_space<vmem>>, vector<1x1x16x16x3xbf16>
    %37 = vector.shape_cast %36 : vector<1x1x16x16x3xbf16> to vector<16x16x3xbf16>
    %38 = vector.shape_cast %37 : vector<16x16x3xbf16> to vector<256x3xbf16>
    %c0_50 = arith.constant 0 : index
    %c5 = arith.constant 5 : index
    %c0_51 = arith.constant 0 : index
    %c0_52 = arith.constant 0 : index
    %39 = vector.load %arg3[%c0_50, %c5, %c0_51, %c0_52] : memref<1x9x3x64xbf16, #tpu.memory_space<vmem>>, vector<1x1x3x64xbf16>
    %40 = vector.shape_cast %39 : vector<1x1x3x64xbf16> to vector<3x64xbf16>
    %cst_53 = arith.constant dense<0.000000e+00> : vector<256x64xf32>
    %41 = tpu.matmul %38, %40, %cst_53 {dimension_numbers = #tpu.dot_dimension_numbers<[1], [0], [0], [1], [0, 0, 1, 1], [], []>} : vector<256x3xbf16>, vector<3x64xbf16>, vector<256x64xf32> -> vector<256x64xf32>
    %42 = arith.addf %35, %41 : vector<256x64xf32>
    %c0_54 = arith.constant 0 : index
    %c0_55 = arith.constant 0 : index
    %c2_56 = arith.constant 2 : index
    %c0_57 = arith.constant 0 : index
    %c0_58 = arith.constant 0 : index
    %43 = vector.load %arg2[%c0_54, %c0_55, %c2_56, %c0_57, %c0_58] : memref<1x1x18x18x3xbf16, #tpu.memory_space<vmem>>, vector<1x1x16x16x3xbf16>
    %44 = vector.shape_cast %43 : vector<1x1x16x16x3xbf16> to vector<16x16x3xbf16>
    %45 = vector.shape_cast %44 : vector<16x16x3xbf16> to vector<256x3xbf16>
    %c0_59 = arith.constant 0 : index
    %c6 = arith.constant 6 : index
    %c0_60 = arith.constant 0 : index
    %c0_61 = arith.constant 0 : index
    %46 = vector.load %arg3[%c0_59, %c6, %c0_60, %c0_61] : memref<1x9x3x64xbf16, #tpu.memory_space<vmem>>, vector<1x1x3x64xbf16>
    %47 = vector.shape_cast %46 : vector<1x1x3x64xbf16> to vector<3x64xbf16>
    %cst_62 = arith.constant dense<0.000000e+00> : vector<256x64xf32>
    %48 = tpu.matmul %45, %47, %cst_62 {dimension_numbers = #tpu.dot_dimension_numbers<[1], [0], [0], [1], [0, 0, 1, 1], [], []>} : vector<256x3xbf16>, vector<3x64xbf16>, vector<256x64xf32> -> vector<256x64xf32>
    %49 = arith.addf %42, %48 : vector<256x64xf32>
    %c0_63 = arith.constant 0 : index
    %c0_64 = arith.constant 0 : index
    %c2_65 = arith.constant 2 : index
    %c1_66 = arith.constant 1 : index
    %c0_67 = arith.constant 0 : index
    %50 = vector.load %arg2[%c0_63, %c0_64, %c2_65, %c1_66, %c0_67] : memref<1x1x18x18x3xbf16, #tpu.memory_space<vmem>>, vector<1x1x16x16x3xbf16>
    %51 = vector.shape_cast %50 : vector<1x1x16x16x3xbf16> to vector<16x16x3xbf16>
    %52 = vector.shape_cast %51 : vector<16x16x3xbf16> to vector<256x3xbf16>
    %c0_68 = arith.constant 0 : index
    %c7 = arith.constant 7 : index
    %c0_69 = arith.constant 0 : index
    %c0_70 = arith.constant 0 : index
    %53 = vector.load %arg3[%c0_68, %c7, %c0_69, %c0_70] : memref<1x9x3x64xbf16, #tpu.memory_space<vmem>>, vector<1x1x3x64xbf16>
    %54 = vector.shape_cast %53 : vector<1x1x3x64xbf16> to vector<3x64xbf16>
    %cst_71 = arith.constant dense<0.000000e+00> : vector<256x64xf32>
    %55 = tpu.matmul %52, %54, %cst_71 {dimension_numbers = #tpu.dot_dimension_numbers<[1], [0], [0], [1], [0, 0, 1, 1], [], []>} : vector<256x3xbf16>, vector<3x64xbf16>, vector<256x64xf32> -> vector<256x64xf32>
    %56 = arith.addf %49, %55 : vector<256x64xf32>
    %c0_72 = arith.constant 0 : index
    %c0_73 = arith.constant 0 : index
    %c2_74 = arith.constant 2 : index
    %c2_75 = arith.constant 2 : index
    %c0_76 = arith.constant 0 : index
    %57 = vector.load %arg2[%c0_72, %c0_73, %c2_74, %c2_75, %c0_76] : memref<1x1x18x18x3xbf16, #tpu.memory_space<vmem>>, vector<1x1x16x16x3xbf16>
    %58 = vector.shape_cast %57 : vector<1x1x16x16x3xbf16> to vector<16x16x3xbf16>
    %59 = vector.shape_cast %58 : vector<16x16x3xbf16> to vector<256x3xbf16>
    %c0_77 = arith.constant 0 : index
    %c8 = arith.constant 8 : index
    %c0_78 = arith.constant 0 : index
    %c0_79 = arith.constant 0 : index
    %60 = vector.load %arg3[%c0_77, %c8, %c0_78, %c0_79] : memref<1x9x3x64xbf16, #tpu.memory_space<vmem>>, vector<1x1x3x64xbf16>
    %61 = vector.shape_cast %60 : vector<1x1x3x64xbf16> to vector<3x64xbf16>
    %cst_80 = arith.constant dense<0.000000e+00> : vector<256x64xf32>
    %62 = tpu.matmul %59, %61, %cst_80 {dimension_numbers = #tpu.dot_dimension_numbers<[1], [0], [0], [1], [0, 0, 1, 1], [], []>} : vector<256x3xbf16>, vector<3x64xbf16>, vector<256x64xf32> -> vector<256x64xf32>
    %63 = arith.addf %56, %62 : vector<256x64xf32>
    %c0_81 = arith.constant 0 : index
    %c0_82 = arith.constant 0 : index
    %c0_83 = arith.constant 0 : index
    %64 = vector.load %arg4[%c0_81, %c0_82, %c0_83] : memref<1x1x64xf32, #tpu.memory_space<vmem>>, vector<1x1x64xf32>
    %65 = vector.shape_cast %64 : vector<1x1x64xf32> to vector<1x64xf32>
    %66 = vector.broadcast %65 : vector<1x64xf32> to vector<256x64xf32>
    %67 = arith.mulf %63, %66 : vector<256x64xf32>
    %c0_84 = arith.constant 0 : index
    %c0_85 = arith.constant 0 : index
    %c0_86 = arith.constant 0 : index
    %68 = vector.load %arg5[%c0_84, %c0_85, %c0_86] : memref<1x1x64xf32, #tpu.memory_space<vmem>>, vector<1x1x64xf32>
    %69 = vector.shape_cast %68 : vector<1x1x64xf32> to vector<1x64xf32>
    %70 = vector.broadcast %69 : vector<1x64xf32> to vector<256x64xf32>
    %71 = arith.addf %67, %70 : vector<256x64xf32>
    %cst_87 = arith.constant 0.00999999977 : f32
    %72 = vector.broadcast %cst_87 : f32 to vector<256x64xf32>
    %73 = arith.mulf %72, %71 : vector<256x64xf32>
    %74 = arith.maximumf %71, %73 : vector<256x64xf32>
    %75 = vector.shape_cast %74 : vector<256x64xf32> to vector<1x1x16x16x64xf32>
    %76 = arith.truncf %75 : vector<1x1x16x16x64xf32> to vector<1x1x16x16x64xbf16>
    %c0_88 = arith.constant 0 : index
    %c0_89 = arith.constant 0 : index
    %c0_90 = arith.constant 0 : index
    %c0_91 = arith.constant 0 : index
    %c0_92 = arith.constant 0 : index
    %77 = vector.load %arg6[%c0_88, %c0_89, %c0_90, %c0_91, %c0_92] : memref<1x1x16x16x64xbf16, #tpu.memory_space<vmem>>, vector<1x1x16x16x64xbf16>
    tpu.vector_store %arg6[%c0_88, %c0_89, %c0_90, %c0_91, %c0_92], %76 {strides = array<i32>} : memref<1x1x16x16x64xbf16, #tpu.memory_space<vmem>>, vector<1x1x16x16x64xbf16>,
    return
  }
  func.func @transform_0(%arg0: i32, %arg1: i32) -> (i32, i32, i32, i32, i32) {
    %c0_i32 = arith.constant 0 : i32
    %c0_i32_0 = arith.constant 0 : i32
    %c0_i32_1 = arith.constant 0 : i32
    %c0_i32_2 = arith.constant 0 : i32
    %c0_i32_3 = arith.constant 0 : i32
    return %arg1, %c0_i32, %c0_i32_0, %c0_i32_1, %c0_i32_2 : i32, i32, i32, i32, i32
  }
  func.func @transform_1(%arg0: i32, %arg1: i32) -> (i32, i32, i32, i32) {
    %c0_i32 = arith.constant 0 : i32
    %c0_i32_0 = arith.constant 0 : i32
    %c0_i32_1 = arith.constant 0 : i32
    %c0_i32_2 = arith.constant 0 : i32
    return %arg0, %c0_i32, %c0_i32_0, %c0_i32_1 : i32, i32, i32, i32
  }
  func.func @transform_2(%arg0: i32, %arg1: i32) -> (i32, i32, i32) {
    %c0_i32 = arith.constant 0 : i32
    %c0_i32_0 = arith.constant 0 : i32
    %c0_i32_1 = arith.constant 0 : i32
    return %arg0, %c0_i32, %c0_i32_0 : i32, i32, i32
  }
  func.func @transform_3(%arg0: i32, %arg1: i32) -> (i32, i32, i32) {
    %c0_i32 = arith.constant 0 : i32
    %c0_i32_0 = arith.constant 0 : i32
    %c0_i32_1 = arith.constant 0 : i32
    return %arg0, %c0_i32, %c0_i32_0 : i32, i32, i32
  }
  func.func @transform_4(%arg0: i32, %arg1: i32) -> (i32, i32, i32, i32, i32) {
    %c0_i32 = arith.constant 0 : i32
    %c0_i32_0 = arith.constant 0 : i32
    %c0_i32_1 = arith.constant 0 : i32
    %c0_i32_2 = arith.constant 0 : i32
    return %arg0, %arg1, %c0_i32, %c0_i32_0, %c0_i32_1 : i32, i32, i32, i32, i32
  }
}

</mosaic_0001>

<llo_original>
// kernel: tpu_custom_call.1
$region0: #{tpu_custom_call.1}
  #allocation0 [shape = 'u32[]', space=smem, size = 0x4, offset = 0x4, fixed_abs, tag = 'smem constant byte address 0x4 - core index']
  #allocation1 [shape = 'u32[144,128]{1,0:T(1,128)}', space=vmem, size = 0x12000, scoped, tag = 'internal scratch']
  %s0 = inlined_call_operand.vmem [shape: bf16[2,1,18,18,3], index: 0, kind: input, shape index: {}]
  %s1 = inlined_call_operand.vmem [shape: bf16[1,9,3,64], index: 1, kind: input, shape index: {}]
  %s2 = inlined_call_operand.vmem [shape: f32[1,1,64], index: 2, kind: input, shape index: {}]
  %s3 = inlined_call_operand.vmem [shape: f32[1,1,64], index: 3, kind: input, shape index: {}]
  %s4 = inlined_call_operand.hbm [shape: bf16[1,2,16,16,64], index: 4, kind: output, shape index: {}]
  %s5 = sld [smem:[#allocation0]]
  $region49: #{tpu_custom_call.1} parent=0
    _
  %s7 = ssub.s32 1, %s5
  %s8 = scalar_select 0, %s7, %s5
  $region1: #{tpu_custom_call.1} parent=0
    #allocation2 [shape = 'u8[131072]{0}', space=vmem, size = 0x20000, scoped, tag = 'output window, operand 0']
    #allocation3 [shape = 's32[2]{0}', space=sflag, size = 0x8, scoped, tag = 'scoped memory for tpu_custom_call.1']
    %9 = vsyncpa [#allocation3], 0
    %s10 = scalar_lea.sflag [#allocation3], 1
    %11 = vsyncpa %s10, 0
    loop: start=0, step=1, limit=4
    $region2: #{tpu_custom_call.1} parent=1 // loop_pre_header
      _
    $region3: #{tpu_custom_call.1} parent=1 // loop_header
      %s13 = sphi 0, %s17
      %p14 = scmp.ge.s32.totalorder %s13, 4
      %s20 = sphi 0, %s32
      %s21 = sphi 0, %s28
      %s22 = sphi 0, %s20
      %s23 = sphi 0, %s21
      %s24 = sphi 0, %s22
      %s25 = sphi 0, %s23
      %s35 = sphi 0, %s37
      %s38 = sphi 0, %s35
      %s39 = sphi 0, %s38
      %s55 = sphi 0, %s39
      %s61 = sphi 0, %s63
      %s64 = sphi 0, %s61
      %s65 = sphi 0, %s64
      %s81 = sphi 0, %s65
      %s87 = sphi 0, %s89
      %s90 = sphi 0, %s87
      %s91 = sphi 0, %s90
      %s107 = sphi 0, %s91
      %s113 = sphi 0, %s115
      %s116 = sphi 0, %s113
      %s117 = sphi 0, %s116
      %s133 = sphi 0, %s117
      %s141 = sphi 0, %s143
      %s144 = sphi 0, %s141
      %s145 = sphi 0, %s144
      %s161 = sphi 0, %s145
    $region4: #{tpu_custom_call.1} parent=1 // loop_header_branch
      %16 = sbr.rel (%p14) target = $region8
    $region5: #{tpu_custom_call.1} parent=1 // loop_body
      %s18 = ssub.s32 %s13, 1
      %s19 = ssub.s32 %s13, 2
      %s26 = sadd.s32 1, %s21
      %p27 = scmp.ge.s32.totalorder %s26, 2
      %s28 = scalar_select %p27, 0, %s26
      %s29 = sadd.s32 1, %s20
      %s30 = scalar_select %p27, %s29, %s20
      %p31 = scmp.ge.s32.totalorder %s30, 1
      %s32 = scalar_select %p31, 0, %s30
      %s33 = ssub.s32 %s21, %s28
      %p34 = scmp.eq.s32.totalorder %s33, 0
      %s36 = sadd.s32 %s35, 1
      %s37 = scalar_select %p34, %s35, %s36
      %p40 = pneg %p34
      %p41 = scmp.eq.s32.totalorder %s13, 1
      %p42 = por %p40, %p41
      %p43 = scmp.ne.s32.totalorder %s35, %s38
      %p44 = scmp.eq.s32.totalorder %s13, 0
      %p45 = por %p43, %p44
      %p46 = scmp.ne.s32.totalorder %s35, %s38
      %p47 = scmp.eq.s32.totalorder %s18, 1
      %p48 = por %p46, %p47
      %p49 = scmp.ne.s32.totalorder %s38, %s39
      %p50 = scmp.eq.s32.totalorder %s18, 0
      %p51 = por %p49, %p50
      %p52 = scmp.ne.s32.totalorder %s38, %s39
      %p53 = scmp.eq.s32.totalorder %s19, 1
      %p54 = por %p52, %p53
      %p56 = scmp.ne.s32.totalorder %s39, %s55
      %p57 = scmp.eq.s32.totalorder %s19, 0
      %p58 = por %p56, %p57
      %s59 = ssub.s32 %s20, %s32
      %p60 = scmp.eq.s32.totalorder %s59, 0
      %s62 = sadd.s32 %s61, 1
      %s63 = scalar_select %p60, %s61, %s62
      %p66 = pneg %p60
      %p67 = scmp.eq.s32.totalorder %s13, 1
      %p68 = por %p66, %p67
      %p69 = scmp.ne.s32.totalorder %s61, %s64
      %p70 = scmp.eq.s32.totalorder %s13, 0
      %p71 = por %p69, %p70
      %p72 = scmp.ne.s32.totalorder %s61, %s64
      %p73 = scmp.eq.s32.totalorder %s18, 1
      %p74 = por %p72, %p73
      %p75 = scmp.ne.s32.totalorder %s64, %s65
      %p76 = scmp.eq.s32.totalorder %s18, 0
      %p77 = por %p75, %p76
      %p78 = scmp.ne.s32.totalorder %s64, %s65
      %p79 = scmp.eq.s32.totalorder %s19, 1
      %p80 = por %p78, %p79
      %p82 = scmp.ne.s32.totalorder %s65, %s81
      %p83 = scmp.eq.s32.totalorder %s19, 0
      %p84 = por %p82, %p83
      %s85 = ssub.s32 %s20, %s32
      %p86 = scmp.eq.s32.totalorder %s85, 0
      %s88 = sadd.s32 %s87, 1
      %s89 = scalar_select %p86, %s87, %s88
      %p92 = pneg %p86
      %p93 = scmp.eq.s32.totalorder %s13, 1
      %p94 = por %p92, %p93
      %p95 = scmp.ne.s32.totalorder %s87, %s90
      %p96 = scmp.eq.s32.totalorder %s13, 0
      %p97 = por %p95, %p96
      %p98 = scmp.ne.s32.totalorder %s87, %s90
      %p99 = scmp.eq.s32.totalorder %s18, 1
      %p100 = por %p98, %p99
      %p101 = scmp.ne.s32.totalorder %s90, %s91
      %p102 = scmp.eq.s32.totalorder %s18, 0
      %p103 = por %p101, %p102
      %p104 = scmp.ne.s32.totalorder %s90, %s91
      %p105 = scmp.eq.s32.totalorder %s19, 1
      %p106 = por %p104, %p105
      %p108 = scmp.ne.s32.totalorder %s91, %s107
      %p109 = scmp.eq.s32.totalorder %s19, 0
      %p110 = por %p108, %p109
      %s111 = ssub.s32 %s20, %s32
      %p112 = scmp.eq.s32.totalorder %s111, 0
      %s114 = sadd.s32 %s113, 1
      %s115 = scalar_select %p112, %s113, %s114
      %p118 = pneg %p112
      %p119 = scmp.eq.s32.totalorder %s13, 1
      %p120 = por %p118, %p119
      %p121 = scmp.ne.s32.totalorder %s113, %s116
      %p122 = scmp.eq.s32.totalorder %s13, 0
      %p123 = por %p121, %p122
      %p124 = scmp.ne.s32.totalorder %s113, %s116
      %p125 = scmp.eq.s32.totalorder %s18, 1
      %p126 = por %p124, %p125
      %p127 = scmp.ne.s32.totalorder %s116, %s117
      %p128 = scmp.eq.s32.totalorder %s18, 0
      %p129 = por %p127, %p128
      %p130 = scmp.ne.s32.totalorder %s116, %s117
      %p131 = scmp.eq.s32.totalorder %s19, 1
      %p132 = por %p130, %p131
      %p134 = scmp.ne.s32.totalorder %s117, %s133
      %p135 = scmp.eq.s32.totalorder %s19, 0
      %p136 = por %p134, %p135
      %s137 = ssub.s32 %s20, %s32
      %s138 = ssub.s32 %s21, %s28
      %s139 = sor.u32 %s137, %s138
      %p140 = scmp.eq.s32.totalorder %s139, 0
      %s142 = sadd.s32 %s141, 1
      %s143 = scalar_select %p140, %s141, %s142
      %p146 = pneg %p140
      %p147 = scmp.eq.s32.totalorder %s13, 1
      %p148 = por %p146, %p147
      %p149 = scmp.ne.s32.totalorder %s141, %s144
      %p150 = scmp.eq.s32.totalorder %s13, 0
      %p151 = por %p149, %p150
      %p152 = scmp.ne.s32.totalorder %s141, %s144
      %p153 = scmp.eq.s32.totalorder %s18, 1
      %p154 = por %p152, %p153
      %p155 = scmp.ne.s32.totalorder %s144, %s145
      %p156 = scmp.eq.s32.totalorder %s18, 0
      %p157 = por %p155, %p156
      %p158 = scmp.ne.s32.totalorder %s144, %s145
      %p159 = scmp.eq.s32.totalorder %s19, 1
      %p160 = por %p158, %p159
      %p162 = scmp.ne.s32.totalorder %s145, %s161
      %p163 = scmp.eq.s32.totalorder %s19, 0
      %p164 = por %p162, %p163
      %p165 = scmp.le.s32.totalorder 1, %s13
      %p166 = scmp.lt.s32.totalorder %s13, 3
      %p167 = pnand %p165, %p166
      %p168 = pneg %p167
      // Predicated region
      $region9: #{tpu_custom_call.1} parent=5 // pred_check
        _
      $region10: #{tpu_custom_call.1} parent=5 // pred_check_branch
        %170 = sbr.rel (%p167) target = $region12
      $region11: #{tpu_custom_call.1} parent=5 // pred_region
        %s171 = ssub.s32 %s13, 1
        // Predicated region
        $region13: #{tpu_custom_call.1} parent=11 // pred_check
          %p172 = pneg %p77
        $region14: #{tpu_custom_call.1} parent=11 // pred_check_branch
          %174 = sbr.rel (%p172) target = $region16
        $region15: #{tpu_custom_call.1} parent=11 // pred_region
          %p175 = scmp.lt.s32.totalorder %s22, 0
          %s176 = scalar_select %p175, %s22, 0
          %s177 = smul.addr %s176, 9
          %s178 = smul.addr %s177, 2
          %s179 = scalar_lea.vmem %s1, %s178
        $region16: #{tpu_custom_call.1} parent=11 // pred_fallthru
          _
        // Predicated region
        $region17: #{tpu_custom_call.1} parent=11 // pred_check
          %p180 = pneg %p103
        $region18: #{tpu_custom_call.1} parent=11 // pred_check_branch
          %182 = sbr.rel (%p180) target = $region20
        $region19: #{tpu_custom_call.1} parent=11 // pred_region
          %p183 = scmp.lt.s32.totalorder %s22, 0
          %s184 = scalar_select %p183, %s22, 0
          %s185 = scalar_lea.vmem %s2, %s184
        $region20: #{tpu_custom_call.1} parent=11 // pred_fallthru
          _
        // Predicated region
        $region21: #{tpu_custom_call.1} parent=11 // pred_check
          %p186 = pneg %p129
        $region22: #{tpu_custom_call.1} parent=11 // pred_check_branch
          %188 = sbr.rel (%p186) target = $region24
        $region23: #{tpu_custom_call.1} parent=11 // pred_region
          %p189 = scmp.lt.s32.totalorder %s22, 0
          %s190 = scalar_select %p189, %s22, 0
          %s191 = scalar_lea.vmem %s3, %s190
        $region24: #{tpu_custom_call.1} parent=11 // pred_fallthru
          _
      $region12: #{tpu_custom_call.1} parent=5 // pred_fallthru
        _
      %p192 = scmp.lt.s32.totalorder %s13, 2
      // Predicated region
      $region25: #{tpu_custom_call.1} parent=5 // pred_check
        %p193 = pneg %p192
      $region26: #{tpu_custom_call.1} parent=5 // pred_check_branch
        %195 = sbr.rel (%p193) target = $region28
      $region27: #{tpu_custom_call.1} parent=5 // pred_region
        // Predicated region
        $region29: #{tpu_custom_call.1} parent=27 // pred_check
          %p196 = pneg %p45
        $region30: #{tpu_custom_call.1} parent=27 // pred_check_branch
          %198 = sbr.rel (%p196) target = $region32
        $region31: #{tpu_custom_call.1} parent=27 // pred_region
          %p199 = scmp.lt.s32.totalorder %s21, 1
          %s200 = scalar_select %p199, %s21, 1
          %s201 = smul.addr %s200, 54
          %s202 = smul.addr %s201, 4
          %s203 = scalar_lea.vmem %s0, %s202
        $region32: #{tpu_custom_call.1} parent=27 // pred_fallthru
          _
      $region28: #{tpu_custom_call.1} parent=5 // pred_fallthru
        _
      %p204 = scmp.le.s32.totalorder 1, %s13
      %p205 = scmp.lt.s32.totalorder %s13, 3
      %p206 = pnand %p204, %p205
      %p207 = pneg %p206
      // Predicated region
      $region33: #{tpu_custom_call.1} parent=5 // pred_check
        _
      $region34: #{tpu_custom_call.1} parent=5 // pred_check_branch
        %209 = sbr.rel (%p206) target = $region36
      $region35: #{tpu_custom_call.1} parent=5 // pred_region
        %s210 = ssub.s32 %s13, 1
        %p211 = scmp.lt.s32.totalorder %s23, 1
        %s212 = scalar_select %p211, %s23, 1
        %s213 = smul.addr %s212, 54
        %s214 = smul.addr %s213, 4
        %s215 = scalar_lea.vmem %s0, %s214
        %p216 = pneg %p51
        %p217 = pneg %p48
        %p218 = scmp.lt.s32.totalorder %s22, 0
        %s219 = scalar_select %p218, %s22, 0
        %s220 = smul.addr %s219, 9
        %s221 = smul.addr %s220, 2
        %s222 = scalar_lea.vmem %s1, %s221
        %p223 = pneg %p77
        %p224 = pneg %p74
        %p225 = scmp.lt.s32.totalorder %s22, 0
        %s226 = scalar_select %p225, %s22, 0
        %s227 = scalar_lea.vmem %s2, %s226
        %p228 = pneg %p103
        %p229 = pneg %p100
        %p230 = scmp.lt.s32.totalorder %s22, 0
        %s231 = scalar_select %p230, %s22, 0
        %s232 = scalar_lea.vmem %s3, %s231
        %p233 = pneg %p129
        %p234 = pneg %p126
        %p235 = pneg %p157
        %p236 = pneg %p154
        %s237 = sand.u32 %s144, 1
        %s238 = scalar_lea.sflag [#allocation3], %s237
        %s239 = sand.u32 %s144, 1
        %s240 = smul.addr %s239, 128
        %s241 = scalar_lea.vmem [#allocation2], %s240
        %p242 = scmp.lt.s32.totalorder %s23, 1
        %s243 = scalar_select %p242, %s23, 1
        %s244 = smul.addr %s243, 54
        %s245 = smul.addr %s244, 4
        %s246 = scalar_lea.vmem %s0, %s245
        %p247 = scmp.lt.s32.totalorder %s22, 0
        %s248 = scalar_select %p247, %s22, 0
        %s249 = smul.addr %s248, 9
        %s250 = smul.addr %s249, 2
        %s251 = scalar_lea.vmem %s1, %s250
        %p252 = scmp.lt.s32.totalorder %s22, 0
        %s253 = scalar_select %p252, %s22, 0
        %s254 = scalar_lea.vmem %s2, %s253
        %p255 = scmp.lt.s32.totalorder %s22, 0
        %s256 = scalar_select %p255, %s22, 0
        %s257 = scalar_lea.vmem %s3, %s256
        %v259 = vld [vmem:[%s246] sm:$0xf]
        %v260 = vld [vmem:[%s246 + $0x4] sm:$0xf]
        %v261 = vld [vmem:[%s246 + $0xc] sm:$0xf]
        %v262 = vld [vmem:[%s246 + $0x10] sm:$0xf]
        %v263 = vld [vmem:[%s246 + $0x18] sm:$0xf]
        %v264 = vld [vmem:[%s246 + $0x1c] sm:$0xf]
        %v265 = vld [vmem:[%s246 + $0x24] sm:$0xf]
        %v266 = vld [vmem:[%s246 + $0x28] sm:$0xf]
        %v267 = vld [vmem:[%s246 + $0x30] sm:$0xf]
        %v268 = vld [vmem:[%s246 + $0x34] sm:$0xf]
        %v269 = vld [vmem:[%s246 + $0x3c] sm:$0xf]
        %v270 = vld [vmem:[%s246 + $0x40] sm:$0xf]
        %v271 = vld [vmem:[%s246 + $0x48] sm:$0xf]
        %v272 = vld [vmem:[%s246 + $0x4c] sm:$0xf]
        %v273 = vld [vmem:[%s246 + $0x54] sm:$0xf]
        %v274 = vld [vmem:[%s246 + $0x58] sm:$0xf]
        %v275 = vld [vmem:[%s246 + $0x60] sm:$0xf]
        %v276 = vld [vmem:[%s246 + $0x64] sm:$0xf]
        %v277 = vld [vmem:[%s246 + $0x6c] sm:$0xf]
        %v278 = vld [vmem:[%s246 + $0x70] sm:$0xf]
        %v279 = vld [vmem:[%s246 + $0x78] sm:$0xf]
        %v280 = vld [vmem:[%s246 + $0x7c] sm:$0xf]
        %v281 = vld [vmem:[%s246 + $0x84] sm:$0xf]
        %v282 = vld [vmem:[%s246 + $0x88] sm:$0xf]
        %v283 = vld [vmem:[%s246 + $0x90] sm:$0xf]
        %v284 = vld [vmem:[%s246 + $0x94] sm:$0xf]
        %v285 = vld [vmem:[%s246 + $0x9c] sm:$0xf]
        %v286 = vld [vmem:[%s246 + $0xa0] sm:$0xf]
        %v287 = vld [vmem:[%s246 + $0xa8] sm:$0xf]
        %v288 = vld [vmem:[%s246 + $0xac] sm:$0xf]
        %v289 = vld [vmem:[%s246 + $0xb4] sm:$0xf]
        %v290 = vld [vmem:[%s246 + $0xb8] sm:$0xf]
        %v291 = vld [vmem:[%s251] sm:$0x3]
        %v292 = vld [vmem:[%s246 + $0x8] sm:$0x1]
        %v293 = vld [vmem:[%s246 + $0x14] sm:$0x1]
        %v294 = vld [vmem:[%s246 + $0x20] sm:$0x1]
        %v295 = vld [vmem:[%s246 + $0x2c] sm:$0x1]
        %v296 = vld [vmem:[%s246 + $0x38] sm:$0x1]
        %v297 = vld [vmem:[%s246 + $0x44] sm:$0x1]
        %v298 = vld [vmem:[%s246 + $0x50] sm:$0x1]
        %v299 = vld [vmem:[%s246 + $0x5c] sm:$0x1]
        %v300 = vld [vmem:[%s246 + $0x68] sm:$0x1]
        %v301 = vld [vmem:[%s246 + $0x74] sm:$0x1]
        %v302 = vld [vmem:[%s246 + $0x80] sm:$0x1]
        %v303 = vld [vmem:[%s246 + $0x8c] sm:$0x1]
        %v304 = vld [vmem:[%s246 + $0x98] sm:$0x1]
        %v305 = vld [vmem:[%s246 + $0xa4] sm:$0x1]
        %v306 = vld [vmem:[%s246 + $0xb0] sm:$0x1]
        %v307 = vld [vmem:[%s246 + $0xbc] sm:$0x1]
        %vm308 = vsmask.f32 3328
        %vm309 = vsmask.f32 7440
        %vm310 = vmor %vm308, %vm309
        %v312 = vshrl.u32 %v259, 16
        %v314 = vrot.slane %v312, 4
        %v315 = vshll.u32 %v259, 16
        %v317 = vrot.slane %v315, 5
        %v318 = vor.u32 %v314, %v317
        %v319 = vrot.slane %v318, 4
        %v321 = vshll.u32 %v260, 16
        %v323 = vrot.slane %v321, 5
        %v324 = vsel %vm310, %v319, %v323
        %v325 = vshrl.u32 %v260, 16
        %v327 = vrot.slane %v325, 4
        %v328 = vor.u32 %v327, %v323
        %v329 = vrot.slane %v328, 4
        %v331 = vshll.u32 %v292, 16
        %v333 = vrot.slane %v331, 5
        %v334 = vsel %vm310, %v329, %v333
        %v336 = vshrl.u32 %v261, 16
        %v338 = vrot.slane %v336, 4
        %v339 = vshll.u32 %v261, 16
        %v341 = vrot.slane %v339, 5
        %v342 = vor.u32 %v338, %v341
        %v343 = vrot.slane %v342, 4
        %v345 = vshll.u32 %v262, 16
        %v347 = vrot.slane %v345, 5
        %v348 = vsel %vm310, %v343, %v347
        %v349 = vshrl.u32 %v262, 16
        %v351 = vrot.slane %v349, 4
        %v352 = vor.u32 %v351, %v347
        %v353 = vrot.slane %v352, 4
        %v355 = vshll.u32 %v293, 16
        %v357 = vrot.slane %v355, 5
        %v358 = vsel %vm310, %v353, %v357
        %v360 = vshrl.u32 %v263, 16
        %v362 = vrot.slane %v360, 4
        %v363 = vshll.u32 %v263, 16
        %v365 = vrot.slane %v363, 5
        %v366 = vor.u32 %v362, %v365
        %v367 = vrot.slane %v366, 4
        %v369 = vshll.u32 %v264, 16
        %v371 = vrot.slane %v369, 5
        %v372 = vsel %vm310, %v367, %v371
        %v373 = vshrl.u32 %v264, 16
        %v375 = vrot.slane %v373, 4
        %v376 = vor.u32 %v375, %v371
        %v377 = vrot.slane %v376, 4
        %v379 = vshll.u32 %v294, 16
        %v381 = vrot.slane %v379, 5
        %v382 = vsel %vm310, %v377, %v381
        %v384 = vshrl.u32 %v265, 16
        %v386 = vrot.slane %v384, 4
        %v387 = vshll.u32 %v265, 16
        %v389 = vrot.slane %v387, 5
        %v390 = vor.u32 %v386, %v389
        %v391 = vrot.slane %v390, 4
        %v393 = vshll.u32 %v266, 16
        %v395 = vrot.slane %v393, 5
        %v396 = vsel %vm310, %v391, %v395
        %v397 = vshrl.u32 %v266, 16
        %v399 = vrot.slane %v397, 4
        %v400 = vor.u32 %v399, %v395
        %v401 = vrot.slane %v400, 4
        %v403 = vshll.u32 %v295, 16
        %v405 = vrot.slane %v403, 5
        %v406 = vsel %vm310, %v401, %v405
        %v408 = vshrl.u32 %v267, 16
        %v410 = vrot.slane %v408, 4
        %v411 = vshll.u32 %v267, 16
        %v413 = vrot.slane %v411, 5
        %v414 = vor.u32 %v410, %v413
        %v415 = vrot.slane %v414, 4
        %v417 = vshll.u32 %v268, 16
        %v419 = vrot.slane %v417, 5
        %v420 = vsel %vm310, %v415, %v419
        %v421 = vshrl.u32 %v268, 16
        %v423 = vrot.slane %v421, 4
        %v424 = vor.u32 %v423, %v419
        %v425 = vrot.slane %v424, 4
        %v427 = vshll.u32 %v296, 16
        %v429 = vrot.slane %v427, 5
        %v430 = vsel %vm310, %v425, %v429
        %v432 = vshrl.u32 %v269, 16
        %v434 = vrot.slane %v432, 4
        %v435 = vshll.u32 %v269, 16
        %v437 = vrot.slane %v435, 5
        %v438 = vor.u32 %v434, %v437
        %v439 = vrot.slane %v438, 4
        %v441 = vshll.u32 %v270, 16
        %v443 = vrot.slane %v441, 5
        %v444 = vsel %vm310, %v439, %v443
        %v445 = vshrl.u32 %v270, 16
        %v447 = vrot.slane %v445, 4
        %v448 = vor.u32 %v447, %v443
        %v449 = vrot.slane %v448, 4
        %v451 = vshll.u32 %v297, 16
        %v453 = vrot.slane %v451, 5
        %v454 = vsel %vm310, %v449, %v453
        %v456 = vshrl.u32 %v271, 16
        %v458 = vrot.slane %v456, 4
        %v459 = vshll.u32 %v271, 16
        %v461 = vrot.slane %v459, 5
        %v462 = vor.u32 %v458, %v461
        %v463 = vrot.slane %v462, 4
        %v465 = vshll.u32 %v272, 16
        %v467 = vrot.slane %v465, 5
        %v468 = vsel %vm310, %v463, %v467
        %v469 = vshrl.u32 %v272, 16
        %v471 = vrot.slane %v469, 4
        %v472 = vor.u32 %v471, %v467
        %v473 = vrot.slane %v472, 4
        %v475 = vshll.u32 %v298, 16
        %v477 = vrot.slane %v475, 5
        %v478 = vsel %vm310, %v473, %v477
        %v480 = vshrl.u32 %v273, 16
        %v482 = vrot.slane %v480, 4
        %v483 = vshll.u32 %v273, 16
        %v485 = vrot.slane %v483, 5
        %v486 = vor.u32 %v482, %v485
        %v487 = vrot.slane %v486, 4
        %v489 = vshll.u32 %v274, 16
        %v491 = vrot.slane %v489, 5
        %v492 = vsel %vm310, %v487, %v491
        %v493 = vshrl.u32 %v274, 16
        %v495 = vrot.slane %v493, 4
        %v496 = vor.u32 %v495, %v491
        %v497 = vrot.slane %v496, 4
        %v499 = vshll.u32 %v299, 16
        %v501 = vrot.slane %v499, 5
        %v502 = vsel %vm310, %v497, %v501
        %v504 = vshrl.u32 %v275, 16
        %v506 = vrot.slane %v504, 4
        %v507 = vshll.u32 %v275, 16
        %v509 = vrot.slane %v507, 5
        %v510 = vor.u32 %v506, %v509
        %v511 = vrot.slane %v510, 4
        %v513 = vshll.u32 %v276, 16
        %v515 = vrot.slane %v513, 5
        %v516 = vsel %vm310, %v511, %v515
        %v517 = vshrl.u32 %v276, 16
        %v519 = vrot.slane %v517, 4
        %v520 = vor.u32 %v519, %v515
        %v521 = vrot.slane %v520, 4
        %v523 = vshll.u32 %v300, 16
        %v525 = vrot.slane %v523, 5
        %v526 = vsel %vm310, %v521, %v525
        %v528 = vshrl.u32 %v277, 16
        %v530 = vrot.slane %v528, 4
        %v531 = vshll.u32 %v277, 16
        %v533 = vrot.slane %v531, 5
        %v534 = vor.u32 %v530, %v533
        %v535 = vrot.slane %v534, 4
        %v537 = vshll.u32 %v278, 16
        %v539 = vrot.slane %v537, 5
        %v540 = vsel %vm310, %v535, %v539
        %v541 = vshrl.u32 %v278, 16
        %v543 = vrot.slane %v541, 4
        %v544 = vor.u32 %v543, %v539
        %v545 = vrot.slane %v544, 4
        %v547 = vshll.u32 %v301, 16
        %v549 = vrot.slane %v547, 5
        %v550 = vsel %vm310, %v545, %v549
        %v552 = vshrl.u32 %v279, 16
        %v554 = vrot.slane %v552, 4
        %v555 = vshll.u32 %v279, 16
        %v557 = vrot.slane %v555, 5
        %v558 = vor.u32 %v554, %v557
        %v559 = vrot.slane %v558, 4
        %v561 = vshll.u32 %v280, 16
        %v563 = vrot.slane %v561, 5
        %v564 = vsel %vm310, %v559, %v563
        %v565 = vshrl.u32 %v280, 16
        %v567 = vrot.slane %v565, 4
        %v568 = vor.u32 %v567, %v563
        %v569 = vrot.slane %v568, 4
        %v571 = vshll.u32 %v302, 16
        %v573 = vrot.slane %v571, 5
        %v574 = vsel %vm310, %v569, %v573
        %v576 = vshrl.u32 %v281, 16
        %v578 = vrot.slane %v576, 4
        %v579 = vshll.u32 %v281, 16
        %v581 = vrot.slane %v579, 5
        %v582 = vor.u32 %v578, %v581
        %v583 = vrot.slane %v582, 4
        %v585 = vshll.u32 %v282, 16
        %v587 = vrot.slane %v585, 5
        %v588 = vsel %vm310, %v583, %v587
        %v589 = vshrl.u32 %v282, 16
        %v591 = vrot.slane %v589, 4
        %v592 = vor.u32 %v591, %v587
        %v593 = vrot.slane %v592, 4
        %v595 = vshll.u32 %v303, 16
        %v597 = vrot.slane %v595, 5
        %v598 = vsel %vm310, %v593, %v597
        %v600 = vshrl.u32 %v283, 16
        %v602 = vrot.slane %v600, 4
        %v603 = vshll.u32 %v283, 16
        %v605 = vrot.slane %v603, 5
        %v606 = vor.u32 %v602, %v605
        %v607 = vrot.slane %v606, 4
        %v609 = vshll.u32 %v284, 16
        %v611 = vrot.slane %v609, 5
        %v612 = vsel %vm310, %v607, %v611
        %v613 = vshrl.u32 %v284, 16
        %v615 = vrot.slane %v613, 4
        %v616 = vor.u32 %v615, %v611
        %v617 = vrot.slane %v616, 4
        %v619 = vshll.u32 %v304, 16
        %v621 = vrot.slane %v619, 5
        %v622 = vsel %vm310, %v617, %v621
        %v624 = vshrl.u32 %v285, 16
        %v626 = vrot.slane %v624, 4
        %v627 = vshll.u32 %v285, 16
        %v629 = vrot.slane %v627, 5
        %v630 = vor.u32 %v626, %v629
        %v631 = vrot.slane %v630, 4
        %v633 = vshll.u32 %v286, 16
        %v635 = vrot.slane %v633, 5
        %v636 = vsel %vm310, %v631, %v635
        %v637 = vshrl.u32 %v286, 16
        %v639 = vrot.slane %v637, 4
        %v640 = vor.u32 %v639, %v635
        %v641 = vrot.slane %v640, 4
        %v643 = vshll.u32 %v305, 16
        %v645 = vrot.slane %v643, 5
        %v646 = vsel %vm310, %v641, %v645
        %v648 = vshrl.u32 %v287, 16
        %v650 = vrot.slane %v648, 4
        %v651 = vshll.u32 %v287, 16
        %v653 = vrot.slane %v651, 5
        %v654 = vor.u32 %v650, %v653
        %v655 = vrot.slane %v654, 4
        %v657 = vshll.u32 %v288, 16
        %v659 = vrot.slane %v657, 5
        %v660 = vsel %vm310, %v655, %v659
        %v661 = vshrl.u32 %v288, 16
        %v663 = vrot.slane %v661, 4
        %v664 = vor.u32 %v663, %v659
        %v665 = vrot.slane %v664, 4
        %v667 = vshll.u32 %v306, 16
        %v669 = vrot.slane %v667, 5
        %v670 = vsel %vm310, %v665, %v669
        %v672 = vshrl.u32 %v289, 16
        %v674 = vrot.slane %v672, 4
        %v675 = vshll.u32 %v289, 16
        %v677 = vrot.slane %v675, 5
        %v678 = vor.u32 %v674, %v677
        %v679 = vrot.slane %v678, 4
        %v681 = vshll.u32 %v290, 16
        %v683 = vrot.slane %v681, 5
        %v684 = vsel %vm310, %v679, %v683
        %v685 = vshrl.u32 %v290, 16
        %v687 = vrot.slane %v685, 4
        %v688 = vor.u32 %v687, %v683
        %v689 = vrot.slane %v688, 4
        %v691 = vshll.u32 %v307, 16
        %v693 = vrot.slane %v691, 5
        %v694 = vsel %vm310, %v689, %v693
        %s695 = scalar_lea.vmem %s251, 2
        %v696 = vld [vmem:[%s695] sm:$0x3]
        %v697 = vunpack.c.l.b16 %v324
        %v698 = vunpack.c.l.b16 %v334
        %v699 = vunpack.c.l.b16 %v348
        %v700 = vunpack.c.l.b16 %v358
        %v701 = vunpack.c.l.b16 %v372
        %v702 = vunpack.c.l.b16 %v382
        %v703 = vunpack.c.l.b16 %v396
        %v704 = vunpack.c.l.b16 %v406
        %v705 = vunpack.c.l.b16 %v420
        %v706 = vunpack.c.l.b16 %v430
        %v707 = vunpack.c.l.b16 %v444
        %v708 = vunpack.c.l.b16 %v454
        %v709 = vunpack.c.l.b16 %v468
        %v710 = vunpack.c.l.b16 %v478
        %v711 = vunpack.c.l.b16 %v492
        %v712 = vunpack.c.l.b16 %v502
        %v713 = vunpack.c.l.b16 %v516
        %v714 = vunpack.c.l.b16 %v526
        %v715 = vunpack.c.l.b16 %v540
        %v716 = vunpack.c.l.b16 %v550
        %v717 = vunpack.c.l.b16 %v564
        %v718 = vunpack.c.l.b16 %v574
        %v719 = vunpack.c.l.b16 %v588
        %v720 = vunpack.c.l.b16 %v598
        %v721 = vunpack.c.l.b16 %v612
        %v722 = vunpack.c.l.b16 %v622
        %v723 = vunpack.c.l.b16 %v636
        %v724 = vunpack.c.l.b16 %v646
        %v725 = vunpack.c.l.b16 %v660
        %v726 = vunpack.c.l.b16 %v670
        %v727 = vunpack.c.l.b16 %v684
        %v728 = vunpack.c.l.b16 %v694
        %v729 = vpack.c.b16 %v698, %v697
        %v730 = vpack.c.b16 %v700, %v699
        %v731 = vpack.c.b16 %v702, %v701
        %v732 = vpack.c.b16 %v704, %v703
        %v733 = vpack.c.b16 %v706, %v705
        %v734 = vpack.c.b16 %v708, %v707
        %v735 = vpack.c.b16 %v710, %v709
        %v736 = vpack.c.b16 %v712, %v711
        %v737 = vpack.c.b16 %v714, %v713
        %v738 = vpack.c.b16 %v716, %v715
        %v739 = vpack.c.b16 %v718, %v717
        %v740 = vpack.c.b16 %v720, %v719
        %v741 = vpack.c.b16 %v722, %v721
        %v742 = vpack.c.b16 %v724, %v723
        %v743 = vpack.c.b16 %v726, %v725
        %v744 = vpack.c.b16 %v728, %v727
        %vm745 = vcmask 23552
        %v747 = vsel %vm745, %v729, 0
        %v750 = vsel %vm745, %v730, 0
        %v753 = vsel %vm745, %v731, 0
        %v756 = vsel %vm745, %v732, 0
        %v759 = vsel %vm745, %v733, 0
        %v762 = vsel %vm745, %v734, 0
        %v765 = vsel %vm745, %v735, 0
        %v768 = vsel %vm745, %v736, 0
        %v771 = vsel %vm745, %v737, 0
        %v774 = vsel %vm745, %v738, 0
        %v777 = vsel %vm745, %v739, 0
        %v780 = vsel %vm745, %v740, 0
        %v783 = vsel %vm745, %v741, 0
        %v786 = vsel %vm745, %v742, 0
        %v789 = vsel %vm745, %v743, 0
        %v792 = vsel %vm745, %v744, 0
        %vm794 = vcmask 1040384
        %vm795 = vcmask 1041408
        %v796 = vsel %vm794, 4294967295, 65535
        %v797 = vsel %vm795, %v796, 0
        %v799 = vand.u32 %v696, %v797
        %801 = vmatprep.subr.bf16.mxu0 0
        %802 = vmatpush1.bf16.msra.mxu0 %v799
        %803 = vmatprep.subr.bf16.mxu0 0
        %804 = vmatpush1.bf16.msra.mxu0 0
        %805 = vmatprep.subr.bf16.mxu0 0
        %806 = vmatpush1.bf16.msra.mxu0 0
        %807 = vmatprep.subr.bf16.mxu0 0
        %808 = vmatpush1.bf16.msra.mxu0 0
        %809 = vmatprep.subr.bf16.mxu0 0
        %810 = vmatpush1.bf16.msra.mxu0 0
        %811 = vmatprep.subr.bf16.mxu0 0
        %812 = vmatpush1.bf16.msra.mxu0 0
        %813 = vmatprep.subr.bf16.mxu0 0
        %814 = vmatpush1.bf16.msra.mxu0 0
        %815 = vmatprep.subr.bf16.mxu0 0
        %816 = vmatpush1.bf16.msra.mxu0 0
        %817 = vmatprep.subr.bf16.mxu0 0
        %818 = vmatpush1.bf16.msra.mxu0 0
        %819 = vmatprep.subr.bf16.mxu0 0
        %820 = vmatpush1.bf16.msra.mxu0 0
        %821 = vmatprep.subr.bf16.mxu0 0
        %822 = vmatpush1.bf16.msra.mxu0 0
        %823 = vmatprep.subr.bf16.mxu0 0
        %824 = vmatpush1.bf16.msra.mxu0 0
        %825 = vmatprep.subr.bf16.mxu0 0
        %826 = vmatpush1.bf16.msra.mxu0 0
        %827 = vmatprep.subr.bf16.mxu0 0
        %828 = vmatpush1.bf16.msra.mxu0 0
        %829 = vmatprep.subr.bf16.mxu0 0
        %830 = vmatpush1.bf16.msra.mxu0 0
        %831 = vmatprep.subr.bf16.mxu0 0
        %832 = vmatpush1.bf16.msra.mxu0 0
        %833 = vmatprep.mubr.bf16.mxu0 0
        %834 = vmatmul.mubr.bf16.gmra.mrb[0].mxu0 %v747
        %v835 = vpop.f32.mrb[0].mxu0
        %v836 = vadd.f32 0.0, %v835
        %v837 = vpop.f32.mrb[0].mxu0
        %v838 = vpop.f32.mrb[0].mxu0
        %v839 = vadd.f32 0.0, %v838
        %v840 = vpop.f32.mrb[0].mxu0
        %841 = vmatprep.mubr.bf16.mxu0 0
        %842 = vmatmul.mubr.bf16.gmra.mrb[0].mxu0 %v750
        %v843 = vpop.f32.mrb[0].mxu0
        %v844 = vadd.f32 0.0, %v843
        %v845 = vpop.f32.mrb[0].mxu0
        %v846 = vpop.f32.mrb[0].mxu0
        %v847 = vadd.f32 0.0, %v846
        %v848 = vpop.f32.mrb[0].mxu0
        %849 = vmatprep.mubr.bf16.mxu0 0
        %850 = vmatmul.mubr.bf16.gmra.mrb[0].mxu0 %v753
        %v851 = vpop.f32.mrb[0].mxu0
        %v852 = vadd.f32 0.0, %v851
        %v853 = vpop.f32.mrb[0].mxu0
        %v854 = vpop.f32.mrb[0].mxu0
        %v855 = vadd.f32 0.0, %v854
        %v856 = vpop.f32.mrb[0].mxu0
        %857 = vmatprep.mubr.bf16.mxu0 0
        %858 = vmatmul.mubr.bf16.gmra.mrb[0].mxu0 %v756
        %v859 = vpop.f32.mrb[0].mxu0
        %v860 = vadd.f32 0.0, %v859
        %v861 = vpop.f32.mrb[0].mxu0
        %v862 = vpop.f32.mrb[0].mxu0
        %v863 = vadd.f32 0.0, %v862
        %v864 = vpop.f32.mrb[0].mxu0
        %865 = vmatprep.mubr.bf16.mxu0 0
        %866 = vmatmul.mubr.bf16.gmra.mrb[0].mxu0 %v759
        %v867 = vpop.f32.mrb[0].mxu0
        %v868 = vadd.f32 0.0, %v867
        %v869 = vpop.f32.mrb[0].mxu0
        %v870 = vpop.f32.mrb[0].mxu0
        %v871 = vadd.f32 0.0, %v870
        %v872 = vpop.f32.mrb[0].mxu0
        %873 = vmatprep.mubr.bf16.mxu0 0
        %874 = vmatmul.mubr.bf16.gmra.mrb[0].mxu0 %v762
        %v875 = vpop.f32.mrb[0].mxu0
        %v876 = vadd.f32 0.0, %v875
        %v877 = vpop.f32.mrb[0].mxu0
        %v878 = vpop.f32.mrb[0].mxu0
        %v879 = vadd.f32 0.0, %v878
        %v880 = vpop.f32.mrb[0].mxu0
        %881 = vmatprep.mubr.bf16.mxu0 0
        %882 = vmatmul.mubr.bf16.gmra.mrb[0].mxu0 %v765
        %v883 = vpop.f32.mrb[0].mxu0
        %v884 = vadd.f32 0.0, %v883
        %v885 = vpop.f32.mrb[0].mxu0
        %v886 = vpop.f32.mrb[0].mxu0
        %v887 = vadd.f32 0.0, %v886
        %v888 = vpop.f32.mrb[0].mxu0
        %889 = vmatprep.mubr.bf16.mxu0 0
        %890 = vmatmul.mubr.bf16.gmra.mrb[0].mxu0 %v768
        %v891 = vpop.f32.mrb[0].mxu0
        %v892 = vadd.f32 0.0, %v891
        %v893 = vpop.f32.mrb[0].mxu0
        %v894 = vpop.f32.mrb[0].mxu0
        %v895 = vadd.f32 0.0, %v894
        %v896 = vpop.f32.mrb[0].mxu0
        %897 = vmatprep.mubr.bf16.mxu0 0
        %898 = vmatmul.mubr.bf16.gmra.mrb[0].mxu0 %v771
        %v899 = vpop.f32.mrb[0].mxu0
        %v900 = vadd.f32 0.0, %v899
        %v901 = vpop.f32.mrb[0].mxu0
        %v902 = vpop.f32.mrb[0].mxu0
        %v903 = vadd.f32 0.0, %v902
        %v904 = vpop.f32.mrb[0].mxu0
        %905 = vmatprep.mubr.bf16.mxu0 0
        %906 = vmatmul.mubr.bf16.gmra.mrb[0].mxu0 %v774
        %v907 = vpop.f32.mrb[0].mxu0
        %v908 = vadd.f32 0.0, %v907
        %v909 = vpop.f32.mrb[0].mxu0
        %v910 = vpop.f32.mrb[0].mxu0
        %v911 = vadd.f32 0.0, %v910
        %v912 = vpop.f32.mrb[0].mxu0
        %913 = vmatprep.mubr.bf16.mxu0 0
        %914 = vmatmul.mubr.bf16.gmra.mrb[0].mxu0 %v777
        %v915 = vpop.f32.mrb[0].mxu0
        %v916 = vadd.f32 0.0, %v915
        %v917 = vpop.f32.mrb[0].mxu0
        %v918 = vpop.f32.mrb[0].mxu0
        %v919 = vadd.f32 0.0, %v918
        %v920 = vpop.f32.mrb[0].mxu0
        %921 = vmatprep.mubr.bf16.mxu0 0
        %922 = vmatmul.mubr.bf16.gmra.mrb[0].mxu0 %v780
        %v923 = vpop.f32.mrb[0].mxu0
        %v924 = vadd.f32 0.0, %v923
        %v925 = vpop.f32.mrb[0].mxu0
        %v926 = vpop.f32.mrb[0].mxu0
        %v927 = vadd.f32 0.0, %v926
        %v928 = vpop.f32.mrb[0].mxu0
        %929 = vmatprep.mubr.bf16.mxu0 0
        %930 = vmatmul.mubr.bf16.gmra.mrb[0].mxu0 %v783
        %v931 = vpop.f32.mrb[0].mxu0
        %v932 = vadd.f32 0.0, %v931
        %v933 = vpop.f32.mrb[0].mxu0
        %v934 = vpop.f32.mrb[0].mxu0
        %v935 = vadd.f32 0.0, %v934
        %v936 = vpop.f32.mrb[0].mxu0
        %937 = vmatprep.mubr.bf16.mxu0 0
        %938 = vmatmul.mubr.bf16.gmra.mrb[0].mxu0 %v786
        %v939 = vpop.f32.mrb[0].mxu0
        %v940 = vadd.f32 0.0, %v939
        %v941 = vpop.f32.mrb[0].mxu0
        %v942 = vpop.f32.mrb[0].mxu0
        %v943 = vadd.f32 0.0, %v942
        %v944 = vpop.f32.mrb[0].mxu0
        %945 = vmatprep.mubr.bf16.mxu0 0
        %946 = vmatmul.mubr.bf16.gmra.mrb[0].mxu0 %v789
        %v947 = vpop.f32.mrb[0].mxu0
        %v948 = vadd.f32 0.0, %v947
        %v949 = vpop.f32.mrb[0].mxu0
        %v950 = vpop.f32.mrb[0].mxu0
        %v951 = vadd.f32 0.0, %v950
        %v952 = vpop.f32.mrb[0].mxu0
        %953 = vmatprep.mubr.bf16.mxu0 0
        %954 = vmatmul.mubr.bf16.gmra.mrb[0].mxu0 %v792
        %v955 = vpop.f32.mrb[0].mxu0
        %v956 = vadd.f32 0.0, %v955
        %v957 = vpop.f32.mrb[0].mxu0
        %v958 = vpop.f32.mrb[0].mxu0
        %v959 = vadd.f32 0.0, %v958
        %v960 = vpop.f32.mrb[0].mxu0
        %961 = vdwg.mxu0
        %v994 = vunpack.c.l.b16 %v259
        %v995 = vunpack.c.l.b16 %v260
        %v996 = vunpack.c.l.b16 %v261
        %v997 = vunpack.c.l.b16 %v262
        %v998 = vunpack.c.l.b16 %v263
        %v999 = vunpack.c.l.b16 %v264
        %v1000 = vunpack.c.l.b16 %v265
        %v1001 = vunpack.c.l.b16 %v266
        %v1002 = vunpack.c.l.b16 %v267
        %v1003 = vunpack.c.l.b16 %v268
        %v1004 = vunpack.c.l.b16 %v269
        %v1005 = vunpack.c.l.b16 %v270
        %v1006 = vunpack.c.l.b16 %v271
        %v1007 = vunpack.c.l.b16 %v272
        %v1008 = vunpack.c.l.b16 %v273
        %v1009 = vunpack.c.l.b16 %v274
        %v1010 = vunpack.c.l.b16 %v275
        %v1011 = vunpack.c.l.b16 %v276
        %v1012 = vunpack.c.l.b16 %v277
        %v1013 = vunpack.c.l.b16 %v278
        %v1014 = vunpack.c.l.b16 %v279
        %v1015 = vunpack.c.l.b16 %v280
        %v1016 = vunpack.c.l.b16 %v281
        %v1017 = vunpack.c.l.b16 %v282
        %v1018 = vunpack.c.l.b16 %v283
        %v1019 = vunpack.c.l.b16 %v284
        %v1020 = vunpack.c.l.b16 %v285
        %v1021 = vunpack.c.l.b16 %v286
        %v1022 = vunpack.c.l.b16 %v287
        %v1023 = vunpack.c.l.b16 %v288
        %v1024 = vunpack.c.l.b16 %v289
        %v1025 = vunpack.c.l.b16 %v290
        %v1026 = vpack.c.b16 %v995, %v994
        %v1027 = vpack.c.b16 %v997, %v996
        %v1028 = vpack.c.b16 %v999, %v998
        %v1029 = vpack.c.b16 %v1001, %v1000
        %v1030 = vpack.c.b16 %v1003, %v1002
        %v1031 = vpack.c.b16 %v1005, %v1004
        %v1032 = vpack.c.b16 %v1007, %v1006
        %v1033 = vpack.c.b16 %v1009, %v1008
        %v1034 = vpack.c.b16 %v1011, %v1010
        %v1035 = vpack.c.b16 %v1013, %v1012
        %v1036 = vpack.c.b16 %v1015, %v1014
        %v1037 = vpack.c.b16 %v1017, %v1016
        %v1038 = vpack.c.b16 %v1019, %v1018
        %v1039 = vpack.c.b16 %v1021, %v1020
        %v1040 = vpack.c.b16 %v1023, %v1022
        %v1041 = vpack.c.b16 %v1025, %v1024
        %v1043 = vsel %vm745, %v1026, 0
        %v1046 = vsel %vm745, %v1027, 0
        %v1049 = vsel %vm745, %v1028, 0
        %v1052 = vsel %vm745, %v1029, 0
        %v1055 = vsel %vm745, %v1030, 0
        %v1058 = vsel %vm745, %v1031, 0
        %v1061 = vsel %vm745, %v1032, 0
        %v1064 = vsel %vm745, %v1033, 0
        %v1067 = vsel %vm745, %v1034, 0
        %v1070 = vsel %vm745, %v1035, 0
        %v1073 = vsel %vm745, %v1036, 0
        %v1076 = vsel %vm745, %v1037, 0
        %v1079 = vsel %vm745, %v1038, 0
        %v1082 = vsel %vm745, %v1039, 0
        %v1085 = vsel %vm745, %v1040, 0
        %v1088 = vsel %vm745, %v1041, 0
        %v1091 = vand.u32 %v291, %v797
        %1093 = vmatprep.subr.bf16.mxu0 0
        %1094 = vmatpush1.bf16.msra.mxu0 %v1091
        %1095 = vmatprep.subr.bf16.mxu0 0
        %1096 = vmatpush1.bf16.msra.mxu0 0
        %1097 = vmatprep.subr.bf16.mxu0 0
        %1098 = vmatpush1.bf16.msra.mxu0 0
        %1099 = vmatprep.subr.bf16.mxu0 0
        %1100 = vmatpush1.bf16.msra.mxu0 0
        %1101 = vmatprep.subr.bf16.mxu0 0
        %1102 = vmatpush1.bf16.msra.mxu0 0
        %1103 = vmatprep.subr.bf16.mxu0 0
        %1104 = vmatpush1.bf16.msra.mxu0 0
        %1105 = vmatprep.subr.bf16.mxu0 0
        %1106 = vmatpush1.bf16.msra.mxu0 0
        %1107 = vmatprep.subr.bf16.mxu0 0
        %1108 = vmatpush1.bf16.msra.mxu0 0
        %1109 = vmatprep.subr.bf16.mxu0 0
        %1110 = vmatpush1.bf16.msra.mxu0 0
        %1111 = vmatprep.subr.bf16.mxu0 0
        %1112 = vmatpush1.bf16.msra.mxu0 0
        %1113 = vmatprep.subr.bf16.mxu0 0
        %1114 = vmatpush1.bf16.msra.mxu0 0
        %1115 = vmatprep.subr.bf16.mxu0 0
        %1116 = vmatpush1.bf16.msra.mxu0 0
        %1117 = vmatprep.subr.bf16.mxu0 0
        %1118 = vmatpush1.bf16.msra.mxu0 0
        %1119 = vmatprep.subr.bf16.mxu0 0
        %1120 = vmatpush1.bf16.msra.mxu0 0
        %1121 = vmatprep.subr.bf16.mxu0 0
        %1122 = vmatpush1.bf16.msra.mxu0 0
        %1123 = vmatprep.subr.bf16.mxu0 0
        %1124 = vmatpush1.bf16.msra.mxu0 0
        %1125 = vmatprep.mubr.bf16.mxu0 0
        %1126 = vmatmul.mubr.bf16.gmra.mrb[0].mxu0 %v1043
        %v1127 = vpop.f32.mrb[0].mxu0
        %v1128 = vadd.f32 %v836, %v1127
        %v1129 = vpop.f32.mrb[0].mxu0
        %v1130 = vpop.f32.mrb[0].mxu0
        %v1131 = vadd.f32 %v839, %v1130
        %v1132 = vpop.f32.mrb[0].mxu0
        %1133 = vmatprep.mubr.bf16.mxu0 0
        %1134 = vmatmul.mubr.bf16.gmra.mrb[0].mxu0 %v1046
        %v1135 = vpop.f32.mrb[0].mxu0
        %v1136 = vadd.f32 %v844, %v1135
        %v1137 = vpop.f32.mrb[0].mxu0
        %v1138 = vpop.f32.mrb[0].mxu0
        %v1139 = vadd.f32 %v847, %v1138
        %v1140 = vpop.f32.mrb[0].mxu0
        %1141 = vmatprep.mubr.bf16.mxu0 0
        %1142 = vmatmul.mubr.bf16.gmra.mrb[0].mxu0 %v1049
        %v1143 = vpop.f32.mrb[0].mxu0
        %v1144 = vadd.f32 %v852, %v1143
        %v1145 = vpop.f32.mrb[0].mxu0
        %v1146 = vpop.f32.mrb[0].mxu0
        %v1147 = vadd.f32 %v855, %v1146
        %v1148 = vpop.f32.mrb[0].mxu0
        %1149 = vmatprep.mubr.bf16.mxu0 0
        %1150 = vmatmul.mubr.bf16.gmra.mrb[0].mxu0 %v1052
        %v1151 = vpop.f32.mrb[0].mxu0
        %v1152 = vadd.f32 %v860, %v1151
        %v1153 = vpop.f32.mrb[0].mxu0
        %v1154 = vpop.f32.mrb[0].mxu0
        %v1155 = vadd.f32 %v863, %v1154
        %v1156 = vpop.f32.mrb[0].mxu0
        %1157 = vmatprep.mubr.bf16.mxu0 0
        %1158 = vmatmul.mubr.bf16.gmra.mrb[0].mxu0 %v1055
        %v1159 = vpop.f32.mrb[0].mxu0
        %v1160 = vadd.f32 %v868, %v1159
        %v1161 = vpop.f32.mrb[0].mxu0
        %v1162 = vpop.f32.mrb[0].mxu0
        %v1163 = vadd.f32 %v871, %v1162
        %v1164 = vpop.f32.mrb[0].mxu0
        %1165 = vmatprep.mubr.bf16.mxu0 0
        %1166 = vmatmul.mubr.bf16.gmra.mrb[0].mxu0 %v1058
        %v1167 = vpop.f32.mrb[0].mxu0
        %v1168 = vadd.f32 %v876, %v1167
        %v1169 = vpop.f32.mrb[0].mxu0
        %v1170 = vpop.f32.mrb[0].mxu0
        %v1171 = vadd.f32 %v879, %v1170
        %v1172 = vpop.f32.mrb[0].mxu0
        %1173 = vmatprep.mubr.bf16.mxu0 0
        %1174 = vmatmul.mubr.bf16.gmra.mrb[0].mxu0 %v1061
        %v1175 = vpop.f32.mrb[0].mxu0
        %v1176 = vadd.f32 %v884, %v1175
        %v1177 = vpop.f32.mrb[0].mxu0
        %v1178 = vpop.f32.mrb[0].mxu0
        %v1179 = vadd.f32 %v887, %v1178
        %v1180 = vpop.f32.mrb[0].mxu0
        %1181 = vmatprep.mubr.bf16.mxu0 0
        %1182 = vmatmul.mubr.bf16.gmra.mrb[0].mxu0 %v1064
        %v1183 = vpop.f32.mrb[0].mxu0
        %v1184 = vadd.f32 %v892, %v1183
        %v1185 = vpop.f32.mrb[0].mxu0
        %v1186 = vpop.f32.mrb[0].mxu0
        %v1187 = vadd.f32 %v895, %v1186
        %v1188 = vpop.f32.mrb[0].mxu0
        %1189 = vmatprep.mubr.bf16.mxu0 0
        %1190 = vmatmul.mubr.bf16.gmra.mrb[0].mxu0 %v1067
        %v1191 = vpop.f32.mrb[0].mxu0
        %v1192 = vadd.f32 %v900, %v1191
        %v1193 = vpop.f32.mrb[0].mxu0
        %v1194 = vpop.f32.mrb[0].mxu0
        %v1195 = vadd.f32 %v903, %v1194
        %v1196 = vpop.f32.mrb[0].mxu0
        %1197 = vmatprep.mubr.bf16.mxu0 0
        %1198 = vmatmul.mubr.bf16.gmra.mrb[0].mxu0 %v1070
        %v1199 = vpop.f32.mrb[0].mxu0
        %v1200 = vadd.f32 %v908, %v1199
        %v1201 = vpop.f32.mrb[0].mxu0
        %v1202 = vpop.f32.mrb[0].mxu0
        %v1203 = vadd.f32 %v911, %v1202
        %v1204 = vpop.f32.mrb[0].mxu0
        %1205 = vmatprep.mubr.bf16.mxu0 0
        %1206 = vmatmul.mubr.bf16.gmra.mrb[0].mxu0 %v1073
        %v1207 = vpop.f32.mrb[0].mxu0
        %v1208 = vadd.f32 %v916, %v1207
        %v1209 = vpop.f32.mrb[0].mxu0
        %v1210 = vpop.f32.mrb[0].mxu0
        %v1211 = vadd.f32 %v919, %v1210
        %v1212 = vpop.f32.mrb[0].mxu0
        %1213 = vmatprep.mubr.bf16.mxu0 0
        %1214 = vmatmul.mubr.bf16.gmra.mrb[0].mxu0 %v1076
        %v1215 = vpop.f32.mrb[0].mxu0
        %v1216 = vadd.f32 %v924, %v1215
        %v1217 = vpop.f32.mrb[0].mxu0
        %v1218 = vpop.f32.mrb[0].mxu0
        %v1219 = vadd.f32 %v927, %v1218
        %v1220 = vpop.f32.mrb[0].mxu0
        %1221 = vmatprep.mubr.bf16.mxu0 0
        %1222 = vmatmul.mubr.bf16.gmra.mrb[0].mxu0 %v1079
        %v1223 = vpop.f32.mrb[0].mxu0
        %v1224 = vadd.f32 %v932, %v1223
        %v1225 = vpop.f32.mrb[0].mxu0
        %v1226 = vpop.f32.mrb[0].mxu0
        %v1227 = vadd.f32 %v935, %v1226
        %v1228 = vpop.f32.mrb[0].mxu0
        %1229 = vmatprep.mubr.bf16.mxu0 0
        %1230 = vmatmul.mubr.bf16.gmra.mrb[0].mxu0 %v1082
        %v1231 = vpop.f32.mrb[0].mxu0
        %v1232 = vadd.f32 %v940, %v1231
        %v1233 = vpop.f32.mrb[0].mxu0
        %v1234 = vpop.f32.mrb[0].mxu0
        %v1235 = vadd.f32 %v943, %v1234
        %v1236 = vpop.f32.mrb[0].mxu0
        %1237 = vmatprep.mubr.bf16.mxu0 0
        %1238 = vmatmul.mubr.bf16.gmra.mrb[0].mxu0 %v1085
        %v1239 = vpop.f32.mrb[0].mxu0
        %v1240 = vadd.f32 %v948, %v1239
        %v1241 = vpop.f32.mrb[0].mxu0
        %v1242 = vpop.f32.mrb[0].mxu0
        %v1243 = vadd.f32 %v951, %v1242
        %v1244 = vpop.f32.mrb[0].mxu0
        %1245 = vmatprep.mubr.bf16.mxu0 0
        %1246 = vmatmul.mubr.bf16.gmra.mrb[0].mxu0 %v1088
        %v1247 = vpop.f32.mrb[0].mxu0
        %v1248 = vadd.f32 %v956, %v1247
        %v1249 = vpop.f32.mrb[0].mxu0
        %v1250 = vpop.f32.mrb[0].mxu0
        %v1251 = vadd.f32 %v959, %v1250
        %v1252 = vpop.f32.mrb[0].mxu0
        %1253 = vdwg.mxu0
        %v1254 = vld [vmem:[%s246] sm:$0xe]
        %v1255 = vld [vmem:[%s246 + $0xc] sm:$0xe]
        %v1256 = vld [vmem:[%s246 + $0x18] sm:$0xe]
        %v1257 = vld [vmem:[%s246 + $0x24] sm:$0xe]
        %v1258 = vld [vmem:[%s246 + $0x30] sm:$0xe]
        %v1259 = vld [vmem:[%s246 + $0x3c] sm:$0xe]
        %v1260 = vld [vmem:[%s246 + $0x48] sm:$0xe]
        %v1261 = vld [vmem:[%s246 + $0x54] sm:$0xe]
        %v1262 = vld [vmem:[%s246 + $0x60] sm:$0xe]
        %v1263 = vld [vmem:[%s246 + $0x6c] sm:$0xe]
        %v1264 = vld [vmem:[%s246 + $0x78] sm:$0xe]
        %v1265 = vld [vmem:[%s246 + $0x84] sm:$0xe]
        %v1266 = vld [vmem:[%s246 + $0x90] sm:$0xe]
        %v1267 = vld [vmem:[%s246 + $0x9c] sm:$0xe]
        %v1268 = vld [vmem:[%s246 + $0xa8] sm:$0xe]
        %v1269 = vld [vmem:[%s246 + $0xb4] sm:$0xe]
        %vm1302 = vcmask 1042432
        %vm1303 = vcmask 1046532
        %vm1304 = vmor %vm1302, %vm1303
        %v1305 = vrot.slane %v1254, 5
        %v1306 = vrot.slane %v1305, 4
        %v1307 = vrot.slane %v260, 5
        %v1308 = vsel %vm1304, %v1306, %v1307
        %v1309 = vrot.slane %v1307, 4
        %v1310 = vrot.slane %v292, 5
        %v1311 = vsel %vm1304, %v1309, %v1310
        %v1312 = vrot.slane %v1255, 5
        %v1313 = vrot.slane %v1312, 4
        %v1314 = vrot.slane %v262, 5
        %v1315 = vsel %vm1304, %v1313, %v1314
        %v1316 = vrot.slane %v1314, 4
        %v1317 = vrot.slane %v293, 5
        %v1318 = vsel %vm1304, %v1316, %v1317
        %v1319 = vrot.slane %v1256, 5
        %v1320 = vrot.slane %v1319, 4
        %v1321 = vrot.slane %v264, 5
        %v1322 = vsel %vm1304, %v1320, %v1321
        %v1323 = vrot.slane %v1321, 4
        %v1324 = vrot.slane %v294, 5
        %v1325 = vsel %vm1304, %v1323, %v1324
        %v1326 = vrot.slane %v1257, 5
        %v1327 = vrot.slane %v1326, 4
        %v1328 = vrot.slane %v266, 5
        %v1329 = vsel %vm1304, %v1327, %v1328
        %v1330 = vrot.slane %v1328, 4
        %v1331 = vrot.slane %v295, 5
        %v1332 = vsel %vm1304, %v1330, %v1331
        %v1333 = vrot.slane %v1258, 5
        %v1334 = vrot.slane %v1333, 4
        %v1335 = vrot.slane %v268, 5
        %v1336 = vsel %vm1304, %v1334, %v1335
        %v1337 = vrot.slane %v1335, 4
        %v1338 = vrot.slane %v296, 5
        %v1339 = vsel %vm1304, %v1337, %v1338
        %v1340 = vrot.slane %v1259, 5
        %v1341 = vrot.slane %v1340, 4
        %v1342 = vrot.slane %v270, 5
        %v1343 = vsel %vm1304, %v1341, %v1342
        %v1344 = vrot.slane %v1342, 4
        %v1345 = vrot.slane %v297, 5
        %v1346 = vsel %vm1304, %v1344, %v1345
        %v1347 = vrot.slane %v1260, 5
        %v1348 = vrot.slane %v1347, 4
        %v1349 = vrot.slane %v272, 5
        %v1350 = vsel %vm1304, %v1348, %v1349
        %v1351 = vrot.slane %v1349, 4
        %v1352 = vrot.slane %v298, 5
        %v1353 = vsel %vm1304, %v1351, %v1352
        %v1354 = vrot.slane %v1261, 5
        %v1355 = vrot.slane %v1354, 4
        %v1356 = vrot.slane %v274, 5
        %v1357 = vsel %vm1304, %v1355, %v1356
        %v1358 = vrot.slane %v1356, 4
        %v1359 = vrot.slane %v299, 5
        %v1360 = vsel %vm1304, %v1358, %v1359
        %v1361 = vrot.slane %v1262, 5
        %v1362 = vrot.slane %v1361, 4
        %v1363 = vrot.slane %v276, 5
        %v1364 = vsel %vm1304, %v1362, %v1363
        %v1365 = vrot.slane %v1363, 4
        %v1366 = vrot.slane %v300, 5
        %v1367 = vsel %vm1304, %v1365, %v1366
        %v1368 = vrot.slane %v1263, 5
        %v1369 = vrot.slane %v1368, 4
        %v1370 = vrot.slane %v278, 5
        %v1371 = vsel %vm1304, %v1369, %v1370
        %v1372 = vrot.slane %v1370, 4
        %v1373 = vrot.slane %v301, 5
        %v1374 = vsel %vm1304, %v1372, %v1373
        %v1375 = vrot.slane %v1264, 5
        %v1376 = vrot.slane %v1375, 4
        %v1377 = vrot.slane %v280, 5
        %v1378 = vsel %vm1304, %v1376, %v1377
        %v1379 = vrot.slane %v1377, 4
        %v1380 = vrot.slane %v302, 5
        %v1381 = vsel %vm1304, %v1379, %v1380
        %v1382 = vrot.slane %v1265, 5
        %v1383 = vrot.slane %v1382, 4
        %v1384 = vrot.slane %v282, 5
        %v1385 = vsel %vm1304, %v1383, %v1384
        %v1386 = vrot.slane %v1384, 4
        %v1387 = vrot.slane %v303, 5
        %v1388 = vsel %vm1304, %v1386, %v1387
        %v1389 = vrot.slane %v1266, 5
        %v1390 = vrot.slane %v1389, 4
        %v1391 = vrot.slane %v284, 5
        %v1392 = vsel %vm1304, %v1390, %v1391
        %v1393 = vrot.slane %v1391, 4
        %v1394 = vrot.slane %v304, 5
        %v1395 = vsel %vm1304, %v1393, %v1394
        %v1396 = vrot.slane %v1267, 5
        %v1397 = vrot.slane %v1396, 4
        %v1398 = vrot.slane %v286, 5
        %v1399 = vsel %vm1304, %v1397, %v1398
        %v1400 = vrot.slane %v1398, 4
        %v1401 = vrot.slane %v305, 5
        %v1402 = vsel %vm1304, %v1400, %v1401
        %v1403 = vrot.slane %v1268, 5
        %v1404 = vrot.slane %v1403, 4
        %v1405 = vrot.slane %v288, 5
        %v1406 = vsel %vm1304, %v1404, %v1405
        %v1407 = vrot.slane %v1405, 4
        %v1408 = vrot.slane %v306, 5
        %v1409 = vsel %vm1304, %v1407, %v1408
        %v1410 = vrot.slane %v1269, 5
        %v1411 = vrot.slane %v1410, 4
        %v1412 = vrot.slane %v290, 5
        %v1413 = vsel %vm1304, %v1411, %v1412
        %v1414 = vrot.slane %v1412, 4
        %v1415 = vrot.slane %v307, 5
        %v1416 = vsel %vm1304, %v1414, %v1415
        %s1417 = scalar_lea.vmem %s251, 4
        %v1418 = vld [vmem:[%s1417] sm:$0x3]
        %v1419 = vunpack.c.l.b16 %v1308
        %v1420 = vunpack.c.l.b16 %v1311
        %v1421 = vunpack.c.l.b16 %v1315
        %v1422 = vunpack.c.l.b16 %v1318
        %v1423 = vunpack.c.l.b16 %v1322
        %v1424 = vunpack.c.l.b16 %v1325
        %v1425 = vunpack.c.l.b16 %v1329
        %v1426 = vunpack.c.l.b16 %v1332
        %v1427 = vunpack.c.l.b16 %v1336
        %v1428 = vunpack.c.l.b16 %v1339
        %v1429 = vunpack.c.l.b16 %v1343
        %v1430 = vunpack.c.l.b16 %v1346
        %v1431 = vunpack.c.l.b16 %v1350
        %v1432 = vunpack.c.l.b16 %v1353
        %v1433 = vunpack.c.l.b16 %v1357
        %v1434 = vunpack.c.l.b16 %v1360
        %v1435 = vunpack.c.l.b16 %v1364
        %v1436 = vunpack.c.l.b16 %v1367
        %v1437 = vunpack.c.l.b16 %v1371
        %v1438 = vunpack.c.l.b16 %v1374
        %v1439 = vunpack.c.l.b16 %v1378
        %v1440 = vunpack.c.l.b16 %v1381
        %v1441 = vunpack.c.l.b16 %v1385
        %v1442 = vunpack.c.l.b16 %v1388
        %v1443 = vunpack.c.l.b16 %v1392
        %v1444 = vunpack.c.l.b16 %v1395
        %v1445 = vunpack.c.l.b16 %v1399
        %v1446 = vunpack.c.l.b16 %v1402
        %v1447 = vunpack.c.l.b16 %v1406
        %v1448 = vunpack.c.l.b16 %v1409
        %v1449 = vunpack.c.l.b16 %v1413
        %v1450 = vunpack.c.l.b16 %v1416
        %v1451 = vpack.c.b16 %v1420, %v1419
        %v1452 = vpack.c.b16 %v1422, %v1421
        %v1453 = vpack.c.b16 %v1424, %v1423
        %v1454 = vpack.c.b16 %v1426, %v1425
        %v1455 = vpack.c.b16 %v1428, %v1427
        %v1456 = vpack.c.b16 %v1430, %v1429
        %v1457 = vpack.c.b16 %v1432, %v1431
        %v1458 = vpack.c.b16 %v1434, %v1433
        %v1459 = vpack.c.b16 %v1436, %v1435
        %v1460 = vpack.c.b16 %v1438, %v1437
        %v1461 = vpack.c.b16 %v1440, %v1439
        %v1462 = vpack.c.b16 %v1442, %v1441
        %v1463 = vpack.c.b16 %v1444, %v1443
        %v1464 = vpack.c.b16 %v1446, %v1445
        %v1465 = vpack.c.b16 %v1448, %v1447
        %v1466 = vpack.c.b16 %v1450, %v1449
        %v1468 = vsel %vm745, %v1451, 0
        %v1471 = vsel %vm745, %v1452, 0
        %v1474 = vsel %vm745, %v1453, 0
        %v1477 = vsel %vm745, %v1454, 0
        %v1480 = vsel %vm745, %v1455, 0
        %v1483 = vsel %vm745, %v1456, 0
        %v1486 = vsel %vm745, %v1457, 0
        %v1489 = vsel %vm745, %v1458, 0
        %v1492 = vsel %vm745, %v1459, 0
        %v1495 = vsel %vm745, %v1460, 0
        %v1498 = vsel %vm745, %v1461, 0
        %v1501 = vsel %vm745, %v1462, 0
        %v1504 = vsel %vm745, %v1463, 0
        %v1507 = vsel %vm745, %v1464, 0
        %v1510 = vsel %vm745, %v1465, 0
        %v1513 = vsel %vm745, %v1466, 0
        %v1516 = vand.u32 %v1418, %v797
        %1518 = vmatprep.subr.bf16.mxu0 0
        %1519 = vmatpush1.bf16.msra.mxu0 %v1516
        %1520 = vmatprep.subr.bf16.mxu0 0
        %1521 = vmatpush1.bf16.msra.mxu0 0
        %1522 = vmatprep.subr.bf16.mxu0 0
        %1523 = vmatpush1.bf16.msra.mxu0 0
        %1524 = vmatprep.subr.bf16.mxu0 0
        %1525 = vmatpush1.bf16.msra.mxu0 0
        %1526 = vmatprep.subr.bf16.mxu0 0
        %1527 = vmatpush1.bf16.msra.mxu0 0
        %1528 = vmatprep.subr.bf16.mxu0 0
        %1529 = vmatpush1.bf16.msra.mxu0 0
        %1530 = vmatprep.subr.bf16.mxu0 0
        %1531 = vmatpush1.bf16.msra.mxu0 0
        %1532 = vmatprep.subr.bf16.mxu0 0
        %1533 = vmatpush1.bf16.msra.mxu0 0
        %1534 = vmatprep.subr.bf16.mxu0 0
        %1535 = vmatpush1.bf16.msra.mxu0 0
        %1536 = vmatprep.subr.bf16.mxu0 0
        %1537 = vmatpush1.bf16.msra.mxu0 0
        %1538 = vmatprep.subr.bf16.mxu0 0
        %1539 = vmatpush1.bf16.msra.mxu0 0
        %1540 = vmatprep.subr.bf16.mxu0 0
        %1541 = vmatpush1.bf16.msra.mxu0 0
        %1542 = vmatprep.subr.bf16.mxu0 0
        %1543 = vmatpush1.bf16.msra.mxu0 0
        %1544 = vmatprep.subr.bf16.mxu0 0
        %1545 = vmatpush1.bf16.msra.mxu0 0
        %1546 = vmatprep.subr.bf16.mxu0 0
        %1547 = vmatpush1.bf16.msra.mxu0 0
        %1548 = vmatprep.subr.bf16.mxu0 0
        %1549 = vmatpush1.bf16.msra.mxu0 0
        %1550 = vmatprep.mubr.bf16.mxu0 0
        %1551 = vmatmul.mubr.bf16.gmra.mrb[0].mxu0 %v1468
        %v1552 = vpop.f32.mrb[0].mxu0
        %v1553 = vadd.f32 0.0, %v1552
        %v1554 = vpop.f32.mrb[0].mxu0
        %v1555 = vpop.f32.mrb[0].mxu0
        %v1556 = vadd.f32 0.0, %v1555
        %v1557 = vpop.f32.mrb[0].mxu0
        %1558 = vmatprep.mubr.bf16.mxu0 0
        %1559 = vmatmul.mubr.bf16.gmra.mrb[0].mxu0 %v1471
        %v1560 = vpop.f32.mrb[0].mxu0
        %v1561 = vadd.f32 0.0, %v1560
        %v1562 = vpop.f32.mrb[0].mxu0
        %v1563 = vpop.f32.mrb[0].mxu0
        %v1564 = vadd.f32 0.0, %v1563
        %v1565 = vpop.f32.mrb[0].mxu0
        %1566 = vmatprep.mubr.bf16.mxu0 0
        %1567 = vmatmul.mubr.bf16.gmra.mrb[0].mxu0 %v1474
        %v1568 = vpop.f32.mrb[0].mxu0
        %v1569 = vadd.f32 0.0, %v1568
        %v1570 = vpop.f32.mrb[0].mxu0
        %v1571 = vpop.f32.mrb[0].mxu0
        %v1572 = vadd.f32 0.0, %v1571
        %v1573 = vpop.f32.mrb[0].mxu0
        %1574 = vmatprep.mubr.bf16.mxu0 0
        %1575 = vmatmul.mubr.bf16.gmra.mrb[0].mxu0 %v1477
        %v1576 = vpop.f32.mrb[0].mxu0
        %v1577 = vadd.f32 0.0, %v1576
        %v1578 = vpop.f32.mrb[0].mxu0
        %v1579 = vpop.f32.mrb[0].mxu0
        %v1580 = vadd.f32 0.0, %v1579
        %v1581 = vpop.f32.mrb[0].mxu0
        %1582 = vmatprep.mubr.bf16.mxu0 0
        %1583 = vmatmul.mubr.bf16.gmra.mrb[0].mxu0 %v1480
        %v1584 = vpop.f32.mrb[0].mxu0
        %v1585 = vadd.f32 0.0, %v1584
        %v1586 = vpop.f32.mrb[0].mxu0
        %v1587 = vpop.f32.mrb[0].mxu0
        %v1588 = vadd.f32 0.0, %v1587
        %v1589 = vpop.f32.mrb[0].mxu0
        %1590 = vmatprep.mubr.bf16.mxu0 0
        %1591 = vmatmul.mubr.bf16.gmra.mrb[0].mxu0 %v1483
        %v1592 = vpop.f32.mrb[0].mxu0
        %v1593 = vadd.f32 0.0, %v1592
        %v1594 = vpop.f32.mrb[0].mxu0
        %v1595 = vpop.f32.mrb[0].mxu0
        %v1596 = vadd.f32 0.0, %v1595
        %v1597 = vpop.f32.mrb[0].mxu0
        %1598 = vmatprep.mubr.bf16.mxu0 0
        %1599 = vmatmul.mubr.bf16.gmra.mrb[0].mxu0 %v1486
        %v1600 = vpop.f32.mrb[0].mxu0
        %v1601 = vadd.f32 0.0, %v1600
        %v1602 = vpop.f32.mrb[0].mxu0
        %v1603 = vpop.f32.mrb[0].mxu0
        %v1604 = vadd.f32 0.0, %v1603
        %v1605 = vpop.f32.mrb[0].mxu0
        %1606 = vmatprep.mubr.bf16.mxu0 0
        %1607 = vmatmul.mubr.bf16.gmra.mrb[0].mxu0 %v1489
        %v1608 = vpop.f32.mrb[0].mxu0
        %v1609 = vadd.f32 0.0, %v1608
        %v1610 = vpop.f32.mrb[0].mxu0
        %v1611 = vpop.f32.mrb[0].mxu0
        %v1612 = vadd.f32 0.0, %v1611
        %v1613 = vpop.f32.mrb[0].mxu0
        %1614 = vmatprep.mubr.bf16.mxu0 0
        %1615 = vmatmul.mubr.bf16.gmra.mrb[0].mxu0 %v1492
        %v1616 = vpop.f32.mrb[0].mxu0
        %v1617 = vadd.f32 0.0, %v1616
        %v1618 = vpop.f32.mrb[0].mxu0
        %v1619 = vpop.f32.mrb[0].mxu0
        %v1620 = vadd.f32 0.0, %v1619
        %v1621 = vpop.f32.mrb[0].mxu0
        %1622 = vmatprep.mubr.bf16.mxu0 0
        %1623 = vmatmul.mubr.bf16.gmra.mrb[0].mxu0 %v1495
        %v1624 = vpop.f32.mrb[0].mxu0
        %v1625 = vadd.f32 0.0, %v1624
        %v1626 = vpop.f32.mrb[0].mxu0
        %v1627 = vpop.f32.mrb[0].mxu0
        %v1628 = vadd.f32 0.0, %v1627
        %v1629 = vpop.f32.mrb[0].mxu0
        %1630 = vmatprep.mubr.bf16.mxu0 0
        %1631 = vmatmul.mubr.bf16.gmra.mrb[0].mxu0 %v1498
        %v1632 = vpop.f32.mrb[0].mxu0
        %v1633 = vadd.f32 0.0, %v1632
        %v1634 = vpop.f32.mrb[0].mxu0
        %v1635 = vpop.f32.mrb[0].mxu0
        %v1636 = vadd.f32 0.0, %v1635
        %v1637 = vpop.f32.mrb[0].mxu0
        %1638 = vmatprep.mubr.bf16.mxu0 0
        %1639 = vmatmul.mubr.bf16.gmra.mrb[0].mxu0 %v1501
        %v1640 = vpop.f32.mrb[0].mxu0
        %v1641 = vadd.f32 0.0, %v1640
        %v1642 = vpop.f32.mrb[0].mxu0
        %v1643 = vpop.f32.mrb[0].mxu0
        %v1644 = vadd.f32 0.0, %v1643
        %v1645 = vpop.f32.mrb[0].mxu0
        %1646 = vmatprep.mubr.bf16.mxu0 0
        %1647 = vmatmul.mubr.bf16.gmra.mrb[0].mxu0 %v1504
        %v1648 = vpop.f32.mrb[0].mxu0
        %v1649 = vadd.f32 0.0, %v1648
        %v1650 = vpop.f32.mrb[0].mxu0
        %v1651 = vpop.f32.mrb[0].mxu0
        %v1652 = vadd.f32 0.0, %v1651
        %v1653 = vpop.f32.mrb[0].mxu0
        %1654 = vmatprep.mubr.bf16.mxu0 0
        %1655 = vmatmul.mubr.bf16.gmra.mrb[0].mxu0 %v1507
        %v1656 = vpop.f32.mrb[0].mxu0
        %v1657 = vadd.f32 0.0, %v1656
        %v1658 = vpop.f32.mrb[0].mxu0
        %v1659 = vpop.f32.mrb[0].mxu0
        %v1660 = vadd.f32 0.0, %v1659
        %v1661 = vpop.f32.mrb[0].mxu0
        %1662 = vmatprep.mubr.bf16.mxu0 0
        %1663 = vmatmul.mubr.bf16.gmra.mrb[0].mxu0 %v1510
        %v1664 = vpop.f32.mrb[0].mxu0
        %v1665 = vadd.f32 0.0, %v1664
        %v1666 = vpop.f32.mrb[0].mxu0
        %v1667 = vpop.f32.mrb[0].mxu0
        %v1668 = vadd.f32 0.0, %v1667
        %v1669 = vpop.f32.mrb[0].mxu0
        %1670 = vmatprep.mubr.bf16.mxu0 0
        %1671 = vmatmul.mubr.bf16.gmra.mrb[0].mxu0 %v1513
        %v1672 = vpop.f32.mrb[0].mxu0
        %v1673 = vadd.f32 0.0, %v1672
        %v1674 = vpop.f32.mrb[0].mxu0
        %v1675 = vpop.f32.mrb[0].mxu0
        %v1676 = vadd.f32 0.0, %v1675
        %v1677 = vpop.f32.mrb[0].mxu0
        %1678 = vdwg.mxu0
        %v1679 = vadd.f32 %v1128, %v1553
        %v1680 = vadd.f32 %v1131, %v1556
        %v1681 = vadd.f32 %v1136, %v1561
        %v1682 = vadd.f32 %v1139, %v1564
        %v1683 = vadd.f32 %v1144, %v1569
        %v1684 = vadd.f32 %v1147, %v1572
        %v1685 = vadd.f32 %v1152, %v1577
        %v1686 = vadd.f32 %v1155, %v1580
        %v1687 = vadd.f32 %v1160, %v1585
        %v1688 = vadd.f32 %v1163, %v1588
        %v1689 = vadd.f32 %v1168, %v1593
        %v1690 = vadd.f32 %v1171, %v1596
        %v1691 = vadd.f32 %v1176, %v1601
        %v1692 = vadd.f32 %v1179, %v1604
        %v1693 = vadd.f32 %v1184, %v1609
        %v1694 = vadd.f32 %v1187, %v1612
        %v1695 = vadd.f32 %v1192, %v1617
        %v1696 = vadd.f32 %v1195, %v1620
        %v1697 = vadd.f32 %v1200, %v1625
        %v1698 = vadd.f32 %v1203, %v1628
        %v1699 = vadd.f32 %v1208, %v1633
        %v1700 = vadd.f32 %v1211, %v1636
        %v1701 = vadd.f32 %v1216, %v1641
        %v1702 = vadd.f32 %v1219, %v1644
        %v1703 = vadd.f32 %v1224, %v1649
        %v1704 = vadd.f32 %v1227, %v1652
        %v1705 = vadd.f32 %v1232, %v1657
        %v1706 = vadd.f32 %v1235, %v1660
        %v1707 = vadd.f32 %v1240, %v1665
        %v1708 = vadd.f32 %v1243, %v1668
        %v1709 = vadd.f32 %v1248, %v1673
        %v1710 = vadd.f32 %v1251, %v1676
        %s1711 = scalar_lea.vmem %s246, 12
        %v1712 = vld [vmem:[%s1711] sm:$0xf]
        %v1713 = vld [vmem:[%s1711 + $0x4] sm:$0xf]
        %v1714 = vld [vmem:[%s1711 + $0xc] sm:$0xf]
        %v1715 = vld [vmem:[%s1711 + $0x10] sm:$0xf]
        %v1716 = vld [vmem:[%s1711 + $0x18] sm:$0xf]
        %v1717 = vld [vmem:[%s1711 + $0x1c] sm:$0xf]
        %v1718 = vld [vmem:[%s1711 + $0x24] sm:$0xf]
        %v1719 = vld [vmem:[%s1711 + $0x28] sm:$0xf]
        %v1720 = vld [vmem:[%s1711 + $0x30] sm:$0xf]
        %v1721 = vld [vmem:[%s1711 + $0x34] sm:$0xf]
        %v1722 = vld [vmem:[%s1711 + $0x3c] sm:$0xf]
        %v1723 = vld [vmem:[%s1711 + $0x40] sm:$0xf]
        %v1724 = vld [vmem:[%s1711 + $0x48] sm:$0xf]
        %v1725 = vld [vmem:[%s1711 + $0x4c] sm:$0xf]
        %v1726 = vld [vmem:[%s1711 + $0x54] sm:$0xf]
        %v1727 = vld [vmem:[%s1711 + $0x58] sm:$0xf]
        %v1728 = vld [vmem:[%s1711 + $0x60] sm:$0xf]
        %v1729 = vld [vmem:[%s1711 + $0x64] sm:$0xf]
        %v1730 = vld [vmem:[%s1711 + $0x6c] sm:$0xf]
        %v1731 = vld [vmem:[%s1711 + $0x70] sm:$0xf]
        %v1732 = vld [vmem:[%s1711 + $0x78] sm:$0xf]
        %v1733 = vld [vmem:[%s1711 + $0x7c] sm:$0xf]
        %v1734 = vld [vmem:[%s1711 + $0x84] sm:$0xf]
        %v1735 = vld [vmem:[%s1711 + $0x88] sm:$0xf]
        %v1736 = vld [vmem:[%s1711 + $0x90] sm:$0xf]
        %v1737 = vld [vmem:[%s1711 + $0x94] sm:$0xf]
        %v1738 = vld [vmem:[%s1711 + $0x9c] sm:$0xf]
        %v1739 = vld [vmem:[%s1711 + $0xa0] sm:$0xf]
        %v1740 = vld [vmem:[%s1711 + $0xa8] sm:$0xf]
        %v1741 = vld [vmem:[%s1711 + $0xac] sm:$0xf]
        %v1742 = vld [vmem:[%s1711 + $0xb4] sm:$0xf]
        %v1743 = vld [vmem:[%s1711 + $0xb8] sm:$0xf]
        %s1744 = scalar_lea.vmem %s251, 6
        %v1745 = vld [vmem:[%s1744] sm:$0x3]
        %v1778 = vunpack.c.l.b16 %v1712
        %v1779 = vunpack.c.l.b16 %v1713
        %v1780 = vunpack.c.l.b16 %v1714
        %v1781 = vunpack.c.l.b16 %v1715
        %v1782 = vunpack.c.l.b16 %v1716
        %v1783 = vunpack.c.l.b16 %v1717
        %v1784 = vunpack.c.l.b16 %v1718
        %v1785 = vunpack.c.l.b16 %v1719
        %v1786 = vunpack.c.l.b16 %v1720
        %v1787 = vunpack.c.l.b16 %v1721
        %v1788 = vunpack.c.l.b16 %v1722
        %v1789 = vunpack.c.l.b16 %v1723
        %v1790 = vunpack.c.l.b16 %v1724
        %v1791 = vunpack.c.l.b16 %v1725
        %v1792 = vunpack.c.l.b16 %v1726
        %v1793 = vunpack.c.l.b16 %v1727
        %v1794 = vunpack.c.l.b16 %v1728
        %v1795 = vunpack.c.l.b16 %v1729
        %v1796 = vunpack.c.l.b16 %v1730
        %v1797 = vunpack.c.l.b16 %v1731
        %v1798 = vunpack.c.l.b16 %v1732
        %v1799 = vunpack.c.l.b16 %v1733
        %v1800 = vunpack.c.l.b16 %v1734
        %v1801 = vunpack.c.l.b16 %v1735
        %v1802 = vunpack.c.l.b16 %v1736
        %v1803 = vunpack.c.l.b16 %v1737
        %v1804 = vunpack.c.l.b16 %v1738
        %v1805 = vunpack.c.l.b16 %v1739
        %v1806 = vunpack.c.l.b16 %v1740
        %v1807 = vunpack.c.l.b16 %v1741
        %v1808 = vunpack.c.l.b16 %v1742
        %v1809 = vunpack.c.l.b16 %v1743
        %v1810 = vpack.c.b16 %v1779, %v1778
        %v1811 = vpack.c.b16 %v1781, %v1780
        %v1812 = vpack.c.b16 %v1783, %v1782
        %v1813 = vpack.c.b16 %v1785, %v1784
        %v1814 = vpack.c.b16 %v1787, %v1786
        %v1815 = vpack.c.b16 %v1789, %v1788
        %v1816 = vpack.c.b16 %v1791, %v1790
        %v1817 = vpack.c.b16 %v1793, %v1792
        %v1818 = vpack.c.b16 %v1795, %v1794
        %v1819 = vpack.c.b16 %v1797, %v1796
        %v1820 = vpack.c.b16 %v1799, %v1798
        %v1821 = vpack.c.b16 %v1801, %v1800
        %v1822 = vpack.c.b16 %v1803, %v1802
        %v1823 = vpack.c.b16 %v1805, %v1804
        %v1824 = vpack.c.b16 %v1807, %v1806
        %v1825 = vpack.c.b16 %v1809, %v1808
        %v1827 = vsel %vm745, %v1810, 0
        %v1830 = vsel %vm745, %v1811, 0
        %v1833 = vsel %vm745, %v1812, 0
        %v1836 = vsel %vm745, %v1813, 0
        %v1839 = vsel %vm745, %v1814, 0
        %v1842 = vsel %vm745, %v1815, 0
        %v1845 = vsel %vm745, %v1816, 0
        %v1848 = vsel %vm745, %v1817, 0
        %v1851 = vsel %vm745, %v1818, 0
        %v1854 = vsel %vm745, %v1819, 0
        %v1857 = vsel %vm745, %v1820, 0
        %v1860 = vsel %vm745, %v1821, 0
        %v1863 = vsel %vm745, %v1822, 0
        %v1866 = vsel %vm745, %v1823, 0
        %v1869 = vsel %vm745, %v1824, 0
        %v1872 = vsel %vm745, %v1825, 0
        %v1875 = vand.u32 %v1745, %v797
        %1877 = vmatprep.subr.bf16.mxu0 0
        %1878 = vmatpush1.bf16.msra.mxu0 %v1875
        %1879 = vmatprep.subr.bf16.mxu0 0
        %1880 = vmatpush1.bf16.msra.mxu0 0
        %1881 = vmatprep.subr.bf16.mxu0 0
        %1882 = vmatpush1.bf16.msra.mxu0 0
        %1883 = vmatprep.subr.bf16.mxu0 0
        %1884 = vmatpush1.bf16.msra.mxu0 0
        %1885 = vmatprep.subr.bf16.mxu0 0
        %1886 = vmatpush1.bf16.msra.mxu0 0
        %1887 = vmatprep.subr.bf16.mxu0 0
        %1888 = vmatpush1.bf16.msra.mxu0 0
        %1889 = vmatprep.subr.bf16.mxu0 0
        %1890 = vmatpush1.bf16.msra.mxu0 0
        %1891 = vmatprep.subr.bf16.mxu0 0
        %1892 = vmatpush1.bf16.msra.mxu0 0
        %1893 = vmatprep.subr.bf16.mxu0 0
        %1894 = vmatpush1.bf16.msra.mxu0 0
        %1895 = vmatprep.subr.bf16.mxu0 0
        %1896 = vmatpush1.bf16.msra.mxu0 0
        %1897 = vmatprep.subr.bf16.mxu0 0
        %1898 = vmatpush1.bf16.msra.mxu0 0
        %1899 = vmatprep.subr.bf16.mxu0 0
        %1900 = vmatpush1.bf16.msra.mxu0 0
        %1901 = vmatprep.subr.bf16.mxu0 0
        %1902 = vmatpush1.bf16.msra.mxu0 0
        %1903 = vmatprep.subr.bf16.mxu0 0
        %1904 = vmatpush1.bf16.msra.mxu0 0
        %1905 = vmatprep.subr.bf16.mxu0 0
        %1906 = vmatpush1.bf16.msra.mxu0 0
        %1907 = vmatprep.subr.bf16.mxu0 0
        %1908 = vmatpush1.bf16.msra.mxu0 0
        %1909 = vmatprep.mubr.bf16.mxu0 0
        %1910 = vmatmul.mubr.bf16.gmra.mrb[0].mxu0 %v1827
        %v1911 = vpop.f32.mrb[0].mxu0
        %v1912 = vadd.f32 0.0, %v1911
        %v1913 = vpop.f32.mrb[0].mxu0
        %v1914 = vpop.f32.mrb[0].mxu0
        %v1915 = vadd.f32 0.0, %v1914
        %v1916 = vpop.f32.mrb[0].mxu0
        %1917 = vmatprep.mubr.bf16.mxu0 0
        %1918 = vmatmul.mubr.bf16.gmra.mrb[0].mxu0 %v1830
        %v1919 = vpop.f32.mrb[0].mxu0
        %v1920 = vadd.f32 0.0, %v1919
        %v1921 = vpop.f32.mrb[0].mxu0
        %v1922 = vpop.f32.mrb[0].mxu0
        %v1923 = vadd.f32 0.0, %v1922
        %v1924 = vpop.f32.mrb[0].mxu0
        %1925 = vmatprep.mubr.bf16.mxu0 0
        %1926 = vmatmul.mubr.bf16.gmra.mrb[0].mxu0 %v1833
        %v1927 = vpop.f32.mrb[0].mxu0
        %v1928 = vadd.f32 0.0, %v1927
        %v1929 = vpop.f32.mrb[0].mxu0
        %v1930 = vpop.f32.mrb[0].mxu0
        %v1931 = vadd.f32 0.0, %v1930
        %v1932 = vpop.f32.mrb[0].mxu0
        %1933 = vmatprep.mubr.bf16.mxu0 0
        %1934 = vmatmul.mubr.bf16.gmra.mrb[0].mxu0 %v1836
        %v1935 = vpop.f32.mrb[0].mxu0
        %v1936 = vadd.f32 0.0, %v1935
        %v1937 = vpop.f32.mrb[0].mxu0
        %v1938 = vpop.f32.mrb[0].mxu0
        %v1939 = vadd.f32 0.0, %v1938
        %v1940 = vpop.f32.mrb[0].mxu0
        %1941 = vmatprep.mubr.bf16.mxu0 0
        %1942 = vmatmul.mubr.bf16.gmra.mrb[0].mxu0 %v1839
        %v1943 = vpop.f32.mrb[0].mxu0
        %v1944 = vadd.f32 0.0, %v1943
        %v1945 = vpop.f32.mrb[0].mxu0
        %v1946 = vpop.f32.mrb[0].mxu0
        %v1947 = vadd.f32 0.0, %v1946
        %v1948 = vpop.f32.mrb[0].mxu0
        %1949 = vmatprep.mubr.bf16.mxu0 0
        %1950 = vmatmul.mubr.bf16.gmra.mrb[0].mxu0 %v1842
        %v1951 = vpop.f32.mrb[0].mxu0
        %v1952 = vadd.f32 0.0, %v1951
        %v1953 = vpop.f32.mrb[0].mxu0
        %v1954 = vpop.f32.mrb[0].mxu0
        %v1955 = vadd.f32 0.0, %v1954
        %v1956 = vpop.f32.mrb[0].mxu0
        %1957 = vmatprep.mubr.bf16.mxu0 0
        %1958 = vmatmul.mubr.bf16.gmra.mrb[0].mxu0 %v1845
        %v1959 = vpop.f32.mrb[0].mxu0
        %v1960 = vadd.f32 0.0, %v1959
        %v1961 = vpop.f32.mrb[0].mxu0
        %v1962 = vpop.f32.mrb[0].mxu0
        %v1963 = vadd.f32 0.0, %v1962
        %v1964 = vpop.f32.mrb[0].mxu0
        %1965 = vmatprep.mubr.bf16.mxu0 0
        %1966 = vmatmul.mubr.bf16.gmra.mrb[0].mxu0 %v1848
        %v1967 = vpop.f32.mrb[0].mxu0
        %v1968 = vadd.f32 0.0, %v1967
        %v1969 = vpop.f32.mrb[0].mxu0
        %v1970 = vpop.f32.mrb[0].mxu0
        %v1971 = vadd.f32 0.0, %v1970
        %v1972 = vpop.f32.mrb[0].mxu0
        %1973 = vmatprep.mubr.bf16.mxu0 0
        %1974 = vmatmul.mubr.bf16.gmra.mrb[0].mxu0 %v1851
        %v1975 = vpop.f32.mrb[0].mxu0
        %v1976 = vadd.f32 0.0, %v1975
        %v1977 = vpop.f32.mrb[0].mxu0
        %v1978 = vpop.f32.mrb[0].mxu0
        %v1979 = vadd.f32 0.0, %v1978
        %v1980 = vpop.f32.mrb[0].mxu0
        %1981 = vmatprep.mubr.bf16.mxu0 0
        %1982 = vmatmul.mubr.bf16.gmra.mrb[0].mxu0 %v1854
        %v1983 = vpop.f32.mrb[0].mxu0
        %v1984 = vadd.f32 0.0, %v1983
        %v1985 = vpop.f32.mrb[0].mxu0
        %v1986 = vpop.f32.mrb[0].mxu0
        %v1987 = vadd.f32 0.0, %v1986
        %v1988 = vpop.f32.mrb[0].mxu0
        %1989 = vmatprep.mubr.bf16.mxu0 0
        %1990 = vmatmul.mubr.bf16.gmra.mrb[0].mxu0 %v1857
        %v1991 = vpop.f32.mrb[0].mxu0
        %v1992 = vadd.f32 0.0, %v1991
        %v1993 = vpop.f32.mrb[0].mxu0
        %v1994 = vpop.f32.mrb[0].mxu0
        %v1995 = vadd.f32 0.0, %v1994
        %v1996 = vpop.f32.mrb[0].mxu0
        %1997 = vmatprep.mubr.bf16.mxu0 0
        %1998 = vmatmul.mubr.bf16.gmra.mrb[0].mxu0 %v1860
        %v1999 = vpop.f32.mrb[0].mxu0
        %v2000 = vadd.f32 0.0, %v1999
        %v2001 = vpop.f32.mrb[0].mxu0
        %v2002 = vpop.f32.mrb[0].mxu0
        %v2003 = vadd.f32 0.0, %v2002
        %v2004 = vpop.f32.mrb[0].mxu0
        %2005 = vmatprep.mubr.bf16.mxu0 0
        %2006 = vmatmul.mubr.bf16.gmra.mrb[0].mxu0 %v1863
        %v2007 = vpop.f32.mrb[0].mxu0
        %v2008 = vadd.f32 0.0, %v2007
        %v2009 = vpop.f32.mrb[0].mxu0
        %v2010 = vpop.f32.mrb[0].mxu0
        %v2011 = vadd.f32 0.0, %v2010
        %v2012 = vpop.f32.mrb[0].mxu0
        %2013 = vmatprep.mubr.bf16.mxu0 0
        %2014 = vmatmul.mubr.bf16.gmra.mrb[0].mxu0 %v1866
        %v2015 = vpop.f32.mrb[0].mxu0
        %v2016 = vadd.f32 0.0, %v2015
        %v2017 = vpop.f32.mrb[0].mxu0
        %v2018 = vpop.f32.mrb[0].mxu0
        %v2019 = vadd.f32 0.0, %v2018
        %v2020 = vpop.f32.mrb[0].mxu0
        %2021 = vmatprep.mubr.bf16.mxu0 0
        %2022 = vmatmul.mubr.bf16.gmra.mrb[0].mxu0 %v1869
        %v2023 = vpop.f32.mrb[0].mxu0
        %v2024 = vadd.f32 0.0, %v2023
        %v2025 = vpop.f32.mrb[0].mxu0
        %v2026 = vpop.f32.mrb[0].mxu0
        %v2027 = vadd.f32 0.0, %v2026
        %v2028 = vpop.f32.mrb[0].mxu0
        %2029 = vmatprep.mubr.bf16.mxu0 0
        %2030 = vmatmul.mubr.bf16.gmra.mrb[0].mxu0 %v1872
        %v2031 = vpop.f32.mrb[0].mxu0
        %v2032 = vadd.f32 0.0, %v2031
        %v2033 = vpop.f32.mrb[0].mxu0
        %v2034 = vpop.f32.mrb[0].mxu0
        %v2035 = vadd.f32 0.0, %v2034
        %v2036 = vpop.f32.mrb[0].mxu0
        %2037 = vdwg.mxu0
        %v2038 = vadd.f32 %v1679, %v1912
        %v2039 = vadd.f32 %v1680, %v1915
        %v2040 = vadd.f32 %v1681, %v1920
        %v2041 = vadd.f32 %v1682, %v1923
        %v2042 = vadd.f32 %v1683, %v1928
        %v2043 = vadd.f32 %v1684, %v1931
        %v2044 = vadd.f32 %v1685, %v1936
        %v2045 = vadd.f32 %v1686, %v1939
        %v2046 = vadd.f32 %v1687, %v1944
        %v2047 = vadd.f32 %v1688, %v1947
        %v2048 = vadd.f32 %v1689, %v1952
        %v2049 = vadd.f32 %v1690, %v1955
        %v2050 = vadd.f32 %v1691, %v1960
        %v2051 = vadd.f32 %v1692, %v1963
        %v2052 = vadd.f32 %v1693, %v1968
        %v2053 = vadd.f32 %v1694, %v1971
        %v2054 = vadd.f32 %v1695, %v1976
        %v2055 = vadd.f32 %v1696, %v1979
        %v2056 = vadd.f32 %v1697, %v1984
        %v2057 = vadd.f32 %v1698, %v1987
        %v2058 = vadd.f32 %v1699, %v1992
        %v2059 = vadd.f32 %v1700, %v1995
        %v2060 = vadd.f32 %v1701, %v2000
        %v2061 = vadd.f32 %v1702, %v2003
        %v2062 = vadd.f32 %v1703, %v2008
        %v2063 = vadd.f32 %v1704, %v2011
        %v2064 = vadd.f32 %v1705, %v2016
        %v2065 = vadd.f32 %v1706, %v2019
        %v2066 = vadd.f32 %v1707, %v2024
        %v2067 = vadd.f32 %v1708, %v2027
        %v2068 = vadd.f32 %v1709, %v2032
        %v2069 = vadd.f32 %v1710, %v2035
        %v2070 = vld [vmem:[%s1711] sm:$0xf]
        %v2071 = vld [vmem:[%s1711 + $0x4] sm:$0xf]
        %v2072 = vld [vmem:[%s1711 + $0x8] sm:$0x1]
        %v2073 = vld [vmem:[%s1711 + $0xc] sm:$0xf]
        %v2074 = vld [vmem:[%s1711 + $0x10] sm:$0xf]
        %v2075 = vld [vmem:[%s1711 + $0x14] sm:$0x1]
        %v2076 = vld [vmem:[%s1711 + $0x18] sm:$0xf]
        %v2077 = vld [vmem:[%s1711 + $0x1c] sm:$0xf]
        %v2078 = vld [vmem:[%s1711 + $0x20] sm:$0x1]
        %v2079 = vld [vmem:[%s1711 + $0x24] sm:$0xf]
        %v2080 = vld [vmem:[%s1711 + $0x28] sm:$0xf]
        %v2081 = vld [vmem:[%s1711 + $0x2c] sm:$0x1]
        %v2082 = vld [vmem:[%s1711 + $0x30] sm:$0xf]
        %v2083 = vld [vmem:[%s1711 + $0x34] sm:$0xf]
        %v2084 = vld [vmem:[%s1711 + $0x38] sm:$0x1]
        %v2085 = vld [vmem:[%s1711 + $0x3c] sm:$0xf]
        %v2086 = vld [vmem:[%s1711 + $0x40] sm:$0xf]
        %v2087 = vld [vmem:[%s1711 + $0x44] sm:$0x1]
        %v2088 = vld [vmem:[%s1711 + $0x48] sm:$0xf]
        %v2089 = vld [vmem:[%s1711 + $0x4c] sm:$0xf]
        %v2090 = vld [vmem:[%s1711 + $0x50] sm:$0x1]
        %v2091 = vld [vmem:[%s1711 + $0x54] sm:$0xf]
        %v2092 = vld [vmem:[%s1711 + $0x58] sm:$0xf]
        %v2093 = vld [vmem:[%s1711 + $0x5c] sm:$0x1]
        %v2094 = vld [vmem:[%s1711 + $0x60] sm:$0xf]
        %v2095 = vld [vmem:[%s1711 + $0x64] sm:$0xf]
        %v2096 = vld [vmem:[%s1711 + $0x68] sm:$0x1]
        %v2097 = vld [vmem:[%s1711 + $0x6c] sm:$0xf]
        %v2098 = vld [vmem:[%s1711 + $0x70] sm:$0xf]
        %v2099 = vld [vmem:[%s1711 + $0x74] sm:$0x1]
        %v2100 = vld [vmem:[%s1711 + $0x78] sm:$0xf]
        %v2101 = vld [vmem:[%s1711 + $0x7c] sm:$0xf]
        %v2102 = vld [vmem:[%s1711 + $0x80] sm:$0x1]
        %v2103 = vld [vmem:[%s1711 + $0x84] sm:$0xf]
        %v2104 = vld [vmem:[%s1711 + $0x88] sm:$0xf]
        %v2105 = vld [vmem:[%s1711 + $0x8c] sm:$0x1]
        %v2106 = vld [vmem:[%s1711 + $0x90] sm:$0xf]
        %v2107 = vld [vmem:[%s1711 + $0x94] sm:$0xf]
        %v2108 = vld [vmem:[%s1711 + $0x98] sm:$0x1]
        %v2109 = vld [vmem:[%s1711 + $0x9c] sm:$0xf]
        %v2110 = vld [vmem:[%s1711 + $0xa0] sm:$0xf]
        %v2111 = vld [vmem:[%s1711 + $0xa4] sm:$0x1]
        %v2112 = vld [vmem:[%s1711 + $0xa8] sm:$0xf]
        %v2113 = vld [vmem:[%s1711 + $0xac] sm:$0xf]
        %v2114 = vld [vmem:[%s1711 + $0xb0] sm:$0x1]
        %v2115 = vld [vmem:[%s1711 + $0xb4] sm:$0xf]
        %v2116 = vld [vmem:[%s1711 + $0xb8] sm:$0xf]
        %v2117 = vld [vmem:[%s1711 + $0xbc] sm:$0x1]
        %v2119 = vshrl.u32 %v2070, 16
        %v2121 = vrot.slane %v2119, 4
        %v2122 = vshll.u32 %v2070, 16
        %v2124 = vrot.slane %v2122, 5
        %v2125 = vor.u32 %v2121, %v2124
        %v2126 = vrot.slane %v2125, 4
        %v2128 = vshll.u32 %v2071, 16
        %v2130 = vrot.slane %v2128, 5
        %v2131 = vsel %vm310, %v2126, %v2130
        %v2132 = vshrl.u32 %v2071, 16
        %v2134 = vrot.slane %v2132, 4
        %v2135 = vor.u32 %v2134, %v2130
        %v2136 = vrot.slane %v2135, 4
        %v2138 = vshll.u32 %v2072, 16
        %v2140 = vrot.slane %v2138, 5
        %v2141 = vsel %vm310, %v2136, %v2140
        %v2143 = vshrl.u32 %v2073, 16
        %v2145 = vrot.slane %v2143, 4
        %v2146 = vshll.u32 %v2073, 16
        %v2148 = vrot.slane %v2146, 5
        %v2149 = vor.u32 %v2145, %v2148
        %v2150 = vrot.slane %v2149, 4
        %v2152 = vshll.u32 %v2074, 16
        %v2154 = vrot.slane %v2152, 5
        %v2155 = vsel %vm310, %v2150, %v2154
        %v2156 = vshrl.u32 %v2074, 16
        %v2158 = vrot.slane %v2156, 4
        %v2159 = vor.u32 %v2158, %v2154
        %v2160 = vrot.slane %v2159, 4
        %v2162 = vshll.u32 %v2075, 16
        %v2164 = vrot.slane %v2162, 5
        %v2165 = vsel %vm310, %v2160, %v2164
        %v2167 = vshrl.u32 %v2076, 16
        %v2169 = vrot.slane %v2167, 4
        %v2170 = vshll.u32 %v2076, 16
        %v2172 = vrot.slane %v2170, 5
        %v2173 = vor.u32 %v2169, %v2172
        %v2174 = vrot.slane %v2173, 4
        %v2176 = vshll.u32 %v2077, 16
        %v2178 = vrot.slane %v2176, 5
        %v2179 = vsel %vm310, %v2174, %v2178
        %v2180 = vshrl.u32 %v2077, 16
        %v2182 = vrot.slane %v2180, 4
        %v2183 = vor.u32 %v2182, %v2178
        %v2184 = vrot.slane %v2183, 4
        %v2186 = vshll.u32 %v2078, 16
        %v2188 = vrot.slane %v2186, 5
        %v2189 = vsel %vm310, %v2184, %v2188
        %v2191 = vshrl.u32 %v2079, 16
        %v2193 = vrot.slane %v2191, 4
        %v2194 = vshll.u32 %v2079, 16
        %v2196 = vrot.slane %v2194, 5
        %v2197 = vor.u32 %v2193, %v2196
        %v2198 = vrot.slane %v2197, 4
        %v2200 = vshll.u32 %v2080, 16
        %v2202 = vrot.slane %v2200, 5
        %v2203 = vsel %vm310, %v2198, %v2202
        %v2204 = vshrl.u32 %v2080, 16
        %v2206 = vrot.slane %v2204, 4
        %v2207 = vor.u32 %v2206, %v2202
        %v2208 = vrot.slane %v2207, 4
        %v2210 = vshll.u32 %v2081, 16
        %v2212 = vrot.slane %v2210, 5
        %v2213 = vsel %vm310, %v2208, %v2212
        %v2215 = vshrl.u32 %v2082, 16
        %v2217 = vrot.slane %v2215, 4
        %v2218 = vshll.u32 %v2082, 16
        %v2220 = vrot.slane %v2218, 5
        %v2221 = vor.u32 %v2217, %v2220
        %v2222 = vrot.slane %v2221, 4
        %v2224 = vshll.u32 %v2083, 16
        %v2226 = vrot.slane %v2224, 5
        %v2227 = vsel %vm310, %v2222, %v2226
        %v2228 = vshrl.u32 %v2083, 16
        %v2230 = vrot.slane %v2228, 4
        %v2231 = vor.u32 %v2230, %v2226
        %v2232 = vrot.slane %v2231, 4
        %v2234 = vshll.u32 %v2084, 16
        %v2236 = vrot.slane %v2234, 5
        %v2237 = vsel %vm310, %v2232, %v2236
        %v2239 = vshrl.u32 %v2085, 16
        %v2241 = vrot.slane %v2239, 4
        %v2242 = vshll.u32 %v2085, 16
        %v2244 = vrot.slane %v2242, 5
        %v2245 = vor.u32 %v2241, %v2244
        %v2246 = vrot.slane %v2245, 4
        %v2248 = vshll.u32 %v2086, 16
        %v2250 = vrot.slane %v2248, 5
        %v2251 = vsel %vm310, %v2246, %v2250
        %v2252 = vshrl.u32 %v2086, 16
        %v2254 = vrot.slane %v2252, 4
        %v2255 = vor.u32 %v2254, %v2250
        %v2256 = vrot.slane %v2255, 4
        %v2258 = vshll.u32 %v2087, 16
        %v2260 = vrot.slane %v2258, 5
        %v2261 = vsel %vm310, %v2256, %v2260
        %v2263 = vshrl.u32 %v2088, 16
        %v2265 = vrot.slane %v2263, 4
        %v2266 = vshll.u32 %v2088, 16
        %v2268 = vrot.slane %v2266, 5
        %v2269 = vor.u32 %v2265, %v2268
        %v2270 = vrot.slane %v2269, 4
        %v2272 = vshll.u32 %v2089, 16
        %v2274 = vrot.slane %v2272, 5
        %v2275 = vsel %vm310, %v2270, %v2274
        %v2276 = vshrl.u32 %v2089, 16
        %v2278 = vrot.slane %v2276, 4
        %v2279 = vor.u32 %v2278, %v2274
        %v2280 = vrot.slane %v2279, 4
        %v2282 = vshll.u32 %v2090, 16
        %v2284 = vrot.slane %v2282, 5
        %v2285 = vsel %vm310, %v2280, %v2284
        %v2287 = vshrl.u32 %v2091, 16
        %v2289 = vrot.slane %v2287, 4
        %v2290 = vshll.u32 %v2091, 16
        %v2292 = vrot.slane %v2290, 5
        %v2293 = vor.u32 %v2289, %v2292
        %v2294 = vrot.slane %v2293, 4
        %v2296 = vshll.u32 %v2092, 16
        %v2298 = vrot.slane %v2296, 5
        %v2299 = vsel %vm310, %v2294, %v2298
        %v2300 = vshrl.u32 %v2092, 16
        %v2302 = vrot.slane %v2300, 4
        %v2303 = vor.u32 %v2302, %v2298
        %v2304 = vrot.slane %v2303, 4
        %v2306 = vshll.u32 %v2093, 16
        %v2308 = vrot.slane %v2306, 5
        %v2309 = vsel %vm310, %v2304, %v2308
        %v2311 = vshrl.u32 %v2094, 16
        %v2313 = vrot.slane %v2311, 4
        %v2314 = vshll.u32 %v2094, 16
        %v2316 = vrot.slane %v2314, 5
        %v2317 = vor.u32 %v2313, %v2316
        %v2318 = vrot.slane %v2317, 4
        %v2320 = vshll.u32 %v2095, 16
        %v2322 = vrot.slane %v2320, 5
        %v2323 = vsel %vm310, %v2318, %v2322
        %v2324 = vshrl.u32 %v2095, 16
        %v2326 = vrot.slane %v2324, 4
        %v2327 = vor.u32 %v2326, %v2322
        %v2328 = vrot.slane %v2327, 4
        %v2330 = vshll.u32 %v2096, 16
        %v2332 = vrot.slane %v2330, 5
        %v2333 = vsel %vm310, %v2328, %v2332
        %v2335 = vshrl.u32 %v2097, 16
        %v2337 = vrot.slane %v2335, 4
        %v2338 = vshll.u32 %v2097, 16
        %v2340 = vrot.slane %v2338, 5
        %v2341 = vor.u32 %v2337, %v2340
        %v2342 = vrot.slane %v2341, 4
        %v2344 = vshll.u32 %v2098, 16
        %v2346 = vrot.slane %v2344, 5
        %v2347 = vsel %vm310, %v2342, %v2346
        %v2348 = vshrl.u32 %v2098, 16
        %v2350 = vrot.slane %v2348, 4
        %v2351 = vor.u32 %v2350, %v2346
        %v2352 = vrot.slane %v2351, 4
        %v2354 = vshll.u32 %v2099, 16
        %v2356 = vrot.slane %v2354, 5
        %v2357 = vsel %vm310, %v2352, %v2356
        %v2359 = vshrl.u32 %v2100, 16
        %v2361 = vrot.slane %v2359, 4
        %v2362 = vshll.u32 %v2100, 16
        %v2364 = vrot.slane %v2362, 5
        %v2365 = vor.u32 %v2361, %v2364
        %v2366 = vrot.slane %v2365, 4
        %v2368 = vshll.u32 %v2101, 16
        %v2370 = vrot.slane %v2368, 5
        %v2371 = vsel %vm310, %v2366, %v2370
        %v2372 = vshrl.u32 %v2101, 16
        %v2374 = vrot.slane %v2372, 4
        %v2375 = vor.u32 %v2374, %v2370
        %v2376 = vrot.slane %v2375, 4
        %v2378 = vshll.u32 %v2102, 16
        %v2380 = vrot.slane %v2378, 5
        %v2381 = vsel %vm310, %v2376, %v2380
        %v2383 = vshrl.u32 %v2103, 16
        %v2385 = vrot.slane %v2383, 4
        %v2386 = vshll.u32 %v2103, 16
        %v2388 = vrot.slane %v2386, 5
        %v2389 = vor.u32 %v2385, %v2388
        %v2390 = vrot.slane %v2389, 4
        %v2392 = vshll.u32 %v2104, 16
        %v2394 = vrot.slane %v2392, 5
        %v2395 = vsel %vm310, %v2390, %v2394
        %v2396 = vshrl.u32 %v2104, 16
        %v2398 = vrot.slane %v2396, 4
        %v2399 = vor.u32 %v2398, %v2394
        %v2400 = vrot.slane %v2399, 4
        %v2402 = vshll.u32 %v2105, 16
        %v2404 = vrot.slane %v2402, 5
        %v2405 = vsel %vm310, %v2400, %v2404
        %v2407 = vshrl.u32 %v2106, 16
        %v2409 = vrot.slane %v2407, 4
        %v2410 = vshll.u32 %v2106, 16
        %v2412 = vrot.slane %v2410, 5
        %v2413 = vor.u32 %v2409, %v2412
        %v2414 = vrot.slane %v2413, 4
        %v2416 = vshll.u32 %v2107, 16
        %v2418 = vrot.slane %v2416, 5
        %v2419 = vsel %vm310, %v2414, %v2418
        %v2420 = vshrl.u32 %v2107, 16
        %v2422 = vrot.slane %v2420, 4
        %v2423 = vor.u32 %v2422, %v2418
        %v2424 = vrot.slane %v2423, 4
        %v2426 = vshll.u32 %v2108, 16
        %v2428 = vrot.slane %v2426, 5
        %v2429 = vsel %vm310, %v2424, %v2428
        %v2431 = vshrl.u32 %v2109, 16
        %v2433 = vrot.slane %v2431, 4
        %v2434 = vshll.u32 %v2109, 16
        %v2436 = vrot.slane %v2434, 5
        %v2437 = vor.u32 %v2433, %v2436
        %v2438 = vrot.slane %v2437, 4
        %v2440 = vshll.u32 %v2110, 16
        %v2442 = vrot.slane %v2440, 5
        %v2443 = vsel %vm310, %v2438, %v2442
        %v2444 = vshrl.u32 %v2110, 16
        %v2446 = vrot.slane %v2444, 4
        %v2447 = vor.u32 %v2446, %v2442
        %v2448 = vrot.slane %v2447, 4
        %v2450 = vshll.u32 %v2111, 16
        %v2452 = vrot.slane %v2450, 5
        %v2453 = vsel %vm310, %v2448, %v2452
        %v2455 = vshrl.u32 %v2112, 16
        %v2457 = vrot.slane %v2455, 4
        %v2458 = vshll.u32 %v2112, 16
        %v2460 = vrot.slane %v2458, 5
        %v2461 = vor.u32 %v2457, %v2460
        %v2462 = vrot.slane %v2461, 4
        %v2464 = vshll.u32 %v2113, 16
        %v2466 = vrot.slane %v2464, 5
        %v2467 = vsel %vm310, %v2462, %v2466
        %v2468 = vshrl.u32 %v2113, 16
        %v2470 = vrot.slane %v2468, 4
        %v2471 = vor.u32 %v2470, %v2466
        %v2472 = vrot.slane %v2471, 4
        %v2474 = vshll.u32 %v2114, 16
        %v2476 = vrot.slane %v2474, 5
        %v2477 = vsel %vm310, %v2472, %v2476
        %v2479 = vshrl.u32 %v2115, 16
        %v2481 = vrot.slane %v2479, 4
        %v2482 = vshll.u32 %v2115, 16
        %v2484 = vrot.slane %v2482, 5
        %v2485 = vor.u32 %v2481, %v2484
        %v2486 = vrot.slane %v2485, 4
        %v2488 = vshll.u32 %v2116, 16
        %v2490 = vrot.slane %v2488, 5
        %v2491 = vsel %vm310, %v2486, %v2490
        %v2492 = vshrl.u32 %v2116, 16
        %v2494 = vrot.slane %v2492, 4
        %v2495 = vor.u32 %v2494, %v2490
        %v2496 = vrot.slane %v2495, 4
        %v2498 = vshll.u32 %v2117, 16
        %v2500 = vrot.slane %v2498, 5
        %v2501 = vsel %vm310, %v2496, %v2500
        %s2502 = scalar_lea.vmem %s251, 8
        %v2503 = vld [vmem:[%s2502] sm:$0x3]
        %v2504 = vunpack.c.l.b16 %v2131
        %v2505 = vunpack.c.l.b16 %v2141
        %v2506 = vunpack.c.l.b16 %v2155
        %v2507 = vunpack.c.l.b16 %v2165
        %v2508 = vunpack.c.l.b16 %v2179
        %v2509 = vunpack.c.l.b16 %v2189
        %v2510 = vunpack.c.l.b16 %v2203
        %v2511 = vunpack.c.l.b16 %v2213
        %v2512 = vunpack.c.l.b16 %v2227
        %v2513 = vunpack.c.l.b16 %v2237
        %v2514 = vunpack.c.l.b16 %v2251
        %v2515 = vunpack.c.l.b16 %v2261
        %v2516 = vunpack.c.l.b16 %v2275
        %v2517 = vunpack.c.l.b16 %v2285
        %v2518 = vunpack.c.l.b16 %v2299
        %v2519 = vunpack.c.l.b16 %v2309
        %v2520 = vunpack.c.l.b16 %v2323
        %v2521 = vunpack.c.l.b16 %v2333
        %v2522 = vunpack.c.l.b16 %v2347
        %v2523 = vunpack.c.l.b16 %v2357
        %v2524 = vunpack.c.l.b16 %v2371
        %v2525 = vunpack.c.l.b16 %v2381
        %v2526 = vunpack.c.l.b16 %v2395
        %v2527 = vunpack.c.l.b16 %v2405
        %v2528 = vunpack.c.l.b16 %v2419
        %v2529 = vunpack.c.l.b16 %v2429
        %v2530 = vunpack.c.l.b16 %v2443
        %v2531 = vunpack.c.l.b16 %v2453
        %v2532 = vunpack.c.l.b16 %v2467
        %v2533 = vunpack.c.l.b16 %v2477
        %v2534 = vunpack.c.l.b16 %v2491
        %v2535 = vunpack.c.l.b16 %v2501
        %v2536 = vpack.c.b16 %v2505, %v2504
        %v2537 = vpack.c.b16 %v2507, %v2506
        %v2538 = vpack.c.b16 %v2509, %v2508
        %v2539 = vpack.c.b16 %v2511, %v2510
        %v2540 = vpack.c.b16 %v2513, %v2512
        %v2541 = vpack.c.b16 %v2515, %v2514
        %v2542 = vpack.c.b16 %v2517, %v2516
        %v2543 = vpack.c.b16 %v2519, %v2518
        %v2544 = vpack.c.b16 %v2521, %v2520
        %v2545 = vpack.c.b16 %v2523, %v2522
        %v2546 = vpack.c.b16 %v2525, %v2524
        %v2547 = vpack.c.b16 %v2527, %v2526
        %v2548 = vpack.c.b16 %v2529, %v2528
        %v2549 = vpack.c.b16 %v2531, %v2530
        %v2550 = vpack.c.b16 %v2533, %v2532
        %v2551 = vpack.c.b16 %v2535, %v2534
        %v2553 = vsel %vm745, %v2536, 0
        %v2556 = vsel %vm745, %v2537, 0
        %v2559 = vsel %vm745, %v2538, 0
        %v2562 = vsel %vm745, %v2539, 0
        %v2565 = vsel %vm745, %v2540, 0
        %v2568 = vsel %vm745, %v2541, 0
        %v2571 = vsel %vm745, %v2542, 0
        %v2574 = vsel %vm745, %v2543, 0
        %v2577 = vsel %vm745, %v2544, 0
        %v2580 = vsel %vm745, %v2545, 0
        %v2583 = vsel %vm745, %v2546, 0
        %v2586 = vsel %vm745, %v2547, 0
        %v2589 = vsel %vm745, %v2548, 0
        %v2592 = vsel %vm745, %v2549, 0
        %v2595 = vsel %vm745, %v2550, 0
        %v2598 = vsel %vm745, %v2551, 0
        %v2601 = vand.u32 %v2503, %v797
        %2603 = vmatprep.subr.bf16.mxu0 0
        %2604 = vmatpush1.bf16.msra.mxu0 %v2601
        %2605 = vmatprep.subr.bf16.mxu0 0
        %2606 = vmatpush1.bf16.msra.mxu0 0
        %2607 = vmatprep.subr.bf16.mxu0 0
        %2608 = vmatpush1.bf16.msra.mxu0 0
        %2609 = vmatprep.subr.bf16.mxu0 0
        %2610 = vmatpush1.bf16.msra.mxu0 0
        %2611 = vmatprep.subr.bf16.mxu0 0
        %2612 = vmatpush1.bf16.msra.mxu0 0
        %2613 = vmatprep.subr.bf16.mxu0 0
        %2614 = vmatpush1.bf16.msra.mxu0 0
        %2615 = vmatprep.subr.bf16.mxu0 0
        %2616 = vmatpush1.bf16.msra.mxu0 0
        %2617 = vmatprep.subr.bf16.mxu0 0
        %2618 = vmatpush1.bf16.msra.mxu0 0
        %2619 = vmatprep.subr.bf16.mxu0 0
        %2620 = vmatpush1.bf16.msra.mxu0 0
        %2621 = vmatprep.subr.bf16.mxu0 0
        %2622 = vmatpush1.bf16.msra.mxu0 0
        %2623 = vmatprep.subr.bf16.mxu0 0
        %2624 = vmatpush1.bf16.msra.mxu0 0
        %2625 = vmatprep.subr.bf16.mxu0 0
        %2626 = vmatpush1.bf16.msra.mxu0 0
        %2627 = vmatprep.subr.bf16.mxu0 0
        %2628 = vmatpush1.bf16.msra.mxu0 0
        %2629 = vmatprep.subr.bf16.mxu0 0
        %2630 = vmatpush1.bf16.msra.mxu0 0
        %2631 = vmatprep.subr.bf16.mxu0 0
        %2632 = vmatpush1.bf16.msra.mxu0 0
        %2633 = vmatprep.subr.bf16.mxu0 0
        %2634 = vmatpush1.bf16.msra.mxu0 0
        %2635 = vmatprep.mubr.bf16.mxu0 0
        %2636 = vmatmul.mubr.bf16.gmra.mrb[0].mxu0 %v2553
        %v2637 = vpop.f32.mrb[0].mxu0
        %v2638 = vadd.f32 0.0, %v2637
        %v2639 = vpop.f32.mrb[0].mxu0
        %v2640 = vpop.f32.mrb[0].mxu0
        %v2641 = vadd.f32 0.0, %v2640
        %v2642 = vpop.f32.mrb[0].mxu0
        %2643 = vmatprep.mubr.bf16.mxu0 0
        %2644 = vmatmul.mubr.bf16.gmra.mrb[0].mxu0 %v2556
        %v2645 = vpop.f32.mrb[0].mxu0
        %v2646 = vadd.f32 0.0, %v2645
        %v2647 = vpop.f32.mrb[0].mxu0
        %v2648 = vpop.f32.mrb[0].mxu0
        %v2649 = vadd.f32 0.0, %v2648
        %v2650 = vpop.f32.mrb[0].mxu0
        %2651 = vmatprep.mubr.bf16.mxu0 0
        %2652 = vmatmul.mubr.bf16.gmra.mrb[0].mxu0 %v2559
        %v2653 = vpop.f32.mrb[0].mxu0
        %v2654 = vadd.f32 0.0, %v2653
        %v2655 = vpop.f32.mrb[0].mxu0
        %v2656 = vpop.f32.mrb[0].mxu0
        %v2657 = vadd.f32 0.0, %v2656
        %v2658 = vpop.f32.mrb[0].mxu0
        %2659 = vmatprep.mubr.bf16.mxu0 0
        %2660 = vmatmul.mubr.bf16.gmra.mrb[0].mxu0 %v2562
        %v2661 = vpop.f32.mrb[0].mxu0
        %v2662 = vadd.f32 0.0, %v2661
        %v2663 = vpop.f32.mrb[0].mxu0
        %v2664 = vpop.f32.mrb[0].mxu0
        %v2665 = vadd.f32 0.0, %v2664
        %v2666 = vpop.f32.mrb[0].mxu0
        %2667 = vmatprep.mubr.bf16.mxu0 0
        %2668 = vmatmul.mubr.bf16.gmra.mrb[0].mxu0 %v2565
        %v2669 = vpop.f32.mrb[0].mxu0
        %v2670 = vadd.f32 0.0, %v2669
        %v2671 = vpop.f32.mrb[0].mxu0
        %v2672 = vpop.f32.mrb[0].mxu0
        %v2673 = vadd.f32 0.0, %v2672
        %v2674 = vpop.f32.mrb[0].mxu0
        %2675 = vmatprep.mubr.bf16.mxu0 0
        %2676 = vmatmul.mubr.bf16.gmra.mrb[0].mxu0 %v2568
        %v2677 = vpop.f32.mrb[0].mxu0
        %v2678 = vadd.f32 0.0, %v2677
        %v2679 = vpop.f32.mrb[0].mxu0
        %v2680 = vpop.f32.mrb[0].mxu0
        %v2681 = vadd.f32 0.0, %v2680
        %v2682 = vpop.f32.mrb[0].mxu0
        %2683 = vmatprep.mubr.bf16.mxu0 0
        %2684 = vmatmul.mubr.bf16.gmra.mrb[0].mxu0 %v2571
        %v2685 = vpop.f32.mrb[0].mxu0
        %v2686 = vadd.f32 0.0, %v2685
        %v2687 = vpop.f32.mrb[0].mxu0
        %v2688 = vpop.f32.mrb[0].mxu0
        %v2689 = vadd.f32 0.0, %v2688
        %v2690 = vpop.f32.mrb[0].mxu0
        %2691 = vmatprep.mubr.bf16.mxu0 0
        %2692 = vmatmul.mubr.bf16.gmra.mrb[0].mxu0 %v2574
        %v2693 = vpop.f32.mrb[0].mxu0
        %v2694 = vadd.f32 0.0, %v2693
        %v2695 = vpop.f32.mrb[0].mxu0
        %v2696 = vpop.f32.mrb[0].mxu0
        %v2697 = vadd.f32 0.0, %v2696
        %v2698 = vpop.f32.mrb[0].mxu0
        %2699 = vmatprep.mubr.bf16.mxu0 0
        %2700 = vmatmul.mubr.bf16.gmra.mrb[0].mxu0 %v2577
        %v2701 = vpop.f32.mrb[0].mxu0
        %v2702 = vadd.f32 0.0, %v2701
        %v2703 = vpop.f32.mrb[0].mxu0
        %v2704 = vpop.f32.mrb[0].mxu0
        %v2705 = vadd.f32 0.0, %v2704
        %v2706 = vpop.f32.mrb[0].mxu0
        %2707 = vmatprep.mubr.bf16.mxu0 0
        %2708 = vmatmul.mubr.bf16.gmra.mrb[0].mxu0 %v2580
        %v2709 = vpop.f32.mrb[0].mxu0
        %v2710 = vadd.f32 0.0, %v2709
        %v2711 = vpop.f32.mrb[0].mxu0
        %v2712 = vpop.f32.mrb[0].mxu0
        %v2713 = vadd.f32 0.0, %v2712
        %v2714 = vpop.f32.mrb[0].mxu0
        %2715 = vmatprep.mubr.bf16.mxu0 0
        %2716 = vmatmul.mubr.bf16.gmra.mrb[0].mxu0 %v2583
        %v2717 = vpop.f32.mrb[0].mxu0
        %v2718 = vadd.f32 0.0, %v2717
        %v2719 = vpop.f32.mrb[0].mxu0
        %v2720 = vpop.f32.mrb[0].mxu0
        %v2721 = vadd.f32 0.0, %v2720
        %v2722 = vpop.f32.mrb[0].mxu0
        %2723 = vmatprep.mubr.bf16.mxu0 0
        %2724 = vmatmul.mubr.bf16.gmra.mrb[0].mxu0 %v2586
        %v2725 = vpop.f32.mrb[0].mxu0
        %v2726 = vadd.f32 0.0, %v2725
        %v2727 = vpop.f32.mrb[0].mxu0
        %v2728 = vpop.f32.mrb[0].mxu0
        %v2729 = vadd.f32 0.0, %v2728
        %v2730 = vpop.f32.mrb[0].mxu0
        %2731 = vmatprep.mubr.bf16.mxu0 0
        %2732 = vmatmul.mubr.bf16.gmra.mrb[0].mxu0 %v2589
        %v2733 = vpop.f32.mrb[0].mxu0
        %v2734 = vadd.f32 0.0, %v2733
        %v2735 = vpop.f32.mrb[0].mxu0
        %v2736 = vpop.f32.mrb[0].mxu0
        %v2737 = vadd.f32 0.0, %v2736
        %v2738 = vpop.f32.mrb[0].mxu0
        %2739 = vmatprep.mubr.bf16.mxu0 0
        %2740 = vmatmul.mubr.bf16.gmra.mrb[0].mxu0 %v2592
        %v2741 = vpop.f32.mrb[0].mxu0
        %v2742 = vadd.f32 0.0, %v2741
        %v2743 = vpop.f32.mrb[0].mxu0
        %v2744 = vpop.f32.mrb[0].mxu0
        %v2745 = vadd.f32 0.0, %v2744
        %v2746 = vpop.f32.mrb[0].mxu0
        %2747 = vmatprep.mubr.bf16.mxu0 0
        %2748 = vmatmul.mubr.bf16.gmra.mrb[0].mxu0 %v2595
        %v2749 = vpop.f32.mrb[0].mxu0
        %v2750 = vadd.f32 0.0, %v2749
        %v2751 = vpop.f32.mrb[0].mxu0
        %v2752 = vpop.f32.mrb[0].mxu0
        %v2753 = vadd.f32 0.0, %v2752
        %v2754 = vpop.f32.mrb[0].mxu0
        %2755 = vmatprep.mubr.bf16.mxu0 0
        %2756 = vmatmul.mubr.bf16.gmra.mrb[0].mxu0 %v2598
        %v2757 = vpop.f32.mrb[0].mxu0
        %v2758 = vadd.f32 0.0, %v2757
        %v2759 = vpop.f32.mrb[0].mxu0
        %v2760 = vpop.f32.mrb[0].mxu0
        %v2761 = vadd.f32 0.0, %v2760
        %v2762 = vpop.f32.mrb[0].mxu0
        %2763 = vdwg.mxu0
        %v2764 = vadd.f32 %v2038, %v2638
        %v2765 = vadd.f32 %v2039, %v2641
        %v2766 = vadd.f32 %v2040, %v2646
        %v2767 = vadd.f32 %v2041, %v2649
        %v2768 = vadd.f32 %v2042, %v2654
        %v2769 = vadd.f32 %v2043, %v2657
        %v2770 = vadd.f32 %v2044, %v2662
        %v2771 = vadd.f32 %v2045, %v2665
        %v2772 = vadd.f32 %v2046, %v2670
        %v2773 = vadd.f32 %v2047, %v2673
        %v2774 = vadd.f32 %v2048, %v2678
        %v2775 = vadd.f32 %v2049, %v2681
        %v2776 = vadd.f32 %v2050, %v2686
        %v2777 = vadd.f32 %v2051, %v2689
        %v2778 = vadd.f32 %v2052, %v2694
        %v2779 = vadd.f32 %v2053, %v2697
        %v2780 = vadd.f32 %v2054, %v2702
        %v2781 = vadd.f32 %v2055, %v2705
        %v2782 = vadd.f32 %v2056, %v2710
        %v2783 = vadd.f32 %v2057, %v2713
        %v2784 = vadd.f32 %v2058, %v2718
        %v2785 = vadd.f32 %v2059, %v2721
        %v2786 = vadd.f32 %v2060, %v2726
        %v2787 = vadd.f32 %v2061, %v2729
        %v2788 = vadd.f32 %v2062, %v2734
        %v2789 = vadd.f32 %v2063, %v2737
        %v2790 = vadd.f32 %v2064, %v2742
        %v2791 = vadd.f32 %v2065, %v2745
        %v2792 = vadd.f32 %v2066, %v2750
        %v2793 = vadd.f32 %v2067, %v2753
        %v2794 = vadd.f32 %v2068, %v2758
        %v2795 = vadd.f32 %v2069, %v2761
        %v2796 = vld [vmem:[%s1711] sm:$0xe]
        %v2797 = vld [vmem:[%s1711 + $0xc] sm:$0xe]
        %v2798 = vld [vmem:[%s1711 + $0x18] sm:$0xe]
        %v2799 = vld [vmem:[%s1711 + $0x24] sm:$0xe]
        %v2800 = vld [vmem:[%s1711 + $0x30] sm:$0xe]
        %v2801 = vld [vmem:[%s1711 + $0x3c] sm:$0xe]
        %v2802 = vld [vmem:[%s1711 + $0x48] sm:$0xe]
        %v2803 = vld [vmem:[%s1711 + $0x54] sm:$0xe]
        %v2804 = vld [vmem:[%s1711 + $0x60] sm:$0xe]
        %v2805 = vld [vmem:[%s1711 + $0x6c] sm:$0xe]
        %v2806 = vld [vmem:[%s1711 + $0x78] sm:$0xe]
        %v2807 = vld [vmem:[%s1711 + $0x84] sm:$0xe]
        %v2808 = vld [vmem:[%s1711 + $0x90] sm:$0xe]
        %v2809 = vld [vmem:[%s1711 + $0x9c] sm:$0xe]
        %v2810 = vld [vmem:[%s1711 + $0xa8] sm:$0xe]
        %v2811 = vld [vmem:[%s1711 + $0xb4] sm:$0xe]
        %v2860 = vrot.slane %v2796, 5
        %v2861 = vrot.slane %v2860, 4
        %v2862 = vrot.slane %v2071, 5
        %v2863 = vsel %vm1304, %v2861, %v2862
        %v2864 = vrot.slane %v2862, 4
        %v2865 = vrot.slane %v2072, 5
        %v2866 = vsel %vm1304, %v2864, %v2865
        %v2867 = vrot.slane %v2797, 5
        %v2868 = vrot.slane %v2867, 4
        %v2869 = vrot.slane %v2074, 5
        %v2870 = vsel %vm1304, %v2868, %v2869
        %v2871 = vrot.slane %v2869, 4
        %v2872 = vrot.slane %v2075, 5
        %v2873 = vsel %vm1304, %v2871, %v2872
        %v2874 = vrot.slane %v2798, 5
        %v2875 = vrot.slane %v2874, 4
        %v2876 = vrot.slane %v2077, 5
        %v2877 = vsel %vm1304, %v2875, %v2876
        %v2878 = vrot.slane %v2876, 4
        %v2879 = vrot.slane %v2078, 5
        %v2880 = vsel %vm1304, %v2878, %v2879
        %v2881 = vrot.slane %v2799, 5
        %v2882 = vrot.slane %v2881, 4
        %v2883 = vrot.slane %v2080, 5
        %v2884 = vsel %vm1304, %v2882, %v2883
        %v2885 = vrot.slane %v2883, 4
        %v2886 = vrot.slane %v2081, 5
        %v2887 = vsel %vm1304, %v2885, %v2886
        %v2888 = vrot.slane %v2800, 5
        %v2889 = vrot.slane %v2888, 4
        %v2890 = vrot.slane %v2083, 5
        %v2891 = vsel %vm1304, %v2889, %v2890
        %v2892 = vrot.slane %v2890, 4
        %v2893 = vrot.slane %v2084, 5
        %v2894 = vsel %vm1304, %v2892, %v2893
        %v2895 = vrot.slane %v2801, 5
        %v2896 = vrot.slane %v2895, 4
        %v2897 = vrot.slane %v2086, 5
        %v2898 = vsel %vm1304, %v2896, %v2897
        %v2899 = vrot.slane %v2897, 4
        %v2900 = vrot.slane %v2087, 5
        %v2901 = vsel %vm1304, %v2899, %v2900
        %v2902 = vrot.slane %v2802, 5
        %v2903 = vrot.slane %v2902, 4
        %v2904 = vrot.slane %v2089, 5
        %v2905 = vsel %vm1304, %v2903, %v2904
        %v2906 = vrot.slane %v2904, 4
        %v2907 = vrot.slane %v2090, 5
        %v2908 = vsel %vm1304, %v2906, %v2907
        %v2909 = vrot.slane %v2803, 5
        %v2910 = vrot.slane %v2909, 4
        %v2911 = vrot.slane %v2092, 5
        %v2912 = vsel %vm1304, %v2910, %v2911
        %v2913 = vrot.slane %v2911, 4
        %v2914 = vrot.slane %v2093, 5
        %v2915 = vsel %vm1304, %v2913, %v2914
        %v2916 = vrot.slane %v2804, 5
        %v2917 = vrot.slane %v2916, 4
        %v2918 = vrot.slane %v2095, 5
        %v2919 = vsel %vm1304, %v2917, %v2918
        %v2920 = vrot.slane %v2918, 4
        %v2921 = vrot.slane %v2096, 5
        %v2922 = vsel %vm1304, %v2920, %v2921
        %v2923 = vrot.slane %v2805, 5
        %v2924 = vrot.slane %v2923, 4
        %v2925 = vrot.slane %v2098, 5
        %v2926 = vsel %vm1304, %v2924, %v2925
        %v2927 = vrot.slane %v2925, 4
        %v2928 = vrot.slane %v2099, 5
        %v2929 = vsel %vm1304, %v2927, %v2928
        %v2930 = vrot.slane %v2806, 5
        %v2931 = vrot.slane %v2930, 4
        %v2932 = vrot.slane %v2101, 5
        %v2933 = vsel %vm1304, %v2931, %v2932
        %v2934 = vrot.slane %v2932, 4
        %v2935 = vrot.slane %v2102, 5
        %v2936 = vsel %vm1304, %v2934, %v2935
        %v2937 = vrot.slane %v2807, 5
        %v2938 = vrot.slane %v2937, 4
        %v2939 = vrot.slane %v2104, 5
        %v2940 = vsel %vm1304, %v2938, %v2939
        %v2941 = vrot.slane %v2939, 4
        %v2942 = vrot.slane %v2105, 5
        %v2943 = vsel %vm1304, %v2941, %v2942
        %v2944 = vrot.slane %v2808, 5
        %v2945 = vrot.slane %v2944, 4
        %v2946 = vrot.slane %v2107, 5
        %v2947 = vsel %vm1304, %v2945, %v2946
        %v2948 = vrot.slane %v2946, 4
        %v2949 = vrot.slane %v2108, 5
        %v2950 = vsel %vm1304, %v2948, %v2949
        %v2951 = vrot.slane %v2809, 5
        %v2952 = vrot.slane %v2951, 4
        %v2953 = vrot.slane %v2110, 5
        %v2954 = vsel %vm1304, %v2952, %v2953
        %v2955 = vrot.slane %v2953, 4
        %v2956 = vrot.slane %v2111, 5
        %v2957 = vsel %vm1304, %v2955, %v2956
        %v2958 = vrot.slane %v2810, 5
        %v2959 = vrot.slane %v2958, 4
        %v2960 = vrot.slane %v2113, 5
        %v2961 = vsel %vm1304, %v2959, %v2960
        %v2962 = vrot.slane %v2960, 4
        %v2963 = vrot.slane %v2114, 5
        %v2964 = vsel %vm1304, %v2962, %v2963
        %v2965 = vrot.slane %v2811, 5
        %v2966 = vrot.slane %v2965, 4
        %v2967 = vrot.slane %v2116, 5
        %v2968 = vsel %vm1304, %v2966, %v2967
        %v2969 = vrot.slane %v2967, 4
        %v2970 = vrot.slane %v2117, 5
        %v2971 = vsel %vm1304, %v2969, %v2970
        %s2972 = scalar_lea.vmem %s251, 10
        %v2973 = vld [vmem:[%s2972] sm:$0x3]
        %v2974 = vunpack.c.l.b16 %v2863
        %v2975 = vunpack.c.l.b16 %v2866
        %v2976 = vunpack.c.l.b16 %v2870
        %v2977 = vunpack.c.l.b16 %v2873
        %v2978 = vunpack.c.l.b16 %v2877
        %v2979 = vunpack.c.l.b16 %v2880
        %v2980 = vunpack.c.l.b16 %v2884
        %v2981 = vunpack.c.l.b16 %v2887
        %v2982 = vunpack.c.l.b16 %v2891
        %v2983 = vunpack.c.l.b16 %v2894
        %v2984 = vunpack.c.l.b16 %v2898
        %v2985 = vunpack.c.l.b16 %v2901
        %v2986 = vunpack.c.l.b16 %v2905
        %v2987 = vunpack.c.l.b16 %v2908
        %v2988 = vunpack.c.l.b16 %v2912
        %v2989 = vunpack.c.l.b16 %v2915
        %v2990 = vunpack.c.l.b16 %v2919
        %v2991 = vunpack.c.l.b16 %v2922
        %v2992 = vunpack.c.l.b16 %v2926
        %v2993 = vunpack.c.l.b16 %v2929
        %v2994 = vunpack.c.l.b16 %v2933
        %v2995 = vunpack.c.l.b16 %v2936
        %v2996 = vunpack.c.l.b16 %v2940
        %v2997 = vunpack.c.l.b16 %v2943
        %v2998 = vunpack.c.l.b16 %v2947
        %v2999 = vunpack.c.l.b16 %v2950
        %v3000 = vunpack.c.l.b16 %v2954
        %v3001 = vunpack.c.l.b16 %v2957
        %v3002 = vunpack.c.l.b16 %v2961
        %v3003 = vunpack.c.l.b16 %v2964
        %v3004 = vunpack.c.l.b16 %v2968
        %v3005 = vunpack.c.l.b16 %v2971
        %v3006 = vpack.c.b16 %v2975, %v2974
        %v3007 = vpack.c.b16 %v2977, %v2976
        %v3008 = vpack.c.b16 %v2979, %v2978
        %v3009 = vpack.c.b16 %v2981, %v2980
        %v3010 = vpack.c.b16 %v2983, %v2982
        %v3011 = vpack.c.b16 %v2985, %v2984
        %v3012 = vpack.c.b16 %v2987, %v2986
        %v3013 = vpack.c.b16 %v2989, %v2988
        %v3014 = vpack.c.b16 %v2991, %v2990
        %v3015 = vpack.c.b16 %v2993, %v2992
        %v3016 = vpack.c.b16 %v2995, %v2994
        %v3017 = vpack.c.b16 %v2997, %v2996
        %v3018 = vpack.c.b16 %v2999, %v2998
        %v3019 = vpack.c.b16 %v3001, %v3000
        %v3020 = vpack.c.b16 %v3003, %v3002
        %v3021 = vpack.c.b16 %v3005, %v3004
        %v3023 = vsel %vm745, %v3006, 0
        %v3026 = vsel %vm745, %v3007, 0
        %v3029 = vsel %vm745, %v3008, 0
        %v3032 = vsel %vm745, %v3009, 0
        %v3035 = vsel %vm745, %v3010, 0
        %v3038 = vsel %vm745, %v3011, 0
        %v3041 = vsel %vm745, %v3012, 0
        %v3044 = vsel %vm745, %v3013, 0
        %v3047 = vsel %vm745, %v3014, 0
        %v3050 = vsel %vm745, %v3015, 0
        %v3053 = vsel %vm745, %v3016, 0
        %v3056 = vsel %vm745, %v3017, 0
        %v3059 = vsel %vm745, %v3018, 0
        %v3062 = vsel %vm745, %v3019, 0
        %v3065 = vsel %vm745, %v3020, 0
        %v3068 = vsel %vm745, %v3021, 0
        %v3071 = vand.u32 %v2973, %v797
        %3073 = vmatprep.subr.bf16.mxu0 0
        %3074 = vmatpush1.bf16.msra.mxu0 %v3071
        %3075 = vmatprep.subr.bf16.mxu0 0
        %3076 = vmatpush1.bf16.msra.mxu0 0
        %3077 = vmatprep.subr.bf16.mxu0 0
        %3078 = vmatpush1.bf16.msra.mxu0 0
        %3079 = vmatprep.subr.bf16.mxu0 0
        %3080 = vmatpush1.bf16.msra.mxu0 0
        %3081 = vmatprep.subr.bf16.mxu0 0
        %3082 = vmatpush1.bf16.msra.mxu0 0
        %3083 = vmatprep.subr.bf16.mxu0 0
        %3084 = vmatpush1.bf16.msra.mxu0 0
        %3085 = vmatprep.subr.bf16.mxu0 0
        %3086 = vmatpush1.bf16.msra.mxu0 0
        %3087 = vmatprep.subr.bf16.mxu0 0
        %3088 = vmatpush1.bf16.msra.mxu0 0
        %3089 = vmatprep.subr.bf16.mxu0 0
        %3090 = vmatpush1.bf16.msra.mxu0 0
        %3091 = vmatprep.subr.bf16.mxu0 0
        %3092 = vmatpush1.bf16.msra.mxu0 0
        %3093 = vmatprep.subr.bf16.mxu0 0
        %3094 = vmatpush1.bf16.msra.mxu0 0
        %3095 = vmatprep.subr.bf16.mxu0 0
        %3096 = vmatpush1.bf16.msra.mxu0 0
        %3097 = vmatprep.subr.bf16.mxu0 0
        %3098 = vmatpush1.bf16.msra.mxu0 0
        %3099 = vmatprep.subr.bf16.mxu0 0
        %3100 = vmatpush1.bf16.msra.mxu0 0
        %3101 = vmatprep.subr.bf16.mxu0 0
        %3102 = vmatpush1.bf16.msra.mxu0 0
        %3103 = vmatprep.subr.bf16.mxu0 0
        %3104 = vmatpush1.bf16.msra.mxu0 0
        %3105 = vmatprep.mubr.bf16.mxu0 0
        %3106 = vmatmul.mubr.bf16.gmra.mrb[0].mxu0 %v3023
        %v3107 = vpop.f32.mrb[0].mxu0
        %v3108 = vadd.f32 0.0, %v3107
        %v3109 = vpop.f32.mrb[0].mxu0
        %v3110 = vpop.f32.mrb[0].mxu0
        %v3111 = vadd.f32 0.0, %v3110
        %v3112 = vpop.f32.mrb[0].mxu0
        %3113 = vmatprep.mubr.bf16.mxu0 0
        %3114 = vmatmul.mubr.bf16.gmra.mrb[0].mxu0 %v3026
        %v3115 = vpop.f32.mrb[0].mxu0
        %v3116 = vadd.f32 0.0, %v3115
        %v3117 = vpop.f32.mrb[0].mxu0
        %v3118 = vpop.f32.mrb[0].mxu0
        %v3119 = vadd.f32 0.0, %v3118
        %v3120 = vpop.f32.mrb[0].mxu0
        %3121 = vmatprep.mubr.bf16.mxu0 0
        %3122 = vmatmul.mubr.bf16.gmra.mrb[0].mxu0 %v3029
        %v3123 = vpop.f32.mrb[0].mxu0
        %v3124 = vadd.f32 0.0, %v3123
        %v3125 = vpop.f32.mrb[0].mxu0
        %v3126 = vpop.f32.mrb[0].mxu0
        %v3127 = vadd.f32 0.0, %v3126
        %v3128 = vpop.f32.mrb[0].mxu0
        %3129 = vmatprep.mubr.bf16.mxu0 0
        %3130 = vmatmul.mubr.bf16.gmra.mrb[0].mxu0 %v3032
        %v3131 = vpop.f32.mrb[0].mxu0
        %v3132 = vadd.f32 0.0, %v3131
        %v3133 = vpop.f32.mrb[0].mxu0
        %v3134 = vpop.f32.mrb[0].mxu0
        %v3135 = vadd.f32 0.0, %v3134
        %v3136 = vpop.f32.mrb[0].mxu0
        %3137 = vmatprep.mubr.bf16.mxu0 0
        %3138 = vmatmul.mubr.bf16.gmra.mrb[0].mxu0 %v3035
        %v3139 = vpop.f32.mrb[0].mxu0
        %v3140 = vadd.f32 0.0, %v3139
        %v3141 = vpop.f32.mrb[0].mxu0
        %v3142 = vpop.f32.mrb[0].mxu0
        %v3143 = vadd.f32 0.0, %v3142
        %v3144 = vpop.f32.mrb[0].mxu0
        %3145 = vmatprep.mubr.bf16.mxu0 0
        %3146 = vmatmul.mubr.bf16.gmra.mrb[0].mxu0 %v3038
        %v3147 = vpop.f32.mrb[0].mxu0
        %v3148 = vadd.f32 0.0, %v3147
        %v3149 = vpop.f32.mrb[0].mxu0
        %v3150 = vpop.f32.mrb[0].mxu0
        %v3151 = vadd.f32 0.0, %v3150
        %v3152 = vpop.f32.mrb[0].mxu0
        %3153 = vmatprep.mubr.bf16.mxu0 0
        %3154 = vmatmul.mubr.bf16.gmra.mrb[0].mxu0 %v3041
        %v3155 = vpop.f32.mrb[0].mxu0
        %v3156 = vadd.f32 0.0, %v3155
        %v3157 = vpop.f32.mrb[0].mxu0
        %v3158 = vpop.f32.mrb[0].mxu0
        %v3159 = vadd.f32 0.0, %v3158
        %v3160 = vpop.f32.mrb[0].mxu0
        %3161 = vmatprep.mubr.bf16.mxu0 0
        %3162 = vmatmul.mubr.bf16.gmra.mrb[0].mxu0 %v3044
        %v3163 = vpop.f32.mrb[0].mxu0
        %v3164 = vadd.f32 0.0, %v3163
        %v3165 = vpop.f32.mrb[0].mxu0
        %v3166 = vpop.f32.mrb[0].mxu0
        %v3167 = vadd.f32 0.0, %v3166
        %v3168 = vpop.f32.mrb[0].mxu0
        %3169 = vmatprep.mubr.bf16.mxu0 0
        %3170 = vmatmul.mubr.bf16.gmra.mrb[0].mxu0 %v3047
        %v3171 = vpop.f32.mrb[0].mxu0
        %v3172 = vadd.f32 0.0, %v3171
        %v3173 = vpop.f32.mrb[0].mxu0
        %v3174 = vpop.f32.mrb[0].mxu0
        %v3175 = vadd.f32 0.0, %v3174
        %v3176 = vpop.f32.mrb[0].mxu0
        %3177 = vmatprep.mubr.bf16.mxu0 0
        %3178 = vmatmul.mubr.bf16.gmra.mrb[0].mxu0 %v3050
        %v3179 = vpop.f32.mrb[0].mxu0
        %v3180 = vadd.f32 0.0, %v3179
        %v3181 = vpop.f32.mrb[0].mxu0
        %v3182 = vpop.f32.mrb[0].mxu0
        %v3183 = vadd.f32 0.0, %v3182
        %v3184 = vpop.f32.mrb[0].mxu0
        %3185 = vmatprep.mubr.bf16.mxu0 0
        %3186 = vmatmul.mubr.bf16.gmra.mrb[0].mxu0 %v3053
        %v3187 = vpop.f32.mrb[0].mxu0
        %v3188 = vadd.f32 0.0, %v3187
        %v3189 = vpop.f32.mrb[0].mxu0
        %v3190 = vpop.f32.mrb[0].mxu0
        %v3191 = vadd.f32 0.0, %v3190
        %v3192 = vpop.f32.mrb[0].mxu0
        %3193 = vmatprep.mubr.bf16.mxu0 0
        %3194 = vmatmul.mubr.bf16.gmra.mrb[0].mxu0 %v3056
        %v3195 = vpop.f32.mrb[0].mxu0
        %v3196 = vadd.f32 0.0, %v3195
        %v3197 = vpop.f32.mrb[0].mxu0
        %v3198 = vpop.f32.mrb[0].mxu0
        %v3199 = vadd.f32 0.0, %v3198
        %v3200 = vpop.f32.mrb[0].mxu0
        %3201 = vmatprep.mubr.bf16.mxu0 0
        %3202 = vmatmul.mubr.bf16.gmra.mrb[0].mxu0 %v3059
        %v3203 = vpop.f32.mrb[0].mxu0
        %v3204 = vadd.f32 0.0, %v3203
        %v3205 = vpop.f32.mrb[0].mxu0
        %v3206 = vpop.f32.mrb[0].mxu0
        %v3207 = vadd.f32 0.0, %v3206
        %v3208 = vpop.f32.mrb[0].mxu0
        %3209 = vmatprep.mubr.bf16.mxu0 0
        %3210 = vmatmul.mubr.bf16.gmra.mrb[0].mxu0 %v3062
        %v3211 = vpop.f32.mrb[0].mxu0
        %v3212 = vadd.f32 0.0, %v3211
        %v3213 = vpop.f32.mrb[0].mxu0
        %v3214 = vpop.f32.mrb[0].mxu0
        %v3215 = vadd.f32 0.0, %v3214
        %v3216 = vpop.f32.mrb[0].mxu0
        %3217 = vmatprep.mubr.bf16.mxu0 0
        %3218 = vmatmul.mubr.bf16.gmra.mrb[0].mxu0 %v3065
        %v3219 = vpop.f32.mrb[0].mxu0
        %v3220 = vadd.f32 0.0, %v3219
        %v3221 = vpop.f32.mrb[0].mxu0
        %v3222 = vpop.f32.mrb[0].mxu0
        %v3223 = vadd.f32 0.0, %v3222
        %v3224 = vpop.f32.mrb[0].mxu0
        %3225 = vmatprep.mubr.bf16.mxu0 0
        %3226 = vmatmul.mubr.bf16.gmra.mrb[0].mxu0 %v3068
        %v3227 = vpop.f32.mrb[0].mxu0
        %v3228 = vadd.f32 0.0, %v3227
        %v3229 = vpop.f32.mrb[0].mxu0
        %v3230 = vpop.f32.mrb[0].mxu0
        %v3231 = vadd.f32 0.0, %v3230
        %v3232 = vpop.f32.mrb[0].mxu0
        %3233 = vdwg.mxu0
        %v3234 = vadd.f32 %v2764, %v3108
        %v3235 = vadd.f32 %v2765, %v3111
        %v3236 = vadd.f32 %v2766, %v3116
        %v3237 = vadd.f32 %v2767, %v3119
        %v3238 = vadd.f32 %v2768, %v3124
        %v3239 = vadd.f32 %v2769, %v3127
        %v3240 = vadd.f32 %v2770, %v3132
        %v3241 = vadd.f32 %v2771, %v3135
        %v3242 = vadd.f32 %v2772, %v3140
        %v3243 = vadd.f32 %v2773, %v3143
        %v3244 = vadd.f32 %v2774, %v3148
        %v3245 = vadd.f32 %v2775, %v3151
        %v3246 = vadd.f32 %v2776, %v3156
        %v3247 = vadd.f32 %v2777, %v3159
        %v3248 = vadd.f32 %v2778, %v3164
        %v3249 = vadd.f32 %v2779, %v3167
        %v3250 = vadd.f32 %v2780, %v3172
        %v3251 = vadd.f32 %v2781, %v3175
        %v3252 = vadd.f32 %v2782, %v3180
        %v3253 = vadd.f32 %v2783, %v3183
        %v3254 = vadd.f32 %v2784, %v3188
        %v3255 = vadd.f32 %v2785, %v3191
        %v3256 = vadd.f32 %v2786, %v3196
        %v3257 = vadd.f32 %v2787, %v3199
        %v3258 = vadd.f32 %v2788, %v3204
        %v3259 = vadd.f32 %v2789, %v3207
        %v3260 = vadd.f32 %v2790, %v3212
        %v3261 = vadd.f32 %v2791, %v3215
        %v3262 = vadd.f32 %v2792, %v3220
        %v3263 = vadd.f32 %v2793, %v3223
        %v3264 = vadd.f32 %v2794, %v3228
        %v3265 = vadd.f32 %v2795, %v3231
        %s3266 = scalar_lea.vmem %s246, 24
        %v3267 = vld [vmem:[%s3266] sm:$0xf]
        %v3268 = vld [vmem:[%s3266 + $0x4] sm:$0xf]
        %v3269 = vld [vmem:[%s3266 + $0xc] sm:$0xf]
        %v3270 = vld [vmem:[%s3266 + $0x10] sm:$0xf]
        %v3271 = vld [vmem:[%s3266 + $0x18] sm:$0xf]
        %v3272 = vld [vmem:[%s3266 + $0x1c] sm:$0xf]
        %v3273 = vld [vmem:[%s3266 + $0x24] sm:$0xf]
        %v3274 = vld [vmem:[%s3266 + $0x28] sm:$0xf]
        %v3275 = vld [vmem:[%s3266 + $0x30] sm:$0xf]
        %v3276 = vld [vmem:[%s3266 + $0x34] sm:$0xf]
        %v3277 = vld [vmem:[%s3266 + $0x3c] sm:$0xf]
        %v3278 = vld [vmem:[%s3266 + $0x40] sm:$0xf]
        %v3279 = vld [vmem:[%s3266 + $0x48] sm:$0xf]
        %v3280 = vld [vmem:[%s3266 + $0x4c] sm:$0xf]
        %v3281 = vld [vmem:[%s3266 + $0x54] sm:$0xf]
        %v3282 = vld [vmem:[%s3266 + $0x58] sm:$0xf]
        %v3283 = vld [vmem:[%s3266 + $0x60] sm:$0xf]
        %v3284 = vld [vmem:[%s3266 + $0x64] sm:$0xf]
        %v3285 = vld [vmem:[%s3266 + $0x6c] sm:$0xf]
        %v3286 = vld [vmem:[%s3266 + $0x70] sm:$0xf]
        %v3287 = vld [vmem:[%s3266 + $0x78] sm:$0xf]
        %v3288 = vld [vmem:[%s3266 + $0x7c] sm:$0xf]
        %v3289 = vld [vmem:[%s3266 + $0x84] sm:$0xf]
        %v3290 = vld [vmem:[%s3266 + $0x88] sm:$0xf]
        %v3291 = vld [vmem:[%s3266 + $0x90] sm:$0xf]
        %v3292 = vld [vmem:[%s3266 + $0x94] sm:$0xf]
        %v3293 = vld [vmem:[%s3266 + $0x9c] sm:$0xf]
        %v3294 = vld [vmem:[%s3266 + $0xa0] sm:$0xf]
        %v3295 = vld [vmem:[%s3266 + $0xa8] sm:$0xf]
        %v3296 = vld [vmem:[%s3266 + $0xac] sm:$0xf]
        %v3297 = vld [vmem:[%s3266 + $0xb4] sm:$0xf]
        %v3298 = vld [vmem:[%s3266 + $0xb8] sm:$0xf]
        %s3299 = scalar_lea.vmem %s251, 12
        %v3300 = vld [vmem:[%s3299] sm:$0x3]
        %v3333 = vunpack.c.l.b16 %v3267
        %v3334 = vunpack.c.l.b16 %v3268
        %v3335 = vunpack.c.l.b16 %v3269
        %v3336 = vunpack.c.l.b16 %v3270
        %v3337 = vunpack.c.l.b16 %v3271
        %v3338 = vunpack.c.l.b16 %v3272
        %v3339 = vunpack.c.l.b16 %v3273
        %v3340 = vunpack.c.l.b16 %v3274
        %v3341 = vunpack.c.l.b16 %v3275
        %v3342 = vunpack.c.l.b16 %v3276
        %v3343 = vunpack.c.l.b16 %v3277
        %v3344 = vunpack.c.l.b16 %v3278
        %v3345 = vunpack.c.l.b16 %v3279
        %v3346 = vunpack.c.l.b16 %v3280
        %v3347 = vunpack.c.l.b16 %v3281
        %v3348 = vunpack.c.l.b16 %v3282
        %v3349 = vunpack.c.l.b16 %v3283
        %v3350 = vunpack.c.l.b16 %v3284
        %v3351 = vunpack.c.l.b16 %v3285
        %v3352 = vunpack.c.l.b16 %v3286
        %v3353 = vunpack.c.l.b16 %v3287
        %v3354 = vunpack.c.l.b16 %v3288
        %v3355 = vunpack.c.l.b16 %v3289
        %v3356 = vunpack.c.l.b16 %v3290
        %v3357 = vunpack.c.l.b16 %v3291
        %v3358 = vunpack.c.l.b16 %v3292
        %v3359 = vunpack.c.l.b16 %v3293
        %v3360 = vunpack.c.l.b16 %v3294
        %v3361 = vunpack.c.l.b16 %v3295
        %v3362 = vunpack.c.l.b16 %v3296
        %v3363 = vunpack.c.l.b16 %v3297
        %v3364 = vunpack.c.l.b16 %v3298
        %v3365 = vpack.c.b16 %v3334, %v3333
        %v3366 = vpack.c.b16 %v3336, %v3335
        %v3367 = vpack.c.b16 %v3338, %v3337
        %v3368 = vpack.c.b16 %v3340, %v3339
        %v3369 = vpack.c.b16 %v3342, %v3341
        %v3370 = vpack.c.b16 %v3344, %v3343
        %v3371 = vpack.c.b16 %v3346, %v3345
        %v3372 = vpack.c.b16 %v3348, %v3347
        %v3373 = vpack.c.b16 %v3350, %v3349
        %v3374 = vpack.c.b16 %v3352, %v3351
        %v3375 = vpack.c.b16 %v3354, %v3353
        %v3376 = vpack.c.b16 %v3356, %v3355
        %v3377 = vpack.c.b16 %v3358, %v3357
        %v3378 = vpack.c.b16 %v3360, %v3359
        %v3379 = vpack.c.b16 %v3362, %v3361
        %v3380 = vpack.c.b16 %v3364, %v3363
        %v3382 = vsel %vm745, %v3365, 0
        %v3385 = vsel %vm745, %v3366, 0
        %v3388 = vsel %vm745, %v3367, 0
        %v3391 = vsel %vm745, %v3368, 0
        %v3394 = vsel %vm745, %v3369, 0
        %v3397 = vsel %vm745, %v3370, 0
        %v3400 = vsel %vm745, %v3371, 0
        %v3403 = vsel %vm745, %v3372, 0
        %v3406 = vsel %vm745, %v3373, 0
        %v3409 = vsel %vm745, %v3374, 0
        %v3412 = vsel %vm745, %v3375, 0
        %v3415 = vsel %vm745, %v3376, 0
        %v3418 = vsel %vm745, %v3377, 0
        %v3421 = vsel %vm745, %v3378, 0
        %v3424 = vsel %vm745, %v3379, 0
        %v3427 = vsel %vm745, %v3380, 0
        %v3430 = vand.u32 %v3300, %v797
        %3432 = vmatprep.subr.bf16.mxu0 0
        %3433 = vmatpush1.bf16.msra.mxu0 %v3430
        %3434 = vmatprep.subr.bf16.mxu0 0
        %3435 = vmatpush1.bf16.msra.mxu0 0
        %3436 = vmatprep.subr.bf16.mxu0 0
        %3437 = vmatpush1.bf16.msra.mxu0 0
        %3438 = vmatprep.subr.bf16.mxu0 0
        %3439 = vmatpush1.bf16.msra.mxu0 0
        %3440 = vmatprep.subr.bf16.mxu0 0
        %3441 = vmatpush1.bf16.msra.mxu0 0
        %3442 = vmatprep.subr.bf16.mxu0 0
        %3443 = vmatpush1.bf16.msra.mxu0 0
        %3444 = vmatprep.subr.bf16.mxu0 0
        %3445 = vmatpush1.bf16.msra.mxu0 0
        %3446 = vmatprep.subr.bf16.mxu0 0
        %3447 = vmatpush1.bf16.msra.mxu0 0
        %3448 = vmatprep.subr.bf16.mxu0 0
        %3449 = vmatpush1.bf16.msra.mxu0 0
        %3450 = vmatprep.subr.bf16.mxu0 0
        %3451 = vmatpush1.bf16.msra.mxu0 0
        %3452 = vmatprep.subr.bf16.mxu0 0
        %3453 = vmatpush1.bf16.msra.mxu0 0
        %3454 = vmatprep.subr.bf16.mxu0 0
        %3455 = vmatpush1.bf16.msra.mxu0 0
        %3456 = vmatprep.subr.bf16.mxu0 0
        %3457 = vmatpush1.bf16.msra.mxu0 0
        %3458 = vmatprep.subr.bf16.mxu0 0
        %3459 = vmatpush1.bf16.msra.mxu0 0
        %3460 = vmatprep.subr.bf16.mxu0 0
        %3461 = vmatpush1.bf16.msra.mxu0 0
        %3462 = vmatprep.subr.bf16.mxu0 0
        %3463 = vmatpush1.bf16.msra.mxu0 0
        %3464 = vmatprep.mubr.bf16.mxu0 0
        %3465 = vmatmul.mubr.bf16.gmra.mrb[0].mxu0 %v3382
        %v3466 = vpop.f32.mrb[0].mxu0
        %v3467 = vadd.f32 0.0, %v3466
        %v3468 = vpop.f32.mrb[0].mxu0
        %v3469 = vpop.f32.mrb[0].mxu0
        %v3470 = vadd.f32 0.0, %v3469
        %v3471 = vpop.f32.mrb[0].mxu0
        %3472 = vmatprep.mubr.bf16.mxu0 0
        %3473 = vmatmul.mubr.bf16.gmra.mrb[0].mxu0 %v3385
        %v3474 = vpop.f32.mrb[0].mxu0
        %v3475 = vadd.f32 0.0, %v3474
        %v3476 = vpop.f32.mrb[0].mxu0
        %v3477 = vpop.f32.mrb[0].mxu0
        %v3478 = vadd.f32 0.0, %v3477
        %v3479 = vpop.f32.mrb[0].mxu0
        %3480 = vmatprep.mubr.bf16.mxu0 0
        %3481 = vmatmul.mubr.bf16.gmra.mrb[0].mxu0 %v3388
        %v3482 = vpop.f32.mrb[0].mxu0
        %v3483 = vadd.f32 0.0, %v3482
        %v3484 = vpop.f32.mrb[0].mxu0
        %v3485 = vpop.f32.mrb[0].mxu0
        %v3486 = vadd.f32 0.0, %v3485
        %v3487 = vpop.f32.mrb[0].mxu0
        %3488 = vmatprep.mubr.bf16.mxu0 0
        %3489 = vmatmul.mubr.bf16.gmra.mrb[0].mxu0 %v3391
        %v3490 = vpop.f32.mrb[0].mxu0
        %v3491 = vadd.f32 0.0, %v3490
        %v3492 = vpop.f32.mrb[0].mxu0
        %v3493 = vpop.f32.mrb[0].mxu0
        %v3494 = vadd.f32 0.0, %v3493
        %v3495 = vpop.f32.mrb[0].mxu0
        %3496 = vmatprep.mubr.bf16.mxu0 0
        %3497 = vmatmul.mubr.bf16.gmra.mrb[0].mxu0 %v3394
        %v3498 = vpop.f32.mrb[0].mxu0
        %v3499 = vadd.f32 0.0, %v3498
        %v3500 = vpop.f32.mrb[0].mxu0
        %v3501 = vpop.f32.mrb[0].mxu0
        %v3502 = vadd.f32 0.0, %v3501
        %v3503 = vpop.f32.mrb[0].mxu0
        %3504 = vmatprep.mubr.bf16.mxu0 0
        %3505 = vmatmul.mubr.bf16.gmra.mrb[0].mxu0 %v3397
        %v3506 = vpop.f32.mrb[0].mxu0
        %v3507 = vadd.f32 0.0, %v3506
        %v3508 = vpop.f32.mrb[0].mxu0
        %v3509 = vpop.f32.mrb[0].mxu0
        %v3510 = vadd.f32 0.0, %v3509
        %v3511 = vpop.f32.mrb[0].mxu0
        %3512 = vmatprep.mubr.bf16.mxu0 0
        %3513 = vmatmul.mubr.bf16.gmra.mrb[0].mxu0 %v3400
        %v3514 = vpop.f32.mrb[0].mxu0
        %v3515 = vadd.f32 0.0, %v3514
        %v3516 = vpop.f32.mrb[0].mxu0
        %v3517 = vpop.f32.mrb[0].mxu0
        %v3518 = vadd.f32 0.0, %v3517
        %v3519 = vpop.f32.mrb[0].mxu0
        %3520 = vmatprep.mubr.bf16.mxu0 0
        %3521 = vmatmul.mubr.bf16.gmra.mrb[0].mxu0 %v3403
        %v3522 = vpop.f32.mrb[0].mxu0
        %v3523 = vadd.f32 0.0, %v3522
        %v3524 = vpop.f32.mrb[0].mxu0
        %v3525 = vpop.f32.mrb[0].mxu0
        %v3526 = vadd.f32 0.0, %v3525
        %v3527 = vpop.f32.mrb[0].mxu0
        %3528 = vmatprep.mubr.bf16.mxu0 0
        %3529 = vmatmul.mubr.bf16.gmra.mrb[0].mxu0 %v3406
        %v3530 = vpop.f32.mrb[0].mxu0
        %v3531 = vadd.f32 0.0, %v3530
        %v3532 = vpop.f32.mrb[0].mxu0
        %v3533 = vpop.f32.mrb[0].mxu0
        %v3534 = vadd.f32 0.0, %v3533
        %v3535 = vpop.f32.mrb[0].mxu0
        %3536 = vmatprep.mubr.bf16.mxu0 0
        %3537 = vmatmul.mubr.bf16.gmra.mrb[0].mxu0 %v3409
        %v3538 = vpop.f32.mrb[0].mxu0
        %v3539 = vadd.f32 0.0, %v3538
        %v3540 = vpop.f32.mrb[0].mxu0
        %v3541 = vpop.f32.mrb[0].mxu0
        %v3542 = vadd.f32 0.0, %v3541
        %v3543 = vpop.f32.mrb[0].mxu0
        %3544 = vmatprep.mubr.bf16.mxu0 0
        %3545 = vmatmul.mubr.bf16.gmra.mrb[0].mxu0 %v3412
        %v3546 = vpop.f32.mrb[0].mxu0
        %v3547 = vadd.f32 0.0, %v3546
        %v3548 = vpop.f32.mrb[0].mxu0
        %v3549 = vpop.f32.mrb[0].mxu0
        %v3550 = vadd.f32 0.0, %v3549
        %v3551 = vpop.f32.mrb[0].mxu0
        %3552 = vmatprep.mubr.bf16.mxu0 0
        %3553 = vmatmul.mubr.bf16.gmra.mrb[0].mxu0 %v3415
        %v3554 = vpop.f32.mrb[0].mxu0
        %v3555 = vadd.f32 0.0, %v3554
        %v3556 = vpop.f32.mrb[0].mxu0
        %v3557 = vpop.f32.mrb[0].mxu0
        %v3558 = vadd.f32 0.0, %v3557
        %v3559 = vpop.f32.mrb[0].mxu0
        %3560 = vmatprep.mubr.bf16.mxu0 0
        %3561 = vmatmul.mubr.bf16.gmra.mrb[0].mxu0 %v3418
        %v3562 = vpop.f32.mrb[0].mxu0
        %v3563 = vadd.f32 0.0, %v3562
        %v3564 = vpop.f32.mrb[0].mxu0
        %v3565 = vpop.f32.mrb[0].mxu0
        %v3566 = vadd.f32 0.0, %v3565
        %v3567 = vpop.f32.mrb[0].mxu0
        %3568 = vmatprep.mubr.bf16.mxu0 0
        %3569 = vmatmul.mubr.bf16.gmra.mrb[0].mxu0 %v3421
        %v3570 = vpop.f32.mrb[0].mxu0
        %v3571 = vadd.f32 0.0, %v3570
        %v3572 = vpop.f32.mrb[0].mxu0
        %v3573 = vpop.f32.mrb[0].mxu0
        %v3574 = vadd.f32 0.0, %v3573
        %v3575 = vpop.f32.mrb[0].mxu0
        %3576 = vmatprep.mubr.bf16.mxu0 0
        %3577 = vmatmul.mubr.bf16.gmra.mrb[0].mxu0 %v3424
        %v3578 = vpop.f32.mrb[0].mxu0
        %v3579 = vadd.f32 0.0, %v3578
        %v3580 = vpop.f32.mrb[0].mxu0
        %v3581 = vpop.f32.mrb[0].mxu0
        %v3582 = vadd.f32 0.0, %v3581
        %v3583 = vpop.f32.mrb[0].mxu0
        %3584 = vmatprep.mubr.bf16.mxu0 0
        %3585 = vmatmul.mubr.bf16.gmra.mrb[0].mxu0 %v3427
        %v3586 = vpop.f32.mrb[0].mxu0
        %v3587 = vadd.f32 0.0, %v3586
        %v3588 = vpop.f32.mrb[0].mxu0
        %v3589 = vpop.f32.mrb[0].mxu0
        %v3590 = vadd.f32 0.0, %v3589
        %v3591 = vpop.f32.mrb[0].mxu0
        %3592 = vdwg.mxu0
        %v3593 = vadd.f32 %v3234, %v3467
        %v3594 = vadd.f32 %v3235, %v3470
        %v3595 = vadd.f32 %v3236, %v3475
        %v3596 = vadd.f32 %v3237, %v3478
        %v3597 = vadd.f32 %v3238, %v3483
        %v3598 = vadd.f32 %v3239, %v3486
        %v3599 = vadd.f32 %v3240, %v3491
        %v3600 = vadd.f32 %v3241, %v3494
        %v3601 = vadd.f32 %v3242, %v3499
        %v3602 = vadd.f32 %v3243, %v3502
        %v3603 = vadd.f32 %v3244, %v3507
        %v3604 = vadd.f32 %v3245, %v3510
        %v3605 = vadd.f32 %v3246, %v3515
        %v3606 = vadd.f32 %v3247, %v3518
        %v3607 = vadd.f32 %v3248, %v3523
        %v3608 = vadd.f32 %v3249, %v3526
        %v3609 = vadd.f32 %v3250, %v3531
        %v3610 = vadd.f32 %v3251, %v3534
        %v3611 = vadd.f32 %v3252, %v3539
        %v3612 = vadd.f32 %v3253, %v3542
        %v3613 = vadd.f32 %v3254, %v3547
        %v3614 = vadd.f32 %v3255, %v3550
        %v3615 = vadd.f32 %v3256, %v3555
        %v3616 = vadd.f32 %v3257, %v3558
        %v3617 = vadd.f32 %v3258, %v3563
        %v3618 = vadd.f32 %v3259, %v3566
        %v3619 = vadd.f32 %v3260, %v3571
        %v3620 = vadd.f32 %v3261, %v3574
        %v3621 = vadd.f32 %v3262, %v3579
        %v3622 = vadd.f32 %v3263, %v3582
        %v3623 = vadd.f32 %v3264, %v3587
        %v3624 = vadd.f32 %v3265, %v3590
        %v3625 = vld [vmem:[%s3266] sm:$0xf]
        %v3626 = vld [vmem:[%s3266 + $0x4] sm:$0xf]
        %v3627 = vld [vmem:[%s3266 + $0x8] sm:$0x1]
        %v3628 = vld [vmem:[%s3266 + $0xc] sm:$0xf]
        %v3629 = vld [vmem:[%s3266 + $0x10] sm:$0xf]
        %v3630 = vld [vmem:[%s3266 + $0x14] sm:$0x1]
        %v3631 = vld [vmem:[%s3266 + $0x18] sm:$0xf]
        %v3632 = vld [vmem:[%s3266 + $0x1c] sm:$0xf]
        %v3633 = vld [vmem:[%s3266 + $0x20] sm:$0x1]
        %v3634 = vld [vmem:[%s3266 + $0x24] sm:$0xf]
        %v3635 = vld [vmem:[%s3266 + $0x28] sm:$0xf]
        %v3636 = vld [vmem:[%s3266 + $0x2c] sm:$0x1]
        %v3637 = vld [vmem:[%s3266 + $0x30] sm:$0xf]
        %v3638 = vld [vmem:[%s3266 + $0x34] sm:$0xf]
        %v3639 = vld [vmem:[%s3266 + $0x38] sm:$0x1]
        %v3640 = vld [vmem:[%s3266 + $0x3c] sm:$0xf]
        %v3641 = vld [vmem:[%s3266 + $0x40] sm:$0xf]
        %v3642 = vld [vmem:[%s3266 + $0x44] sm:$0x1]
        %v3643 = vld [vmem:[%s3266 + $0x48] sm:$0xf]
        %v3644 = vld [vmem:[%s3266 + $0x4c] sm:$0xf]
        %v3645 = vld [vmem:[%s3266 + $0x50] sm:$0x1]
        %v3646 = vld [vmem:[%s3266 + $0x54] sm:$0xf]
        %v3647 = vld [vmem:[%s3266 + $0x58] sm:$0xf]
        %v3648 = vld [vmem:[%s3266 + $0x5c] sm:$0x1]
        %v3649 = vld [vmem:[%s3266 + $0x60] sm:$0xf]
        %v3650 = vld [vmem:[%s3266 + $0x64] sm:$0xf]
        %v3651 = vld [vmem:[%s3266 + $0x68] sm:$0x1]
        %v3652 = vld [vmem:[%s3266 + $0x6c] sm:$0xf]
        %v3653 = vld [vmem:[%s3266 + $0x70] sm:$0xf]
        %v3654 = vld [vmem:[%s3266 + $0x74] sm:$0x1]
        %v3655 = vld [vmem:[%s3266 + $0x78] sm:$0xf]
        %v3656 = vld [vmem:[%s3266 + $0x7c] sm:$0xf]
        %v3657 = vld [vmem:[%s3266 + $0x80] sm:$0x1]
        %v3658 = vld [vmem:[%s3266 + $0x84] sm:$0xf]
        %v3659 = vld [vmem:[%s3266 + $0x88] sm:$0xf]
        %v3660 = vld [vmem:[%s3266 + $0x8c] sm:$0x1]
        %v3661 = vld [vmem:[%s3266 + $0x90] sm:$0xf]
        %v3662 = vld [vmem:[%s3266 + $0x94] sm:$0xf]
        %v3663 = vld [vmem:[%s3266 + $0x98] sm:$0x1]
        %v3664 = vld [vmem:[%s3266 + $0x9c] sm:$0xf]
        %v3665 = vld [vmem:[%s3266 + $0xa0] sm:$0xf]
        %v3666 = vld [vmem:[%s3266 + $0xa4] sm:$0x1]
        %v3667 = vld [vmem:[%s3266 + $0xa8] sm:$0xf]
        %v3668 = vld [vmem:[%s3266 + $0xac] sm:$0xf]
        %v3669 = vld [vmem:[%s3266 + $0xb0] sm:$0x1]
        %v3670 = vld [vmem:[%s3266 + $0xb4] sm:$0xf]
        %v3671 = vld [vmem:[%s3266 + $0xb8] sm:$0xf]
        %v3672 = vld [vmem:[%s3266 + $0xbc] sm:$0x1]
        %v3674 = vshrl.u32 %v3625, 16
        %v3676 = vrot.slane %v3674, 4
        %v3677 = vshll.u32 %v3625, 16
        %v3679 = vrot.slane %v3677, 5
        %v3680 = vor.u32 %v3676, %v3679
        %v3681 = vrot.slane %v3680, 4
        %v3683 = vshll.u32 %v3626, 16
        %v3685 = vrot.slane %v3683, 5
        %v3686 = vsel %vm310, %v3681, %v3685
        %v3687 = vshrl.u32 %v3626, 16
        %v3689 = vrot.slane %v3687, 4
        %v3690 = vor.u32 %v3689, %v3685
        %v3691 = vrot.slane %v3690, 4
        %v3693 = vshll.u32 %v3627, 16
        %v3695 = vrot.slane %v3693, 5
        %v3696 = vsel %vm310, %v3691, %v3695
        %v3698 = vshrl.u32 %v3628, 16
        %v3700 = vrot.slane %v3698, 4
        %v3701 = vshll.u32 %v3628, 16
        %v3703 = vrot.slane %v3701, 5
        %v3704 = vor.u32 %v3700, %v3703
        %v3705 = vrot.slane %v3704, 4
        %v3707 = vshll.u32 %v3629, 16
        %v3709 = vrot.slane %v3707, 5
        %v3710 = vsel %vm310, %v3705, %v3709
        %v3711 = vshrl.u32 %v3629, 16
        %v3713 = vrot.slane %v3711, 4
        %v3714 = vor.u32 %v3713, %v3709
        %v3715 = vrot.slane %v3714, 4
        %v3717 = vshll.u32 %v3630, 16
        %v3719 = vrot.slane %v3717, 5
        %v3720 = vsel %vm310, %v3715, %v3719
        %v3722 = vshrl.u32 %v3631, 16
        %v3724 = vrot.slane %v3722, 4
        %v3725 = vshll.u32 %v3631, 16
        %v3727 = vrot.slane %v3725, 5
        %v3728 = vor.u32 %v3724, %v3727
        %v3729 = vrot.slane %v3728, 4
        %v3731 = vshll.u32 %v3632, 16
        %v3733 = vrot.slane %v3731, 5
        %v3734 = vsel %vm310, %v3729, %v3733
        %v3735 = vshrl.u32 %v3632, 16
        %v3737 = vrot.slane %v3735, 4
        %v3738 = vor.u32 %v3737, %v3733
        %v3739 = vrot.slane %v3738, 4
        %v3741 = vshll.u32 %v3633, 16
        %v3743 = vrot.slane %v3741, 5
        %v3744 = vsel %vm310, %v3739, %v3743
        %v3746 = vshrl.u32 %v3634, 16
        %v3748 = vrot.slane %v3746, 4
        %v3749 = vshll.u32 %v3634, 16
        %v3751 = vrot.slane %v3749, 5
        %v3752 = vor.u32 %v3748, %v3751
        %v3753 = vrot.slane %v3752, 4
        %v3755 = vshll.u32 %v3635, 16
        %v3757 = vrot.slane %v3755, 5
        %v3758 = vsel %vm310, %v3753, %v3757
        %v3759 = vshrl.u32 %v3635, 16
        %v3761 = vrot.slane %v3759, 4
        %v3762 = vor.u32 %v3761, %v3757
        %v3763 = vrot.slane %v3762, 4
        %v3765 = vshll.u32 %v3636, 16
        %v3767 = vrot.slane %v3765, 5
        %v3768 = vsel %vm310, %v3763, %v3767
        %v3770 = vshrl.u32 %v3637, 16
        %v3772 = vrot.slane %v3770, 4
        %v3773 = vshll.u32 %v3637, 16
        %v3775 = vrot.slane %v3773, 5
        %v3776 = vor.u32 %v3772, %v3775
        %v3777 = vrot.slane %v3776, 4
        %v3779 = vshll.u32 %v3638, 16
        %v3781 = vrot.slane %v3779, 5
        %v3782 = vsel %vm310, %v3777, %v3781
        %v3783 = vshrl.u32 %v3638, 16
        %v3785 = vrot.slane %v3783, 4
        %v3786 = vor.u32 %v3785, %v3781
        %v3787 = vrot.slane %v3786, 4
        %v3789 = vshll.u32 %v3639, 16
        %v3791 = vrot.slane %v3789, 5
        %v3792 = vsel %vm310, %v3787, %v3791
        %v3794 = vshrl.u32 %v3640, 16
        %v3796 = vrot.slane %v3794, 4
        %v3797 = vshll.u32 %v3640, 16
        %v3799 = vrot.slane %v3797, 5
        %v3800 = vor.u32 %v3796, %v3799
        %v3801 = vrot.slane %v3800, 4
        %v3803 = vshll.u32 %v3641, 16
        %v3805 = vrot.slane %v3803, 5
        %v3806 = vsel %vm310, %v3801, %v3805
        %v3807 = vshrl.u32 %v3641, 16
        %v3809 = vrot.slane %v3807, 4
        %v3810 = vor.u32 %v3809, %v3805
        %v3811 = vrot.slane %v3810, 4
        %v3813 = vshll.u32 %v3642, 16
        %v3815 = vrot.slane %v3813, 5
        %v3816 = vsel %vm310, %v3811, %v3815
        %v3818 = vshrl.u32 %v3643, 16
        %v3820 = vrot.slane %v3818, 4
        %v3821 = vshll.u32 %v3643, 16
        %v3823 = vrot.slane %v3821, 5
        %v3824 = vor.u32 %v3820, %v3823
        %v3825 = vrot.slane %v3824, 4
        %v3827 = vshll.u32 %v3644, 16
        %v3829 = vrot.slane %v3827, 5
        %v3830 = vsel %vm310, %v3825, %v3829
        %v3831 = vshrl.u32 %v3644, 16
        %v3833 = vrot.slane %v3831, 4
        %v3834 = vor.u32 %v3833, %v3829
        %v3835 = vrot.slane %v3834, 4
        %v3837 = vshll.u32 %v3645, 16
        %v3839 = vrot.slane %v3837, 5
        %v3840 = vsel %vm310, %v3835, %v3839
        %v3842 = vshrl.u32 %v3646, 16
        %v3844 = vrot.slane %v3842, 4
        %v3845 = vshll.u32 %v3646, 16
        %v3847 = vrot.slane %v3845, 5
        %v3848 = vor.u32 %v3844, %v3847
        %v3849 = vrot.slane %v3848, 4
        %v3851 = vshll.u32 %v3647, 16
        %v3853 = vrot.slane %v3851, 5
        %v3854 = vsel %vm310, %v3849, %v3853
        %v3855 = vshrl.u32 %v3647, 16
        %v3857 = vrot.slane %v3855, 4
        %v3858 = vor.u32 %v3857, %v3853
        %v3859 = vrot.slane %v3858, 4
        %v3861 = vshll.u32 %v3648, 16
        %v3863 = vrot.slane %v3861, 5
        %v3864 = vsel %vm310, %v3859, %v3863
        %v3866 = vshrl.u32 %v3649, 16
        %v3868 = vrot.slane %v3866, 4
        %v3869 = vshll.u32 %v3649, 16
        %v3871 = vrot.slane %v3869, 5
        %v3872 = vor.u32 %v3868, %v3871
        %v3873 = vrot.slane %v3872, 4
        %v3875 = vshll.u32 %v3650, 16
        %v3877 = vrot.slane %v3875, 5
        %v3878 = vsel %vm310, %v3873, %v3877
        %v3879 = vshrl.u32 %v3650, 16
        %v3881 = vrot.slane %v3879, 4
        %v3882 = vor.u32 %v3881, %v3877
        %v3883 = vrot.slane %v3882, 4
        %v3885 = vshll.u32 %v3651, 16
        %v3887 = vrot.slane %v3885, 5
        %v3888 = vsel %vm310, %v3883, %v3887
        %v3890 = vshrl.u32 %v3652, 16
        %v3892 = vrot.slane %v3890, 4
        %v3893 = vshll.u32 %v3652, 16
        %v3895 = vrot.slane %v3893, 5
        %v3896 = vor.u32 %v3892, %v3895
        %v3897 = vrot.slane %v3896, 4
        %v3899 = vshll.u32 %v3653, 16
        %v3901 = vrot.slane %v3899, 5
        %v3902 = vsel %vm310, %v3897, %v3901
        %v3903 = vshrl.u32 %v3653, 16
        %v3905 = vrot.slane %v3903, 4
        %v3906 = vor.u32 %v3905, %v3901
        %v3907 = vrot.slane %v3906, 4
        %v3909 = vshll.u32 %v3654, 16
        %v3911 = vrot.slane %v3909, 5
        %v3912 = vsel %vm310, %v3907, %v3911
        %v3914 = vshrl.u32 %v3655, 16
        %v3916 = vrot.slane %v3914, 4
        %v3917 = vshll.u32 %v3655, 16
        %v3919 = vrot.slane %v3917, 5
        %v3920 = vor.u32 %v3916, %v3919
        %v3921 = vrot.slane %v3920, 4
        %v3923 = vshll.u32 %v3656, 16
        %v3925 = vrot.slane %v3923, 5
        %v3926 = vsel %vm310, %v3921, %v3925
        %v3927 = vshrl.u32 %v3656, 16
        %v3929 = vrot.slane %v3927, 4
        %v3930 = vor.u32 %v3929, %v3925
        %v3931 = vrot.slane %v3930, 4
        %v3933 = vshll.u32 %v3657, 16
        %v3935 = vrot.slane %v3933, 5
        %v3936 = vsel %vm310, %v3931, %v3935
        %v3938 = vshrl.u32 %v3658, 16
        %v3940 = vrot.slane %v3938, 4
        %v3941 = vshll.u32 %v3658, 16
        %v3943 = vrot.slane %v3941, 5
        %v3944 = vor.u32 %v3940, %v3943
        %v3945 = vrot.slane %v3944, 4
        %v3947 = vshll.u32 %v3659, 16
        %v3949 = vrot.slane %v3947, 5
        %v3950 = vsel %vm310, %v3945, %v3949
        %v3951 = vshrl.u32 %v3659, 16
        %v3953 = vrot.slane %v3951, 4
        %v3954 = vor.u32 %v3953, %v3949
        %v3955 = vrot.slane %v3954, 4
        %v3957 = vshll.u32 %v3660, 16
        %v3959 = vrot.slane %v3957, 5
        %v3960 = vsel %vm310, %v3955, %v3959
        %v3962 = vshrl.u32 %v3661, 16
        %v3964 = vrot.slane %v3962, 4
        %v3965 = vshll.u32 %v3661, 16
        %v3967 = vrot.slane %v3965, 5
        %v3968 = vor.u32 %v3964, %v3967
        %v3969 = vrot.slane %v3968, 4
        %v3971 = vshll.u32 %v3662, 16
        %v3973 = vrot.slane %v3971, 5
        %v3974 = vsel %vm310, %v3969, %v3973
        %v3975 = vshrl.u32 %v3662, 16
        %v3977 = vrot.slane %v3975, 4
        %v3978 = vor.u32 %v3977, %v3973
        %v3979 = vrot.slane %v3978, 4
        %v3981 = vshll.u32 %v3663, 16
        %v3983 = vrot.slane %v3981, 5
        %v3984 = vsel %vm310, %v3979, %v3983
        %v3986 = vshrl.u32 %v3664, 16
        %v3988 = vrot.slane %v3986, 4
        %v3989 = vshll.u32 %v3664, 16
        %v3991 = vrot.slane %v3989, 5
        %v3992 = vor.u32 %v3988, %v3991
        %v3993 = vrot.slane %v3992, 4
        %v3995 = vshll.u32 %v3665, 16
        %v3997 = vrot.slane %v3995, 5
        %v3998 = vsel %vm310, %v3993, %v3997
        %v3999 = vshrl.u32 %v3665, 16
        %v4001 = vrot.slane %v3999, 4
        %v4002 = vor.u32 %v4001, %v3997
        %v4003 = vrot.slane %v4002, 4
        %v4005 = vshll.u32 %v3666, 16
        %v4007 = vrot.slane %v4005, 5
        %v4008 = vsel %vm310, %v4003, %v4007
        %v4010 = vshrl.u32 %v3667, 16
        %v4012 = vrot.slane %v4010, 4
        %v4013 = vshll.u32 %v3667, 16
        %v4015 = vrot.slane %v4013, 5
        %v4016 = vor.u32 %v4012, %v4015
        %v4017 = vrot.slane %v4016, 4
        %v4019 = vshll.u32 %v3668, 16
        %v4021 = vrot.slane %v4019, 5
        %v4022 = vsel %vm310, %v4017, %v4021
        %v4023 = vshrl.u32 %v3668, 16
        %v4025 = vrot.slane %v4023, 4
        %v4026 = vor.u32 %v4025, %v4021
        %v4027 = vrot.slane %v4026, 4
        %v4029 = vshll.u32 %v3669, 16
        %v4031 = vrot.slane %v4029, 5
        %v4032 = vsel %vm310, %v4027, %v4031
        %v4034 = vshrl.u32 %v3670, 16
        %v4036 = vrot.slane %v4034, 4
        %v4037 = vshll.u32 %v3670, 16
        %v4039 = vrot.slane %v4037, 5
        %v4040 = vor.u32 %v4036, %v4039
        %v4041 = vrot.slane %v4040, 4
        %v4043 = vshll.u32 %v3671, 16
        %v4045 = vrot.slane %v4043, 5
        %v4046 = vsel %vm310, %v4041, %v4045
        %v4047 = vshrl.u32 %v3671, 16
        %v4049 = vrot.slane %v4047, 4
        %v4050 = vor.u32 %v4049, %v4045
        %v4051 = vrot.slane %v4050, 4
        %v4053 = vshll.u32 %v3672, 16
        %v4055 = vrot.slane %v4053, 5
        %v4056 = vsel %vm310, %v4051, %v4055
        %s4057 = scalar_lea.vmem %s251, 14
        %v4058 = vld [vmem:[%s4057] sm:$0x3]
        %v4059 = vunpack.c.l.b16 %v3686
        %v4060 = vunpack.c.l.b16 %v3696
        %v4061 = vunpack.c.l.b16 %v3710
        %v4062 = vunpack.c.l.b16 %v3720
        %v4063 = vunpack.c.l.b16 %v3734
        %v4064 = vunpack.c.l.b16 %v3744
        %v4065 = vunpack.c.l.b16 %v3758
        %v4066 = vunpack.c.l.b16 %v3768
        %v4067 = vunpack.c.l.b16 %v3782
        %v4068 = vunpack.c.l.b16 %v3792
        %v4069 = vunpack.c.l.b16 %v3806
        %v4070 = vunpack.c.l.b16 %v3816
        %v4071 = vunpack.c.l.b16 %v3830
        %v4072 = vunpack.c.l.b16 %v3840
        %v4073 = vunpack.c.l.b16 %v3854
        %v4074 = vunpack.c.l.b16 %v3864
        %v4075 = vunpack.c.l.b16 %v3878
        %v4076 = vunpack.c.l.b16 %v3888
        %v4077 = vunpack.c.l.b16 %v3902
        %v4078 = vunpack.c.l.b16 %v3912
        %v4079 = vunpack.c.l.b16 %v3926
        %v4080 = vunpack.c.l.b16 %v3936
        %v4081 = vunpack.c.l.b16 %v3950
        %v4082 = vunpack.c.l.b16 %v3960
        %v4083 = vunpack.c.l.b16 %v3974
        %v4084 = vunpack.c.l.b16 %v3984
        %v4085 = vunpack.c.l.b16 %v3998
        %v4086 = vunpack.c.l.b16 %v4008
        %v4087 = vunpack.c.l.b16 %v4022
        %v4088 = vunpack.c.l.b16 %v4032
        %v4089 = vunpack.c.l.b16 %v4046
        %v4090 = vunpack.c.l.b16 %v4056
        %v4091 = vpack.c.b16 %v4060, %v4059
        %v4092 = vpack.c.b16 %v4062, %v4061
        %v4093 = vpack.c.b16 %v4064, %v4063
        %v4094 = vpack.c.b16 %v4066, %v4065
        %v4095 = vpack.c.b16 %v4068, %v4067
        %v4096 = vpack.c.b16 %v4070, %v4069
        %v4097 = vpack.c.b16 %v4072, %v4071
        %v4098 = vpack.c.b16 %v4074, %v4073
        %v4099 = vpack.c.b16 %v4076, %v4075
        %v4100 = vpack.c.b16 %v4078, %v4077
        %v4101 = vpack.c.b16 %v4080, %v4079
        %v4102 = vpack.c.b16 %v4082, %v4081
        %v4103 = vpack.c.b16 %v4084, %v4083
        %v4104 = vpack.c.b16 %v4086, %v4085
        %v4105 = vpack.c.b16 %v4088, %v4087
        %v4106 = vpack.c.b16 %v4090, %v4089
        %v4108 = vsel %vm745, %v4091, 0
        %v4111 = vsel %vm745, %v4092, 0
        %v4114 = vsel %vm745, %v4093, 0
        %v4117 = vsel %vm745, %v4094, 0
        %v4120 = vsel %vm745, %v4095, 0
        %v4123 = vsel %vm745, %v4096, 0
        %v4126 = vsel %vm745, %v4097, 0
        %v4129 = vsel %vm745, %v4098, 0
        %v4132 = vsel %vm745, %v4099, 0
        %v4135 = vsel %vm745, %v4100, 0
        %v4138 = vsel %vm745, %v4101, 0
        %v4141 = vsel %vm745, %v4102, 0
        %v4144 = vsel %vm745, %v4103, 0
        %v4147 = vsel %vm745, %v4104, 0
        %v4150 = vsel %vm745, %v4105, 0
        %v4153 = vsel %vm745, %v4106, 0
        %v4156 = vand.u32 %v4058, %v797
        %4158 = vmatprep.subr.bf16.mxu0 0
        %4159 = vmatpush1.bf16.msra.mxu0 %v4156
        %4160 = vmatprep.subr.bf16.mxu0 0
        %4161 = vmatpush1.bf16.msra.mxu0 0
        %4162 = vmatprep.subr.bf16.mxu0 0
        %4163 = vmatpush1.bf16.msra.mxu0 0
        %4164 = vmatprep.subr.bf16.mxu0 0
        %4165 = vmatpush1.bf16.msra.mxu0 0
        %4166 = vmatprep.subr.bf16.mxu0 0
        %4167 = vmatpush1.bf16.msra.mxu0 0
        %4168 = vmatprep.subr.bf16.mxu0 0
        %4169 = vmatpush1.bf16.msra.mxu0 0
        %4170 = vmatprep.subr.bf16.mxu0 0
        %4171 = vmatpush1.bf16.msra.mxu0 0
        %4172 = vmatprep.subr.bf16.mxu0 0
        %4173 = vmatpush1.bf16.msra.mxu0 0
        %4174 = vmatprep.subr.bf16.mxu0 0
        %4175 = vmatpush1.bf16.msra.mxu0 0
        %4176 = vmatprep.subr.bf16.mxu0 0
        %4177 = vmatpush1.bf16.msra.mxu0 0
        %4178 = vmatprep.subr.bf16.mxu0 0
        %4179 = vmatpush1.bf16.msra.mxu0 0
        %4180 = vmatprep.subr.bf16.mxu0 0
        %4181 = vmatpush1.bf16.msra.mxu0 0
        %4182 = vmatprep.subr.bf16.mxu0 0
        %4183 = vmatpush1.bf16.msra.mxu0 0
        %4184 = vmatprep.subr.bf16.mxu0 0
        %4185 = vmatpush1.bf16.msra.mxu0 0
        %4186 = vmatprep.subr.bf16.mxu0 0
        %4187 = vmatpush1.bf16.msra.mxu0 0
        %4188 = vmatprep.subr.bf16.mxu0 0
        %4189 = vmatpush1.bf16.msra.mxu0 0
        %4190 = vmatprep.mubr.bf16.mxu0 0
        %4191 = vmatmul.mubr.bf16.gmra.mrb[0].mxu0 %v4108
        %v4192 = vpop.f32.mrb[0].mxu0
        %v4193 = vadd.f32 0.0, %v4192
        %v4194 = vpop.f32.mrb[0].mxu0
        %v4195 = vpop.f32.mrb[0].mxu0
        %v4196 = vadd.f32 0.0, %v4195
        %v4197 = vpop.f32.mrb[0].mxu0
        %4198 = vmatprep.mubr.bf16.mxu0 0
        %4199 = vmatmul.mubr.bf16.gmra.mrb[0].mxu0 %v4111
        %v4200 = vpop.f32.mrb[0].mxu0
        %v4201 = vadd.f32 0.0, %v4200
        %v4202 = vpop.f32.mrb[0].mxu0
        %v4203 = vpop.f32.mrb[0].mxu0
        %v4204 = vadd.f32 0.0, %v4203
        %v4205 = vpop.f32.mrb[0].mxu0
        %4206 = vmatprep.mubr.bf16.mxu0 0
        %4207 = vmatmul.mubr.bf16.gmra.mrb[0].mxu0 %v4114
        %v4208 = vpop.f32.mrb[0].mxu0
        %v4209 = vadd.f32 0.0, %v4208
        %v4210 = vpop.f32.mrb[0].mxu0
        %v4211 = vpop.f32.mrb[0].mxu0
        %v4212 = vadd.f32 0.0, %v4211
        %v4213 = vpop.f32.mrb[0].mxu0
        %4214 = vmatprep.mubr.bf16.mxu0 0
        %4215 = vmatmul.mubr.bf16.gmra.mrb[0].mxu0 %v4117
        %v4216 = vpop.f32.mrb[0].mxu0
        %v4217 = vadd.f32 0.0, %v4216
        %v4218 = vpop.f32.mrb[0].mxu0
        %v4219 = vpop.f32.mrb[0].mxu0
        %v4220 = vadd.f32 0.0, %v4219
        %v4221 = vpop.f32.mrb[0].mxu0
        %4222 = vmatprep.mubr.bf16.mxu0 0
        %4223 = vmatmul.mubr.bf16.gmra.mrb[0].mxu0 %v4120
        %v4224 = vpop.f32.mrb[0].mxu0
        %v4225 = vadd.f32 0.0, %v4224
        %v4226 = vpop.f32.mrb[0].mxu0
        %v4227 = vpop.f32.mrb[0].mxu0
        %v4228 = vadd.f32 0.0, %v4227
        %v4229 = vpop.f32.mrb[0].mxu0
        %4230 = vmatprep.mubr.bf16.mxu0 0
        %4231 = vmatmul.mubr.bf16.gmra.mrb[0].mxu0 %v4123
        %v4232 = vpop.f32.mrb[0].mxu0
        %v4233 = vadd.f32 0.0, %v4232
        %v4234 = vpop.f32.mrb[0].mxu0
        %v4235 = vpop.f32.mrb[0].mxu0
        %v4236 = vadd.f32 0.0, %v4235
        %v4237 = vpop.f32.mrb[0].mxu0
        %4238 = vmatprep.mubr.bf16.mxu0 0
        %4239 = vmatmul.mubr.bf16.gmra.mrb[0].mxu0 %v4126
        %v4240 = vpop.f32.mrb[0].mxu0
        %v4241 = vadd.f32 0.0, %v4240
        %v4242 = vpop.f32.mrb[0].mxu0
        %v4243 = vpop.f32.mrb[0].mxu0
        %v4244 = vadd.f32 0.0, %v4243
        %v4245 = vpop.f32.mrb[0].mxu0
        %4246 = vmatprep.mubr.bf16.mxu0 0
        %4247 = vmatmul.mubr.bf16.gmra.mrb[0].mxu0 %v4129
        %v4248 = vpop.f32.mrb[0].mxu0
        %v4249 = vadd.f32 0.0, %v4248
        %v4250 = vpop.f32.mrb[0].mxu0
        %v4251 = vpop.f32.mrb[0].mxu0
        %v4252 = vadd.f32 0.0, %v4251
        %v4253 = vpop.f32.mrb[0].mxu0
        %4254 = vmatprep.mubr.bf16.mxu0 0
        %4255 = vmatmul.mubr.bf16.gmra.mrb[0].mxu0 %v4132
        %v4256 = vpop.f32.mrb[0].mxu0
        %v4257 = vadd.f32 0.0, %v4256
        %v4258 = vpop.f32.mrb[0].mxu0
        %v4259 = vpop.f32.mrb[0].mxu0
        %v4260 = vadd.f32 0.0, %v4259
        %v4261 = vpop.f32.mrb[0].mxu0
        %4262 = vmatprep.mubr.bf16.mxu0 0
        %4263 = vmatmul.mubr.bf16.gmra.mrb[0].mxu0 %v4135
        %v4264 = vpop.f32.mrb[0].mxu0
        %v4265 = vadd.f32 0.0, %v4264
        %v4266 = vpop.f32.mrb[0].mxu0
        %v4267 = vpop.f32.mrb[0].mxu0
        %v4268 = vadd.f32 0.0, %v4267
        %v4269 = vpop.f32.mrb[0].mxu0
        %4270 = vmatprep.mubr.bf16.mxu0 0
        %4271 = vmatmul.mubr.bf16.gmra.mrb[0].mxu0 %v4138
        %v4272 = vpop.f32.mrb[0].mxu0
        %v4273 = vadd.f32 0.0, %v4272
        %v4274 = vpop.f32.mrb[0].mxu0
        %v4275 = vpop.f32.mrb[0].mxu0
        %v4276 = vadd.f32 0.0, %v4275
        %v4277 = vpop.f32.mrb[0].mxu0
        %4278 = vmatprep.mubr.bf16.mxu0 0
        %4279 = vmatmul.mubr.bf16.gmra.mrb[0].mxu0 %v4141
        %v4280 = vpop.f32.mrb[0].mxu0
        %v4281 = vadd.f32 0.0, %v4280
        %v4282 = vpop.f32.mrb[0].mxu0
        %v4283 = vpop.f32.mrb[0].mxu0
        %v4284 = vadd.f32 0.0, %v4283
        %v4285 = vpop.f32.mrb[0].mxu0
        %4286 = vmatprep.mubr.bf16.mxu0 0
        %4287 = vmatmul.mubr.bf16.gmra.mrb[0].mxu0 %v4144
        %v4288 = vpop.f32.mrb[0].mxu0
        %v4289 = vadd.f32 0.0, %v4288
        %v4290 = vpop.f32.mrb[0].mxu0
        %v4291 = vpop.f32.mrb[0].mxu0
        %v4292 = vadd.f32 0.0, %v4291
        %v4293 = vpop.f32.mrb[0].mxu0
        %4294 = vmatprep.mubr.bf16.mxu0 0
        %4295 = vmatmul.mubr.bf16.gmra.mrb[0].mxu0 %v4147
        %v4296 = vpop.f32.mrb[0].mxu0
        %v4297 = vadd.f32 0.0, %v4296
        %v4298 = vpop.f32.mrb[0].mxu0
        %v4299 = vpop.f32.mrb[0].mxu0
        %v4300 = vadd.f32 0.0, %v4299
        %v4301 = vpop.f32.mrb[0].mxu0
        %4302 = vmatprep.mubr.bf16.mxu0 0
        %4303 = vmatmul.mubr.bf16.gmra.mrb[0].mxu0 %v4150
        %v4304 = vpop.f32.mrb[0].mxu0
        %v4305 = vadd.f32 0.0, %v4304
        %v4306 = vpop.f32.mrb[0].mxu0
        %v4307 = vpop.f32.mrb[0].mxu0
        %v4308 = vadd.f32 0.0, %v4307
        %v4309 = vpop.f32.mrb[0].mxu0
        %4310 = vmatprep.mubr.bf16.mxu0 0
        %4311 = vmatmul.mubr.bf16.gmra.mrb[0].mxu0 %v4153
        %v4312 = vpop.f32.mrb[0].mxu0
        %v4313 = vadd.f32 0.0, %v4312
        %v4314 = vpop.f32.mrb[0].mxu0
        %v4315 = vpop.f32.mrb[0].mxu0
        %v4316 = vadd.f32 0.0, %v4315
        %v4317 = vpop.f32.mrb[0].mxu0
        %4318 = vdwg.mxu0
        %v4319 = vadd.f32 %v3593, %v4193
        %v4320 = vadd.f32 %v3594, %v4196
        %v4321 = vadd.f32 %v3595, %v4201
        %v4322 = vadd.f32 %v3596, %v4204
        %v4323 = vadd.f32 %v3597, %v4209
        %v4324 = vadd.f32 %v3598, %v4212
        %v4325 = vadd.f32 %v3599, %v4217
        %v4326 = vadd.f32 %v3600, %v4220
        %v4327 = vadd.f32 %v3601, %v4225
        %v4328 = vadd.f32 %v3602, %v4228
        %v4329 = vadd.f32 %v3603, %v4233
        %v4330 = vadd.f32 %v3604, %v4236
        %v4331 = vadd.f32 %v3605, %v4241
        %v4332 = vadd.f32 %v3606, %v4244
        %v4333 = vadd.f32 %v3607, %v4249
        %v4334 = vadd.f32 %v3608, %v4252
        %v4335 = vadd.f32 %v3609, %v4257
        %v4336 = vadd.f32 %v3610, %v4260
        %v4337 = vadd.f32 %v3611, %v4265
        %v4338 = vadd.f32 %v3612, %v4268
        %v4339 = vadd.f32 %v3613, %v4273
        %v4340 = vadd.f32 %v3614, %v4276
        %v4341 = vadd.f32 %v3615, %v4281
        %v4342 = vadd.f32 %v3616, %v4284
        %v4343 = vadd.f32 %v3617, %v4289
        %v4344 = vadd.f32 %v3618, %v4292
        %v4345 = vadd.f32 %v3619, %v4297
        %v4346 = vadd.f32 %v3620, %v4300
        %v4347 = vadd.f32 %v3621, %v4305
        %v4348 = vadd.f32 %v3622, %v4308
        %v4349 = vadd.f32 %v3623, %v4313
        %v4350 = vadd.f32 %v3624, %v4316
        %v4351 = vld [vmem:[%s3266] sm:$0xe]
        %v4352 = vld [vmem:[%s3266 + $0xc] sm:$0xe]
        %v4353 = vld [vmem:[%s3266 + $0x18] sm:$0xe]
        %v4354 = vld [vmem:[%s3266 + $0x24] sm:$0xe]
        %v4355 = vld [vmem:[%s3266 + $0x30] sm:$0xe]
        %v4356 = vld [vmem:[%s3266 + $0x3c] sm:$0xe]
        %v4357 = vld [vmem:[%s3266 + $0x48] sm:$0xe]
        %v4358 = vld [vmem:[%s3266 + $0x54] sm:$0xe]
        %v4359 = vld [vmem:[%s3266 + $0x60] sm:$0xe]
        %v4360 = vld [vmem:[%s3266 + $0x6c] sm:$0xe]
        %v4361 = vld [vmem:[%s3266 + $0x78] sm:$0xe]
        %v4362 = vld [vmem:[%s3266 + $0x84] sm:$0xe]
        %v4363 = vld [vmem:[%s3266 + $0x90] sm:$0xe]
        %v4364 = vld [vmem:[%s3266 + $0x9c] sm:$0xe]
        %v4365 = vld [vmem:[%s3266 + $0xa8] sm:$0xe]
        %v4366 = vld [vmem:[%s3266 + $0xb4] sm:$0xe]
        %v4415 = vrot.slane %v4351, 5
        %v4416 = vrot.slane %v4415, 4
        %v4417 = vrot.slane %v3626, 5
        %v4418 = vsel %vm1304, %v4416, %v4417
        %v4419 = vrot.slane %v4417, 4
        %v4420 = vrot.slane %v3627, 5
        %v4421 = vsel %vm1304, %v4419, %v4420
        %v4422 = vrot.slane %v4352, 5
        %v4423 = vrot.slane %v4422, 4
        %v4424 = vrot.slane %v3629, 5
        %v4425 = vsel %vm1304, %v4423, %v4424
        %v4426 = vrot.slane %v4424, 4
        %v4427 = vrot.slane %v3630, 5
        %v4428 = vsel %vm1304, %v4426, %v4427
        %v4429 = vrot.slane %v4353, 5
        %v4430 = vrot.slane %v4429, 4
        %v4431 = vrot.slane %v3632, 5
        %v4432 = vsel %vm1304, %v4430, %v4431
        %v4433 = vrot.slane %v4431, 4
        %v4434 = vrot.slane %v3633, 5
        %v4435 = vsel %vm1304, %v4433, %v4434
        %v4436 = vrot.slane %v4354, 5
        %v4437 = vrot.slane %v4436, 4
        %v4438 = vrot.slane %v3635, 5
        %v4439 = vsel %vm1304, %v4437, %v4438
        %v4440 = vrot.slane %v4438, 4
        %v4441 = vrot.slane %v3636, 5
        %v4442 = vsel %vm1304, %v4440, %v4441
        %v4443 = vrot.slane %v4355, 5
        %v4444 = vrot.slane %v4443, 4
        %v4445 = vrot.slane %v3638, 5
        %v4446 = vsel %vm1304, %v4444, %v4445
        %v4447 = vrot.slane %v4445, 4
        %v4448 = vrot.slane %v3639, 5
        %v4449 = vsel %vm1304, %v4447, %v4448
        %v4450 = vrot.slane %v4356, 5
        %v4451 = vrot.slane %v4450, 4
        %v4452 = vrot.slane %v3641, 5
        %v4453 = vsel %vm1304, %v4451, %v4452
        %v4454 = vrot.slane %v4452, 4
        %v4455 = vrot.slane %v3642, 5
        %v4456 = vsel %vm1304, %v4454, %v4455
        %v4457 = vrot.slane %v4357, 5
        %v4458 = vrot.slane %v4457, 4
        %v4459 = vrot.slane %v3644, 5
        %v4460 = vsel %vm1304, %v4458, %v4459
        %v4461 = vrot.slane %v4459, 4
        %v4462 = vrot.slane %v3645, 5
        %v4463 = vsel %vm1304, %v4461, %v4462
        %v4464 = vrot.slane %v4358, 5
        %v4465 = vrot.slane %v4464, 4
        %v4466 = vrot.slane %v3647, 5
        %v4467 = vsel %vm1304, %v4465, %v4466
        %v4468 = vrot.slane %v4466, 4
        %v4469 = vrot.slane %v3648, 5
        %v4470 = vsel %vm1304, %v4468, %v4469
        %v4471 = vrot.slane %v4359, 5
        %v4472 = vrot.slane %v4471, 4
        %v4473 = vrot.slane %v3650, 5
        %v4474 = vsel %vm1304, %v4472, %v4473
        %v4475 = vrot.slane %v4473, 4
        %v4476 = vrot.slane %v3651, 5
        %v4477 = vsel %vm1304, %v4475, %v4476
        %v4478 = vrot.slane %v4360, 5
        %v4479 = vrot.slane %v4478, 4
        %v4480 = vrot.slane %v3653, 5
        %v4481 = vsel %vm1304, %v4479, %v4480
        %v4482 = vrot.slane %v4480, 4
        %v4483 = vrot.slane %v3654, 5
        %v4484 = vsel %vm1304, %v4482, %v4483
        %v4485 = vrot.slane %v4361, 5
        %v4486 = vrot.slane %v4485, 4
        %v4487 = vrot.slane %v3656, 5
        %v4488 = vsel %vm1304, %v4486, %v4487
        %v4489 = vrot.slane %v4487, 4
        %v4490 = vrot.slane %v3657, 5
        %v4491 = vsel %vm1304, %v4489, %v4490
        %v4492 = vrot.slane %v4362, 5
        %v4493 = vrot.slane %v4492, 4
        %v4494 = vrot.slane %v3659, 5
        %v4495 = vsel %vm1304, %v4493, %v4494
        %v4496 = vrot.slane %v4494, 4
        %v4497 = vrot.slane %v3660, 5
        %v4498 = vsel %vm1304, %v4496, %v4497
        %v4499 = vrot.slane %v4363, 5
        %v4500 = vrot.slane %v4499, 4
        %v4501 = vrot.slane %v3662, 5
        %v4502 = vsel %vm1304, %v4500, %v4501
        %v4503 = vrot.slane %v4501, 4
        %v4504 = vrot.slane %v3663, 5
        %v4505 = vsel %vm1304, %v4503, %v4504
        %v4506 = vrot.slane %v4364, 5
        %v4507 = vrot.slane %v4506, 4
        %v4508 = vrot.slane %v3665, 5
        %v4509 = vsel %vm1304, %v4507, %v4508
        %v4510 = vrot.slane %v4508, 4
        %v4511 = vrot.slane %v3666, 5
        %v4512 = vsel %vm1304, %v4510, %v4511
        %v4513 = vrot.slane %v4365, 5
        %v4514 = vrot.slane %v4513, 4
        %v4515 = vrot.slane %v3668, 5
        %v4516 = vsel %vm1304, %v4514, %v4515
        %v4517 = vrot.slane %v4515, 4
        %v4518 = vrot.slane %v3669, 5
        %v4519 = vsel %vm1304, %v4517, %v4518
        %v4520 = vrot.slane %v4366, 5
        %v4521 = vrot.slane %v4520, 4
        %v4522 = vrot.slane %v3671, 5
        %v4523 = vsel %vm1304, %v4521, %v4522
        %v4524 = vrot.slane %v4522, 4
        %v4525 = vrot.slane %v3672, 5
        %v4526 = vsel %vm1304, %v4524, %v4525
        %s4527 = scalar_lea.vmem %s251, 16
        %v4528 = vld [vmem:[%s4527] sm:$0x3]
        %v4529 = vunpack.c.l.b16 %v4418
        %v4530 = vunpack.c.l.b16 %v4421
        %v4531 = vunpack.c.l.b16 %v4425
        %v4532 = vunpack.c.l.b16 %v4428
        %v4533 = vunpack.c.l.b16 %v4432
        %v4534 = vunpack.c.l.b16 %v4435
        %v4535 = vunpack.c.l.b16 %v4439
        %v4536 = vunpack.c.l.b16 %v4442
        %v4537 = vunpack.c.l.b16 %v4446
        %v4538 = vunpack.c.l.b16 %v4449
        %v4539 = vunpack.c.l.b16 %v4453
        %v4540 = vunpack.c.l.b16 %v4456
        %v4541 = vunpack.c.l.b16 %v4460
        %v4542 = vunpack.c.l.b16 %v4463
        %v4543 = vunpack.c.l.b16 %v4467
        %v4544 = vunpack.c.l.b16 %v4470
        %v4545 = vunpack.c.l.b16 %v4474
        %v4546 = vunpack.c.l.b16 %v4477
        %v4547 = vunpack.c.l.b16 %v4481
        %v4548 = vunpack.c.l.b16 %v4484
        %v4549 = vunpack.c.l.b16 %v4488
        %v4550 = vunpack.c.l.b16 %v4491
        %v4551 = vunpack.c.l.b16 %v4495
        %v4552 = vunpack.c.l.b16 %v4498
        %v4553 = vunpack.c.l.b16 %v4502
        %v4554 = vunpack.c.l.b16 %v4505
        %v4555 = vunpack.c.l.b16 %v4509
        %v4556 = vunpack.c.l.b16 %v4512
        %v4557 = vunpack.c.l.b16 %v4516
        %v4558 = vunpack.c.l.b16 %v4519
        %v4559 = vunpack.c.l.b16 %v4523
        %v4560 = vunpack.c.l.b16 %v4526
        %v4561 = vpack.c.b16 %v4530, %v4529
        %v4562 = vpack.c.b16 %v4532, %v4531
        %v4563 = vpack.c.b16 %v4534, %v4533
        %v4564 = vpack.c.b16 %v4536, %v4535
        %v4565 = vpack.c.b16 %v4538, %v4537
        %v4566 = vpack.c.b16 %v4540, %v4539
        %v4567 = vpack.c.b16 %v4542, %v4541
        %v4568 = vpack.c.b16 %v4544, %v4543
        %v4569 = vpack.c.b16 %v4546, %v4545
        %v4570 = vpack.c.b16 %v4548, %v4547
        %v4571 = vpack.c.b16 %v4550, %v4549
        %v4572 = vpack.c.b16 %v4552, %v4551
        %v4573 = vpack.c.b16 %v4554, %v4553
        %v4574 = vpack.c.b16 %v4556, %v4555
        %v4575 = vpack.c.b16 %v4558, %v4557
        %v4576 = vpack.c.b16 %v4560, %v4559
        %v4578 = vsel %vm745, %v4561, 0
        %v4581 = vsel %vm745, %v4562, 0
        %v4584 = vsel %vm745, %v4563, 0
        %v4587 = vsel %vm745, %v4564, 0
        %v4590 = vsel %vm745, %v4565, 0
        %v4593 = vsel %vm745, %v4566, 0
        %v4596 = vsel %vm745, %v4567, 0
        %v4599 = vsel %vm745, %v4568, 0
        %v4602 = vsel %vm745, %v4569, 0
        %v4605 = vsel %vm745, %v4570, 0
        %v4608 = vsel %vm745, %v4571, 0
        %v4611 = vsel %vm745, %v4572, 0
        %v4614 = vsel %vm745, %v4573, 0
        %v4617 = vsel %vm745, %v4574, 0
        %v4620 = vsel %vm745, %v4575, 0
        %v4623 = vsel %vm745, %v4576, 0
        %v4626 = vand.u32 %v4528, %v797
        %4628 = vmatprep.subr.bf16.mxu0 0
        %4629 = vmatpush1.bf16.msra.mxu0 %v4626
        %4630 = vmatprep.subr.bf16.mxu0 0
        %4631 = vmatpush1.bf16.msra.mxu0 0
        %4632 = vmatprep.subr.bf16.mxu0 0
        %4633 = vmatpush1.bf16.msra.mxu0 0
        %4634 = vmatprep.subr.bf16.mxu0 0
        %4635 = vmatpush1.bf16.msra.mxu0 0
        %4636 = vmatprep.subr.bf16.mxu0 0
        %4637 = vmatpush1.bf16.msra.mxu0 0
        %4638 = vmatprep.subr.bf16.mxu0 0
        %4639 = vmatpush1.bf16.msra.mxu0 0
        %4640 = vmatprep.subr.bf16.mxu0 0
        %4641 = vmatpush1.bf16.msra.mxu0 0
        %4642 = vmatprep.subr.bf16.mxu0 0
        %4643 = vmatpush1.bf16.msra.mxu0 0
        %4644 = vmatprep.subr.bf16.mxu0 0
        %4645 = vmatpush1.bf16.msra.mxu0 0
        %4646 = vmatprep.subr.bf16.mxu0 0
        %4647 = vmatpush1.bf16.msra.mxu0 0
        %4648 = vmatprep.subr.bf16.mxu0 0
        %4649 = vmatpush1.bf16.msra.mxu0 0
        %4650 = vmatprep.subr.bf16.mxu0 0
        %4651 = vmatpush1.bf16.msra.mxu0 0
        %4652 = vmatprep.subr.bf16.mxu0 0
        %4653 = vmatpush1.bf16.msra.mxu0 0
        %4654 = vmatprep.subr.bf16.mxu0 0
        %4655 = vmatpush1.bf16.msra.mxu0 0
        %4656 = vmatprep.subr.bf16.mxu0 0
        %4657 = vmatpush1.bf16.msra.mxu0 0
        %4658 = vmatprep.subr.bf16.mxu0 0
        %4659 = vmatpush1.bf16.msra.mxu0 0
        %4660 = vmatprep.mubr.bf16.mxu0 0
        %4661 = vmatmul.mubr.bf16.gmra.mrb[0].mxu0 %v4578
        %v4662 = vpop.f32.mrb[0].mxu0
        %v4663 = vadd.f32 0.0, %v4662
        %v4664 = vpop.f32.mrb[0].mxu0
        %v4665 = vpop.f32.mrb[0].mxu0
        %v4666 = vadd.f32 0.0, %v4665
        %v4667 = vpop.f32.mrb[0].mxu0
        %4668 = vmatprep.mubr.bf16.mxu0 0
        %4669 = vmatmul.mubr.bf16.gmra.mrb[0].mxu0 %v4581
        %v4670 = vpop.f32.mrb[0].mxu0
        %v4671 = vadd.f32 0.0, %v4670
        %v4672 = vpop.f32.mrb[0].mxu0
        %v4673 = vpop.f32.mrb[0].mxu0
        %v4674 = vadd.f32 0.0, %v4673
        %v4675 = vpop.f32.mrb[0].mxu0
        %4676 = vmatprep.mubr.bf16.mxu0 0
        %4677 = vmatmul.mubr.bf16.gmra.mrb[0].mxu0 %v4584
        %v4678 = vpop.f32.mrb[0].mxu0
        %v4679 = vadd.f32 0.0, %v4678
        %v4680 = vpop.f32.mrb[0].mxu0
        %v4681 = vpop.f32.mrb[0].mxu0
        %v4682 = vadd.f32 0.0, %v4681
        %v4683 = vpop.f32.mrb[0].mxu0
        %4684 = vmatprep.mubr.bf16.mxu0 0
        %4685 = vmatmul.mubr.bf16.gmra.mrb[0].mxu0 %v4587
        %v4686 = vpop.f32.mrb[0].mxu0
        %v4687 = vadd.f32 0.0, %v4686
        %v4688 = vpop.f32.mrb[0].mxu0
        %v4689 = vpop.f32.mrb[0].mxu0
        %v4690 = vadd.f32 0.0, %v4689
        %v4691 = vpop.f32.mrb[0].mxu0
        %4692 = vmatprep.mubr.bf16.mxu0 0
        %4693 = vmatmul.mubr.bf16.gmra.mrb[0].mxu0 %v4590
        %v4694 = vpop.f32.mrb[0].mxu0
        %v4695 = vadd.f32 0.0, %v4694
        %v4696 = vpop.f32.mrb[0].mxu0
        %v4697 = vpop.f32.mrb[0].mxu0
        %v4698 = vadd.f32 0.0, %v4697
        %v4699 = vpop.f32.mrb[0].mxu0
        %4700 = vmatprep.mubr.bf16.mxu0 0
        %4701 = vmatmul.mubr.bf16.gmra.mrb[0].mxu0 %v4593
        %v4702 = vpop.f32.mrb[0].mxu0
        %v4703 = vadd.f32 0.0, %v4702
        %v4704 = vpop.f32.mrb[0].mxu0
        %v4705 = vpop.f32.mrb[0].mxu0
        %v4706 = vadd.f32 0.0, %v4705
        %v4707 = vpop.f32.mrb[0].mxu0
        %4708 = vmatprep.mubr.bf16.mxu0 0
        %4709 = vmatmul.mubr.bf16.gmra.mrb[0].mxu0 %v4596
        %v4710 = vpop.f32.mrb[0].mxu0
        %v4711 = vadd.f32 0.0, %v4710
        %v4712 = vpop.f32.mrb[0].mxu0
        %v4713 = vpop.f32.mrb[0].mxu0
        %v4714 = vadd.f32 0.0, %v4713
        %v4715 = vpop.f32.mrb[0].mxu0
        %4716 = vmatprep.mubr.bf16.mxu0 0
        %4717 = vmatmul.mubr.bf16.gmra.mrb[0].mxu0 %v4599
        %v4718 = vpop.f32.mrb[0].mxu0
        %v4719 = vadd.f32 0.0, %v4718
        %v4720 = vpop.f32.mrb[0].mxu0
        %v4721 = vpop.f32.mrb[0].mxu0
        %v4722 = vadd.f32 0.0, %v4721
        %v4723 = vpop.f32.mrb[0].mxu0
        %4724 = vmatprep.mubr.bf16.mxu0 0
        %4725 = vmatmul.mubr.bf16.gmra.mrb[0].mxu0 %v4602
        %v4726 = vpop.f32.mrb[0].mxu0
        %v4727 = vadd.f32 0.0, %v4726
        %v4728 = vpop.f32.mrb[0].mxu0
        %v4729 = vpop.f32.mrb[0].mxu0
        %v4730 = vadd.f32 0.0, %v4729
        %v4731 = vpop.f32.mrb[0].mxu0
        %4732 = vmatprep.mubr.bf16.mxu0 0
        %4733 = vmatmul.mubr.bf16.gmra.mrb[0].mxu0 %v4605
        %v4734 = vpop.f32.mrb[0].mxu0
        %v4735 = vadd.f32 0.0, %v4734
        %v4736 = vpop.f32.mrb[0].mxu0
        %v4737 = vpop.f32.mrb[0].mxu0
        %v4738 = vadd.f32 0.0, %v4737
        %v4739 = vpop.f32.mrb[0].mxu0
        %4740 = vmatprep.mubr.bf16.mxu0 0
        %4741 = vmatmul.mubr.bf16.gmra.mrb[0].mxu0 %v4608
        %v4742 = vpop.f32.mrb[0].mxu0
        %v4743 = vadd.f32 0.0, %v4742
        %v4744 = vpop.f32.mrb[0].mxu0
        %v4745 = vpop.f32.mrb[0].mxu0
        %v4746 = vadd.f32 0.0, %v4745
        %v4747 = vpop.f32.mrb[0].mxu0
        %4748 = vmatprep.mubr.bf16.mxu0 0
        %4749 = vmatmul.mubr.bf16.gmra.mrb[0].mxu0 %v4611
        %v4750 = vpop.f32.mrb[0].mxu0
        %v4751 = vadd.f32 0.0, %v4750
        %v4752 = vpop.f32.mrb[0].mxu0
        %v4753 = vpop.f32.mrb[0].mxu0
        %v4754 = vadd.f32 0.0, %v4753
        %v4755 = vpop.f32.mrb[0].mxu0
        %4756 = vmatprep.mubr.bf16.mxu0 0
        %4757 = vmatmul.mubr.bf16.gmra.mrb[0].mxu0 %v4614
        %v4758 = vpop.f32.mrb[0].mxu0
        %v4759 = vadd.f32 0.0, %v4758
        %v4760 = vpop.f32.mrb[0].mxu0
        %v4761 = vpop.f32.mrb[0].mxu0
        %v4762 = vadd.f32 0.0, %v4761
        %v4763 = vpop.f32.mrb[0].mxu0
        %4764 = vmatprep.mubr.bf16.mxu0 0
        %4765 = vmatmul.mubr.bf16.gmra.mrb[0].mxu0 %v4617
        %v4766 = vpop.f32.mrb[0].mxu0
        %v4767 = vadd.f32 0.0, %v4766
        %v4768 = vpop.f32.mrb[0].mxu0
        %v4769 = vpop.f32.mrb[0].mxu0
        %v4770 = vadd.f32 0.0, %v4769
        %v4771 = vpop.f32.mrb[0].mxu0
        %4772 = vmatprep.mubr.bf16.mxu0 0
        %4773 = vmatmul.mubr.bf16.gmra.mrb[0].mxu0 %v4620
        %v4774 = vpop.f32.mrb[0].mxu0
        %v4775 = vadd.f32 0.0, %v4774
        %v4776 = vpop.f32.mrb[0].mxu0
        %v4777 = vpop.f32.mrb[0].mxu0
        %v4778 = vadd.f32 0.0, %v4777
        %v4779 = vpop.f32.mrb[0].mxu0
        %4780 = vmatprep.mubr.bf16.mxu0 0
        %4781 = vmatmul.mubr.bf16.gmra.mrb[0].mxu0 %v4623
        %v4782 = vpop.f32.mrb[0].mxu0
        %v4783 = vadd.f32 0.0, %v4782
        %v4784 = vpop.f32.mrb[0].mxu0
        %v4785 = vpop.f32.mrb[0].mxu0
        %v4786 = vadd.f32 0.0, %v4785
        %v4787 = vpop.f32.mrb[0].mxu0
        %4788 = vdwg.mxu0
        %v4789 = vadd.f32 %v4319, %v4663
        %v4790 = vadd.f32 %v4320, %v4666
        %v4791 = vadd.f32 %v4321, %v4671
        %v4792 = vadd.f32 %v4322, %v4674
        %v4793 = vadd.f32 %v4323, %v4679
        %v4794 = vadd.f32 %v4324, %v4682
        %v4795 = vadd.f32 %v4325, %v4687
        %v4796 = vadd.f32 %v4326, %v4690
        %v4797 = vadd.f32 %v4327, %v4695
        %v4798 = vadd.f32 %v4328, %v4698
        %v4799 = vadd.f32 %v4329, %v4703
        %v4800 = vadd.f32 %v4330, %v4706
        %v4801 = vadd.f32 %v4331, %v4711
        %v4802 = vadd.f32 %v4332, %v4714
        %v4803 = vadd.f32 %v4333, %v4719
        %v4804 = vadd.f32 %v4334, %v4722
        %v4805 = vadd.f32 %v4335, %v4727
        %v4806 = vadd.f32 %v4336, %v4730
        %v4807 = vadd.f32 %v4337, %v4735
        %v4808 = vadd.f32 %v4338, %v4738
        %v4809 = vadd.f32 %v4339, %v4743
        %v4810 = vadd.f32 %v4340, %v4746
        %v4811 = vadd.f32 %v4341, %v4751
        %v4812 = vadd.f32 %v4342, %v4754
        %v4813 = vadd.f32 %v4343, %v4759
        %v4814 = vadd.f32 %v4344, %v4762
        %v4815 = vadd.f32 %v4345, %v4767
        %v4816 = vadd.f32 %v4346, %v4770
        %v4817 = vadd.f32 %v4347, %v4775
        %v4818 = vadd.f32 %v4348, %v4778
        %v4819 = vadd.f32 %v4349, %v4783
        %v4820 = vadd.f32 %v4350, %v4786
        %v4821 = vld [vmem:[%s254] sm:$0x1]
        %v4823 = vlaneseq
        %v4824 = vshrl.u32 %v4823, 7
        %v4825 = vsub.s32 0, %v4824
        %v4826 = vrot.slane %v4821, %v4825
        %v4828 = vmul.f32 %v4789, %v4826
        %v4829 = vmul.f32 %v4790, %v4826
        %v4830 = vmul.f32 %v4791, %v4826
        %v4831 = vmul.f32 %v4792, %v4826
        %v4832 = vmul.f32 %v4793, %v4826
        %v4833 = vmul.f32 %v4794, %v4826
        %v4834 = vmul.f32 %v4795, %v4826
        %v4835 = vmul.f32 %v4796, %v4826
        %v4836 = vmul.f32 %v4797, %v4826
        %v4837 = vmul.f32 %v4798, %v4826
        %v4838 = vmul.f32 %v4799, %v4826
        %v4839 = vmul.f32 %v4800, %v4826
        %v4840 = vmul.f32 %v4801, %v4826
        %v4841 = vmul.f32 %v4802, %v4826
        %v4842 = vmul.f32 %v4803, %v4826
        %v4843 = vmul.f32 %v4804, %v4826
        %v4844 = vmul.f32 %v4805, %v4826
        %v4845 = vmul.f32 %v4806, %v4826
        %v4846 = vmul.f32 %v4807, %v4826
        %v4847 = vmul.f32 %v4808, %v4826
        %v4848 = vmul.f32 %v4809, %v4826
        %v4849 = vmul.f32 %v4810, %v4826
        %v4850 = vmul.f32 %v4811, %v4826
        %v4851 = vmul.f32 %v4812, %v4826
        %v4852 = vmul.f32 %v4813, %v4826
        %v4853 = vmul.f32 %v4814, %v4826
        %v4854 = vmul.f32 %v4815, %v4826
        %v4855 = vmul.f32 %v4816, %v4826
        %v4856 = vmul.f32 %v4817, %v4826
        %v4857 = vmul.f32 %v4818, %v4826
        %v4858 = vmul.f32 %v4819, %v4826
        %v4859 = vmul.f32 %v4820, %v4826
        %v4860 = vld [vmem:[%s257] sm:$0x1]
        %v4862 = vlaneseq
        %v4863 = vshrl.u32 %v4862, 7
        %v4864 = vsub.s32 0, %v4863
        %v4865 = vrot.slane %v4860, %v4864
        %v4867 = vadd.f32 %v4828, %v4865
        %v4868 = vadd.f32 %v4829, %v4865
        %v4869 = vadd.f32 %v4830, %v4865
        %v4870 = vadd.f32 %v4831, %v4865
        %v4871 = vadd.f32 %v4832, %v4865
        %v4872 = vadd.f32 %v4833, %v4865
        %v4873 = vadd.f32 %v4834, %v4865
        %v4874 = vadd.f32 %v4835, %v4865
        %v4875 = vadd.f32 %v4836, %v4865
        %v4876 = vadd.f32 %v4837, %v4865
        %v4877 = vadd.f32 %v4838, %v4865
        %v4878 = vadd.f32 %v4839, %v4865
        %v4879 = vadd.f32 %v4840, %v4865
        %v4880 = vadd.f32 %v4841, %v4865
        %v4881 = vadd.f32 %v4842, %v4865
        %v4882 = vadd.f32 %v4843, %v4865
        %v4883 = vadd.f32 %v4844, %v4865
        %v4884 = vadd.f32 %v4845, %v4865
        %v4885 = vadd.f32 %v4846, %v4865
        %v4886 = vadd.f32 %v4847, %v4865
        %v4887 = vadd.f32 %v4848, %v4865
        %v4888 = vadd.f32 %v4849, %v4865
        %v4889 = vadd.f32 %v4850, %v4865
        %v4890 = vadd.f32 %v4851, %v4865
        %v4891 = vadd.f32 %v4852, %v4865
        %v4892 = vadd.f32 %v4853, %v4865
        %v4893 = vadd.f32 %v4854, %v4865
        %v4894 = vadd.f32 %v4855, %v4865
        %v4895 = vadd.f32 %v4856, %v4865
        %v4896 = vadd.f32 %v4857, %v4865
        %v4897 = vadd.f32 %v4858, %v4865
        %v4898 = vadd.f32 %v4859, %v4865
        %v4899 = vmul.f32 %v4867, 0.01
        %v4900 = vmul.f32 %v4868, 0.01
        %v4901 = vmul.f32 %v4869, 0.01
        %v4902 = vmul.f32 %v4870, 0.01
        %v4903 = vmul.f32 %v4871, 0.01
        %v4904 = vmul.f32 %v4872, 0.01
        %v4905 = vmul.f32 %v4873, 0.01
        %v4906 = vmul.f32 %v4874, 0.01
        %v4907 = vmul.f32 %v4875, 0.01
        %v4908 = vmul.f32 %v4876, 0.01
        %v4909 = vmul.f32 %v4877, 0.01
        %v4910 = vmul.f32 %v4878, 0.01
        %v4911 = vmul.f32 %v4879, 0.01
        %v4912 = vmul.f32 %v4880, 0.01
        %v4913 = vmul.f32 %v4881, 0.01
        %v4914 = vmul.f32 %v4882, 0.01
        %v4915 = vmul.f32 %v4883, 0.01
        %v4916 = vmul.f32 %v4884, 0.01
        %v4917 = vmul.f32 %v4885, 0.01
        %v4918 = vmul.f32 %v4886, 0.01
        %v4919 = vmul.f32 %v4887, 0.01
        %v4920 = vmul.f32 %v4888, 0.01
        %v4921 = vmul.f32 %v4889, 0.01
        %v4922 = vmul.f32 %v4890, 0.01
        %v4923 = vmul.f32 %v4891, 0.01
        %v4924 = vmul.f32 %v4892, 0.01
        %v4925 = vmul.f32 %v4893, 0.01
        %v4926 = vmul.f32 %v4894, 0.01
        %v4927 = vmul.f32 %v4895, 0.01
        %v4928 = vmul.f32 %v4896, 0.01
        %v4929 = vmul.f32 %v4897, 0.01
        %v4930 = vmul.f32 %v4898, 0.01
        %v4931 = vmax.f32 %v4867, %v4899
        %v4932 = vmax.f32 %v4868, %v4900
        %v4933 = vmax.f32 %v4869, %v4901
        %v4934 = vmax.f32 %v4870, %v4902
        %v4935 = vmax.f32 %v4871, %v4903
        %v4936 = vmax.f32 %v4872, %v4904
        %v4937 = vmax.f32 %v4873, %v4905
        %v4938 = vmax.f32 %v4874, %v4906
        %v4939 = vmax.f32 %v4875, %v4907
        %v4940 = vmax.f32 %v4876, %v4908
        %v4941 = vmax.f32 %v4877, %v4909
        %v4942 = vmax.f32 %v4878, %v4910
        %v4943 = vmax.f32 %v4879, %v4911
        %v4944 = vmax.f32 %v4880, %v4912
        %v4945 = vmax.f32 %v4881, %v4913
        %v4946 = vmax.f32 %v4882, %v4914
        %v4947 = vmax.f32 %v4883, %v4915
        %v4948 = vmax.f32 %v4884, %v4916
        %v4949 = vmax.f32 %v4885, %v4917
        %v4950 = vmax.f32 %v4886, %v4918
        %v4951 = vmax.f32 %v4887, %v4919
        %v4952 = vmax.f32 %v4888, %v4920
        %v4953 = vmax.f32 %v4889, %v4921
        %v4954 = vmax.f32 %v4890, %v4922
        %v4955 = vmax.f32 %v4891, %v4923
        %v4956 = vmax.f32 %v4892, %v4924
        %v4957 = vmax.f32 %v4893, %v4925
        %v4958 = vmax.f32 %v4894, %v4926
        %v4959 = vmax.f32 %v4895, %v4927
        %v4960 = vmax.f32 %v4896, %v4928
        %v4961 = vmax.f32 %v4897, %v4929
        %v4962 = vmax.f32 %v4898, %v4930
        %v4963 = vpack.c.bf16 %v4932, %v4931
        %v4964 = vpack.c.bf16 %v4934, %v4933
        %v4965 = vpack.c.bf16 %v4936, %v4935
        %v4966 = vpack.c.bf16 %v4938, %v4937
        %v4967 = vpack.c.bf16 %v4940, %v4939
        %v4968 = vpack.c.bf16 %v4942, %v4941
        %v4969 = vpack.c.bf16 %v4944, %v4943
        %v4970 = vpack.c.bf16 %v4946, %v4945
        %v4971 = vpack.c.bf16 %v4948, %v4947
        %v4972 = vpack.c.bf16 %v4950, %v4949
        %v4973 = vpack.c.bf16 %v4952, %v4951
        %v4974 = vpack.c.bf16 %v4954, %v4953
        %v4975 = vpack.c.bf16 %v4956, %v4955
        %v4976 = vpack.c.bf16 %v4958, %v4957
        %v4977 = vpack.c.bf16 %v4960, %v4959
        %v4978 = vpack.c.bf16 %v4962, %v4961
        %v4995 = vunpack.c.l.b16 %v4963
        %v4996 = vunpack.c.h.b16 %v4963
        %v4997 = vunpack.c.l.b16 %v4964
        %v4998 = vunpack.c.h.b16 %v4964
        %v4999 = vunpack.c.l.b16 %v4965
        %v5000 = vunpack.c.h.b16 %v4965
        %v5001 = vunpack.c.l.b16 %v4966
        %v5002 = vunpack.c.h.b16 %v4966
        %v5003 = vunpack.c.l.b16 %v4967
        %v5004 = vunpack.c.h.b16 %v4967
        %v5005 = vunpack.c.l.b16 %v4968
        %v5006 = vunpack.c.h.b16 %v4968
        %v5007 = vunpack.c.l.b16 %v4969
        %v5008 = vunpack.c.h.b16 %v4969
        %v5009 = vunpack.c.l.b16 %v4970
        %v5010 = vunpack.c.h.b16 %v4970
        %v5011 = vunpack.c.l.b16 %v4971
        %v5012 = vunpack.c.h.b16 %v4971
        %v5013 = vunpack.c.l.b16 %v4972
        %v5014 = vunpack.c.h.b16 %v4972
        %v5015 = vunpack.c.l.b16 %v4973
        %v5016 = vunpack.c.h.b16 %v4973
        %v5017 = vunpack.c.l.b16 %v4974
        %v5018 = vunpack.c.h.b16 %v4974
        %v5019 = vunpack.c.l.b16 %v4975
        %v5020 = vunpack.c.h.b16 %v4975
        %v5021 = vunpack.c.l.b16 %v4976
        %v5022 = vunpack.c.h.b16 %v4976
        %v5023 = vunpack.c.l.b16 %v4977
        %v5024 = vunpack.c.h.b16 %v4977
        %v5025 = vunpack.c.l.b16 %v4978
        %v5026 = vunpack.c.h.b16 %v4978
        %v5027 = vpack.c.b16 %v4995, %v4995
        %v5028 = vpack.c.b16 %v4996, %v4996
        %v5029 = vpack.c.b16 %v4997, %v4997
        %v5030 = vpack.c.b16 %v4998, %v4998
        %v5031 = vpack.c.b16 %v4999, %v4999
        %v5032 = vpack.c.b16 %v5000, %v5000
        %v5033 = vpack.c.b16 %v5001, %v5001
        %v5034 = vpack.c.b16 %v5002, %v5002
        %v5035 = vpack.c.b16 %v5003, %v5003
        %v5036 = vpack.c.b16 %v5004, %v5004
        %v5037 = vpack.c.b16 %v5005, %v5005
        %v5038 = vpack.c.b16 %v5006, %v5006
        %v5039 = vpack.c.b16 %v5007, %v5007
        %v5040 = vpack.c.b16 %v5008, %v5008
        %v5041 = vpack.c.b16 %v5009, %v5009
        %v5042 = vpack.c.b16 %v5010, %v5010
        %v5043 = vpack.c.b16 %v5011, %v5011
        %v5044 = vpack.c.b16 %v5012, %v5012
        %v5045 = vpack.c.b16 %v5013, %v5013
        %v5046 = vpack.c.b16 %v5014, %v5014
        %v5047 = vpack.c.b16 %v5015, %v5015
        %v5048 = vpack.c.b16 %v5016, %v5016
        %v5049 = vpack.c.b16 %v5017, %v5017
        %v5050 = vpack.c.b16 %v5018, %v5018
        %v5051 = vpack.c.b16 %v5019, %v5019
        %v5052 = vpack.c.b16 %v5020, %v5020
        %v5053 = vpack.c.b16 %v5021, %v5021
        %v5054 = vpack.c.b16 %v5022, %v5022
        %v5055 = vpack.c.b16 %v5023, %v5023
        %v5056 = vpack.c.b16 %v5024, %v5024
        %v5057 = vpack.c.b16 %v5025, %v5025
        %v5058 = vpack.c.b16 %v5026, %v5026
        %vm5091 = vcmask 519168
        %5092 = vst.msk [vmem:[%s241] sm:$0xf] %vm5091, %v5027
        %5093 = vst.msk [vmem:[%s241 + $0x4] sm:$0xf] %vm5091, %v5028
        %5094 = vst.msk [vmem:[%s241 + $0x8] sm:$0xf] %vm5091, %v5029
        %5095 = vst.msk [vmem:[%s241 + $0xc] sm:$0xf] %vm5091, %v5030
        %5096 = vst.msk [vmem:[%s241 + $0x10] sm:$0xf] %vm5091, %v5031
        %5097 = vst.msk [vmem:[%s241 + $0x14] sm:$0xf] %vm5091, %v5032
        %5098 = vst.msk [vmem:[%s241 + $0x18] sm:$0xf] %vm5091, %v5033
        %5099 = vst.msk [vmem:[%s241 + $0x1c] sm:$0xf] %vm5091, %v5034
        %5100 = vst.msk [vmem:[%s241 + $0x20] sm:$0xf] %vm5091, %v5035
        %5101 = vst.msk [vmem:[%s241 + $0x24] sm:$0xf] %vm5091, %v5036
        %5102 = vst.msk [vmem:[%s241 + $0x28] sm:$0xf] %vm5091, %v5037
        %5103 = vst.msk [vmem:[%s241 + $0x2c] sm:$0xf] %vm5091, %v5038
        %5104 = vst.msk [vmem:[%s241 + $0x30] sm:$0xf] %vm5091, %v5039
        %5105 = vst.msk [vmem:[%s241 + $0x34] sm:$0xf] %vm5091, %v5040
        %5106 = vst.msk [vmem:[%s241 + $0x38] sm:$0xf] %vm5091, %v5041
        %5107 = vst.msk [vmem:[%s241 + $0x3c] sm:$0xf] %vm5091, %v5042
        %5108 = vst.msk [vmem:[%s241 + $0x40] sm:$0xf] %vm5091, %v5043
        %5109 = vst.msk [vmem:[%s241 + $0x44] sm:$0xf] %vm5091, %v5044
        %5110 = vst.msk [vmem:[%s241 + $0x48] sm:$0xf] %vm5091, %v5045
        %5111 = vst.msk [vmem:[%s241 + $0x4c] sm:$0xf] %vm5091, %v5046
        %5112 = vst.msk [vmem:[%s241 + $0x50] sm:$0xf] %vm5091, %v5047
        %5113 = vst.msk [vmem:[%s241 + $0x54] sm:$0xf] %vm5091, %v5048
        %5114 = vst.msk [vmem:[%s241 + $0x58] sm:$0xf] %vm5091, %v5049
        %5115 = vst.msk [vmem:[%s241 + $0x5c] sm:$0xf] %vm5091, %v5050
        %5116 = vst.msk [vmem:[%s241 + $0x60] sm:$0xf] %vm5091, %v5051
        %5117 = vst.msk [vmem:[%s241 + $0x64] sm:$0xf] %vm5091, %v5052
        %5118 = vst.msk [vmem:[%s241 + $0x68] sm:$0xf] %vm5091, %v5053
        %5119 = vst.msk [vmem:[%s241 + $0x6c] sm:$0xf] %vm5091, %v5054
        %5120 = vst.msk [vmem:[%s241 + $0x70] sm:$0xf] %vm5091, %v5055
        %5121 = vst.msk [vmem:[%s241 + $0x74] sm:$0xf] %vm5091, %v5056
        %5122 = vst.msk [vmem:[%s241 + $0x78] sm:$0xf] %vm5091, %v5057
        %5123 = vst.msk [vmem:[%s241 + $0x7c] sm:$0xf] %vm5091, %v5058
        %s5124 = sand.u32 %s144, 1
        %s5125 = scalar_lea.sflag [#allocation3], %s5124
        %s5126 = sand.u32 %s144, 1
        %s5127 = smul.addr %s5126, 128
        %s5128 = scalar_lea.vmem [#allocation2], %s5127
        // Predicated region
        $region37: #{tpu_custom_call.1} parent=35 // pred_check
          %p5129 = pneg %p154
        $region38: #{tpu_custom_call.1} parent=35 // pred_check_branch
          %5131 = sbr.rel (%p5129) target = $region40
        $region39: #{tpu_custom_call.1} parent=35 // pred_region
          %s5133 = ssub.s32 2048, 2048
          %5134 = vsyncadd %s5125, %s5133
          %s5135 = smul.addr %s23, 32
          %s5136 = smul.addr %s22, 64
          %s5137 = sadd.s32 %s5135, %s5136
          %s5138 = smul.addr %s5137, 64
          %s5139 = scalar_lea.hbm %s4, %s5138
          %s5140 = sshll.u32 %s5128, 4
          %s5141 = int_to_ptr.vmem [resolvable:$true] %s5140
          %5146 = dma.vmem_to_hbm [thread:$0]  %s5141, 2048, %s5139, %s5125, 64, 64, 4
        $region40: #{tpu_custom_call.1} parent=35 // pred_fallthru
          _
      $region36: #{tpu_custom_call.1} parent=5 // pred_fallthru
        _
      %p5147 = scmp.le.s32.totalorder 2, %s13
      // Predicated region
      $region41: #{tpu_custom_call.1} parent=5 // pred_check
        %p5148 = pneg %p5147
      $region42: #{tpu_custom_call.1} parent=5 // pred_check_branch
        %5150 = sbr.rel (%p5148) target = $region44
      $region43: #{tpu_custom_call.1} parent=5 // pred_region
        %s5151 = ssub.s32 %s13, 2
        // Predicated region
        $region45: #{tpu_custom_call.1} parent=43 // pred_check
          %p5152 = pneg %p160
        $region46: #{tpu_custom_call.1} parent=43 // pred_check_branch
          %5154 = sbr.rel (%p5152) target = $region48
        $region47: #{tpu_custom_call.1} parent=43 // pred_region
          %s5155 = sand.u32 %s145, 1
          %s5156 = scalar_lea.sflag [#allocation3], %s5155
          %s5157 = sand.u32 %s145, 1
          %s5158 = smul.addr %s5157, 128
          %s5159 = scalar_lea.vmem [#allocation2], %s5158
          %5160 = dma.done %s5156, 2048
        $region48: #{tpu_custom_call.1} parent=43 // pred_fallthru
          _
      $region44: #{tpu_custom_call.1} parent=5 // pred_fallthru
        _
    $region6: #{tpu_custom_call.1} parent=1 // loop_footer
      %s17 = sadd.s32 1, %s13
    $region7: #{tpu_custom_call.1} parent=1 // loop_footer_branch
      %12 = sbr.rel target = $region3
    $region8: #{tpu_custom_call.1} parent=1 // loop_exit
      _
    %5161 = vsyncpa [#allocation3], 1
    %s5162 = scalar_lea.sflag [#allocation3], 1
    %5163 = vsyncpa %s5162, 1

</llo_original>
